<compile_context>
chip_gen: v5e
topology: v5e:2x2
jax: 0.10.0
libtpu: 0.0.40
codegen_flags: <defaults>
</compile_context>

<pallas_src>
import functools

import jax
import jax.numpy as jnp
from jax.experimental import pallas as pl
from jax.experimental.pallas import tpu as pltpu

FEATURES = 16
IN_DIM = 784            # kept unpadded: 784 is a multiple of 8, block==full dim on lanes
HID_DIM = 512
LATENT_PAD = 128        # enc2 output padded 32 -> 128 lanes (unmasked stores)
TILE_B_MAX = 512        # big tiles amortize per-grid-step overhead; ~15 MiB/tile footprint


def _round_up(n, m):
    return ((n + m - 1) // m) * m


def _cdiv(a, b):
    return -(-a // b)


def _vae_kernel(x_ref, eps_ref,
                w1_ref, b1_ref,
                w2_ref, b2_ref,
                w3_ref, b3_ref,
                w4_ref, b4_ref,
                recon_ref, h2_ref):
    f32 = jnp.float32
    bf16 = jnp.bfloat16

    # enc1 + ReLU : (tb, 784)bf16 @ (784, 512)bf16 -> f32 accumulate
    h1 = jnp.dot(x_ref[...].astype(bf16), w1_ref[...],
                 preferred_element_type=f32) + b1_ref[...]
    h1 = jnp.maximum(h1, 0.0)

    # enc2 (single fused matmul for mu || log_var, padded to 128 lanes)
    h2 = jnp.dot(h1.astype(bf16), w2_ref[...],
                 preferred_element_type=f32) + b2_ref[...]
    h2_ref[...] = h2                                   # full-lane (128) unmasked store
    mu = h2[:, :FEATURES]
    log_var = h2[:, FEATURES:2 * FEATURES]

    # reparameterize: z = mu + eps * exp(0.5 * log_var)   (all f32 elementwise)
    z = mu + eps_ref[...] * jnp.exp(0.5 * log_var)

    # dec1 + ReLU : (tb, 16)bf16 @ (16, 512)bf16
    h3 = jnp.dot(z.astype(bf16), w3_ref[...],
                 preferred_element_type=f32) + b3_ref[...]
    h3 = jnp.maximum(h3, 0.0)

    # dec2 + sigmoid : (tb, 512)bf16 @ (512, 784)bf16
    logits = jnp.dot(h3.astype(bf16), w4_ref[...],
                     preferred_element_type=f32) + b4_ref[...]
    recon_ref[...] = jax.nn.sigmoid(logits)


@functools.partial(jax.jit, static_argnames=("tile_b",))
def linear_vae_forward(x, eps, params, tile_b=None):
    """x: (B, 784) f32, eps: (B, 16) f32 (the randn_like sample)."""
    B = x.shape[0]
    w1, b1, w2, b2, w3, b3, w4, b4 = params   # weights bf16 (in,out); biases f32 (1,out)

    # Default tile: at most TILE_B_MAX, at least 8, and <= ceil(B/2) so the
    # parallel batch axis yields >=2 tiles whenever B > 8 (both TCs used on v7x).
    if tile_b is None:
        tile_b = min(TILE_B_MAX, max(8, _round_up(_cdiv(B, 2), 8)))
    B_pad = _round_up(B, tile_b)
    if B_pad != B:
        x = jnp.pad(x, ((0, B_pad - B), (0, 0)))
        eps = jnp.pad(eps, ((0, B_pad - B), (0, 0)))

    grid = (B_pad // tile_b,)

    def batch_spec(d):
        return pl.BlockSpec((tile_b, d), lambda i: (i, 0))

    def resident(shape):
        # Grid-invariant weights/biases: DMA'd once, single-buffered (saves VMEM).
        return pl.BlockSpec(shape, lambda i: (0, 0), pipeline_mode=pl.Buffered(1))

    recon_p, h2 = pl.pallas_call(
        _vae_kernel,
        out_shape=(
            jax.ShapeDtypeStruct((B_pad, IN_DIM), jnp.float32),
            jax.ShapeDtypeStruct((B_pad, LATENT_PAD), jnp.float32),
        ),
        grid=grid,
        in_specs=[
            batch_spec(IN_DIM),                  # x        (tb, 784)
            batch_spec(FEATURES),                # eps      (tb, 16)
            resident((IN_DIM, HID_DIM)),         # w1 bf16  (784, 512)
            resident((1, HID_DIM)),              # b1 f32
            resident((HID_DIM, LATENT_PAD)),     # w2 bf16  (512, 128) zero-padded cols
            resident((1, LATENT_PAD)),           # b2 f32
            resident((FEATURES, HID_DIM)),       # w3 bf16  (16, 512)
            resident((1, HID_DIM)),              # b3 f32
            resident((HID_DIM, IN_DIM)),         # w4 bf16  (512, 784)
            resident((1, IN_DIM)),               # b4 f32
        ],
        out_specs=(batch_spec(IN_DIM), batch_spec(LATENT_PAD)),
        compiler_params=pltpu.CompilerParams(
            dimension_semantics=("parallel",),   # shard batch tiles across TCs on v7x
            vmem_limit_bytes=40 << 20,           # ~15 MiB/tile actually needed; v7x-safe
        ),
    )(x, eps, w1, b1, w2, b2, w3, b3, w4, b4)

    recon = recon_p[:B]                          # no-op slice when B % tile_b == 0
    mu = h2[:B, :FEATURES]
    log_var = h2[:B, FEATURES:2 * FEATURES]
    return recon, mu, log_var


def init_params(key):
    """Deterministic init. Weights (in, out) stored bf16; biases (1, out) f32.
    enc2 weight/bias zero-padded from 32 -> 128 output columns (exact math)."""
    ks = jax.random.split(key, 8)

    def lin(kw, kb, fan_in, fan_out):
        bound = 1.0 / (float(fan_in) ** 0.5)
        w = jax.random.uniform(kw, (fan_in, fan_out), jnp.float32, -bound, bound)
        b = jax.random.uniform(kb, (1, fan_out), jnp.float32, -bound, bound)
        return w, b

    w1, b1 = lin(ks[0], ks[1], IN_DIM, HID_DIM)          # enc1: 784 -> 512
    w2, b2 = lin(ks[2], ks[3], HID_DIM, 2 * FEATURES)    # enc2: 512 -> 32
    w3, b3 = lin(ks[4], ks[5], FEATURES, HID_DIM)        # dec1: 16  -> 512
    w4, b4 = lin(ks[6], ks[7], HID_DIM, IN_DIM)          # dec2: 512 -> 784

    pad = LATENT_PAD - 2 * FEATURES
    w2 = jnp.pad(w2, ((0, 0), (0, pad)))
    b2 = jnp.pad(b2, ((0, 0), (0, pad)))

    bf = lambda w: w.astype(jnp.bfloat16)
    return (bf(w1), b1, bf(w2), b2, bf(w3), b3, bf(w4), b4)


def reference_forward(x, eps, params):
    """Pure-JAX reference with the same bf16-matmul / f32-accumulate recipe."""
    w1, b1, w2, b2, w3, b3, w4, b4 = params
    f32, bf16 = jnp.float32, jnp.bfloat16
    h1 = jax.nn.relu(jnp.dot(x.astype(bf16), w1, preferred_element_type=f32) + b1)
    h2 = jnp.dot(h1.astype(bf16), w2, preferred_element_type=f32) + b2
    mu, log_var = h2[:, :FEATURES], h2[:, FEATURES:2 * FEATURES]
    z = mu + eps * jnp.exp(0.5 * log_var)
    h3 = jax.nn.relu(jnp.dot(z.astype(bf16), w3, preferred_element_type=f32) + b3)
    recon = jax.nn.sigmoid(jnp.dot(h3.astype(bf16), w4, preferred_element_type=f32) + b4)
    return recon, mu, log_var


if __name__ == "__main__":
    key = jax.random.PRNGKey(0)
    k_param, k_x, k_eps, k_x2, k_eps2 = jax.random.split(key, 5)
    params = init_params(k_param)

    # Small-batch check (single grid tile).
    B = 8
    x = jax.random.uniform(k_x, (B, IN_DIM), jnp.float32)       # MNIST-like flat input
    eps = jax.random.normal(k_eps, (B, FEATURES), jnp.float32)  # deterministic randn_like

    recon, mu, log_var = linear_vae_forward(x, eps, params)
    jax.block_until_ready((recon, mu, log_var))

    r_recon, r_mu, r_lv = reference_forward(x, eps, params)
    assert recon.shape == (B, IN_DIM)
    assert mu.shape == (B, FEATURES) and log_var.shape == (B, FEATURES)
    # bf16 MXU inputs -> relaxed tolerances vs the (identically-quantized) reference.
    assert jnp.allclose(recon, r_recon, atol=1e-2, rtol=1e-2)
    assert jnp.allclose(mu, r_mu, atol=1e-2, rtol=1e-2)
    assert jnp.allclose(log_var, r_lv, atol=1e-2, rtol=1e-2)

    # Multi-tile check: grid > 1 plus batch padding (B=72, tile=32 -> 3 tiles, 24 pad rows).
    B2 = 72
    x2 = jax.random.uniform(k_x2, (B2, IN_DIM), jnp.float32)
    eps2 = jax.random.normal(k_eps2, (B2, FEATURES), jnp.float32)
    recon2, mu2, lv2 = linear_vae_forward(x2, eps2, params, tile_b=32)
    jax.block_until_ready((recon2, mu2, lv2))
    r_recon2, r_mu2, r_lv2 = reference_forward(x2, eps2, params)
    assert jnp.allclose(recon2, r_recon2, atol=1e-2, rtol=1e-2)
    assert jnp.allclose(mu2, r_mu2, atol=1e-2, rtol=1e-2)
    assert jnp.allclose(lv2, r_lv2, atol=1e-2, rtol=1e-2)

    print("KERNEL_OK")
</pallas_src>

<mosaic_0001>
module attributes {stable_mosaic.version = 11 : i64} {
  func.func @_vae_kernel(%arg0: i32, %arg1: memref<8x784xf32, #tpu.memory_space<vmem>>, %arg2: memref<8x16xf32, #tpu.memory_space<vmem>>, %arg3: memref<784x512xbf16, #tpu.memory_space<vmem>>, %arg4: memref<1x512xf32, #tpu.memory_space<vmem>>, %arg5: memref<512x128xbf16, #tpu.memory_space<vmem>>, %arg6: memref<1x128xf32, #tpu.memory_space<vmem>>, %arg7: memref<16x512xbf16, #tpu.memory_space<vmem>>, %arg8: memref<1x512xf32, #tpu.memory_space<vmem>>, %arg9: memref<512x784xbf16, #tpu.memory_space<vmem>>, %arg10: memref<1x784xf32, #tpu.memory_space<vmem>>, %arg11: memref<8x784xf32, #tpu.memory_space<vmem>>, %arg12: memref<8x128xf32, #tpu.memory_space<vmem>>) attributes {dimension_semantics = [#tpu.dimension_semantics<parallel>], iteration_bounds = array<i64: 1>, scalar_prefetch = 0 : i64, scratch_operands = 0 : i64, tpu.core_type = #tpu.core_type<tc>, window_params = [{transform_indices = @transform_0, window_bounds = array<i64: 8, 784>}, {transform_indices = @transform_1, window_bounds = array<i64: 8, 16>}, {pipeline_mode = #tpu.pipeline_mode<synchronous>, transform_indices = @transform_2, window_bounds = array<i64: 784, 512>}, {pipeline_mode = #tpu.pipeline_mode<synchronous>, transform_indices = @transform_3, window_bounds = array<i64: 1, 512>}, {pipeline_mode = #tpu.pipeline_mode<synchronous>, transform_indices = @transform_4, window_bounds = array<i64: 512, 128>}, {pipeline_mode = #tpu.pipeline_mode<synchronous>, transform_indices = @transform_5, window_bounds = array<i64: 1, 128>}, {pipeline_mode = #tpu.pipeline_mode<synchronous>, transform_indices = @transform_6, window_bounds = array<i64: 16, 512>}, {pipeline_mode = #tpu.pipeline_mode<synchronous>, transform_indices = @transform_7, window_bounds = array<i64: 1, 512>}, {pipeline_mode = #tpu.pipeline_mode<synchronous>, transform_indices = @transform_8, window_bounds = array<i64: 512, 784>}, {pipeline_mode = #tpu.pipeline_mode<synchronous>, transform_indices = @transform_9, window_bounds = array<i64: 1, 784>}, {transform_indices = @transform_10, window_bounds = array<i64: 8, 784>}, {transform_indices = @transform_11, window_bounds = array<i64: 8, 128>}]} {
    %c0 = arith.constant 0 : index
    %c0_0 = arith.constant 0 : index
    %0 = vector.load %arg1[%c0, %c0_0] : memref<8x784xf32, #tpu.memory_space<vmem>>, vector<8x784xf32>
    %1 = arith.truncf %0 : vector<8x784xf32> to vector<8x784xbf16>
    %c0_1 = arith.constant 0 : index
    %c0_2 = arith.constant 0 : index
    %2 = vector.load %arg3[%c0_1, %c0_2] : memref<784x512xbf16, #tpu.memory_space<vmem>>, vector<784x512xbf16>
    %cst = arith.constant dense<0.000000e+00> : vector<8x512xf32>
    %3 = tpu.matmul %1, %2, %cst {dimension_numbers = #tpu.dot_dimension_numbers<[1], [0], [0], [1], [0, 0, 1, 1], [], []>} : vector<8x784xbf16>, vector<784x512xbf16>, vector<8x512xf32> -> vector<8x512xf32>
    %c0_3 = arith.constant 0 : index
    %c0_4 = arith.constant 0 : index
    %4 = vector.load %arg4[%c0_3, %c0_4] : memref<1x512xf32, #tpu.memory_space<vmem>>, vector<1x512xf32>
    %5 = vector.broadcast %4 : vector<1x512xf32> to vector<8x512xf32>
    %6 = arith.addf %3, %5 : vector<8x512xf32>
    %cst_5 = arith.constant 0.000000e+00 : f32
    %7 = vector.broadcast %cst_5 : f32 to vector<8x512xf32>
    %8 = arith.maximumf %6, %7 : vector<8x512xf32>
    %9 = arith.truncf %8 : vector<8x512xf32> to vector<8x512xbf16>
    %c0_6 = arith.constant 0 : index
    %c0_7 = arith.constant 0 : index
    %10 = vector.load %arg5[%c0_6, %c0_7] : memref<512x128xbf16, #tpu.memory_space<vmem>>, vector<512x128xbf16>
    %cst_8 = arith.constant dense<0.000000e+00> : vector<8x128xf32>
    %11 = tpu.matmul %9, %10, %cst_8 {dimension_numbers = #tpu.dot_dimension_numbers<[1], [0], [0], [1], [0, 0, 1, 1], [], []>} : vector<8x512xbf16>, vector<512x128xbf16>, vector<8x128xf32> -> vector<8x128xf32>
    %c0_9 = arith.constant 0 : index
    %c0_10 = arith.constant 0 : index
    %12 = vector.load %arg6[%c0_9, %c0_10] : memref<1x128xf32, #tpu.memory_space<vmem>>, vector<1x128xf32>
    %13 = vector.broadcast %12 : vector<1x128xf32> to vector<8x128xf32>
    %14 = arith.addf %11, %13 : vector<8x128xf32>
    %c0_11 = arith.constant 0 : index
    %c0_12 = arith.constant 0 : index
    %15 = vector.load %arg12[%c0_11, %c0_12] : memref<8x128xf32, #tpu.memory_space<vmem>>, vector<8x128xf32>
    tpu.vector_store %arg12[%c0_11, %c0_12], %14 {strides = array<i32>} : memref<8x128xf32, #tpu.memory_space<vmem>>, vector<8x128xf32>,
    %16 = vector.extract_strided_slice %14 {offsets = [0, 0], sizes = [8, 16], strides = [1, 1]} : vector<8x128xf32> to vector<8x16xf32>
    %17 = vector.extract_strided_slice %14 {offsets = [0, 16], sizes = [8, 16], strides = [1, 1]} : vector<8x128xf32> to vector<8x16xf32>
    %c0_13 = arith.constant 0 : index
    %c0_14 = arith.constant 0 : index
    %18 = vector.load %arg2[%c0_13, %c0_14] : memref<8x16xf32, #tpu.memory_space<vmem>>, vector<8x16xf32>
    %cst_15 = arith.constant 5.000000e-01 : f32
    %19 = vector.broadcast %cst_15 : f32 to vector<8x16xf32>
    %20 = arith.mulf %19, %17 : vector<8x16xf32>
    %21 = math.exp %20 : vector<8x16xf32>
    %22 = arith.mulf %18, %21 : vector<8x16xf32>
    %23 = arith.addf %16, %22 : vector<8x16xf32>
    %24 = arith.truncf %23 : vector<8x16xf32> to vector<8x16xbf16>
    %c0_16 = arith.constant 0 : index
    %c0_17 = arith.constant 0 : index
    %25 = vector.load %arg7[%c0_16, %c0_17] : memref<16x512xbf16, #tpu.memory_space<vmem>>, vector<16x512xbf16>
    %cst_18 = arith.constant dense<0.000000e+00> : vector<8x512xf32>
    %26 = tpu.matmul %24, %25, %cst_18 {dimension_numbers = #tpu.dot_dimension_numbers<[1], [0], [0], [1], [0, 0, 1, 1], [], []>} : vector<8x16xbf16>, vector<16x512xbf16>, vector<8x512xf32> -> vector<8x512xf32>
    %c0_19 = arith.constant 0 : index
    %c0_20 = arith.constant 0 : index
    %27 = vector.load %arg8[%c0_19, %c0_20] : memref<1x512xf32, #tpu.memory_space<vmem>>, vector<1x512xf32>
    %28 = vector.broadcast %27 : vector<1x512xf32> to vector<8x512xf32>
    %29 = arith.addf %26, %28 : vector<8x512xf32>
    %cst_21 = arith.constant 0.000000e+00 : f32
    %30 = vector.broadcast %cst_21 : f32 to vector<8x512xf32>
    %31 = arith.maximumf %29, %30 : vector<8x512xf32>
    %32 = arith.truncf %31 : vector<8x512xf32> to vector<8x512xbf16>
    %c0_22 = arith.constant 0 : index
    %c0_23 = arith.constant 0 : index
    %33 = vector.load %arg9[%c0_22, %c0_23] : memref<512x784xbf16, #tpu.memory_space<vmem>>, vector<512x784xbf16>
    %cst_24 = arith.constant dense<0.000000e+00> : vector<8x784xf32>
    %34 = tpu.matmul %32, %33, %cst_24 {dimension_numbers = #tpu.dot_dimension_numbers<[1], [0], [0], [1], [0, 0, 1, 1], [], []>} : vector<8x512xbf16>, vector<512x784xbf16>, vector<8x784xf32> -> vector<8x784xf32>
    %c0_25 = arith.constant 0 : index
    %c0_26 = arith.constant 0 : index
    %35 = vector.load %arg10[%c0_25, %c0_26] : memref<1x784xf32, #tpu.memory_space<vmem>>, vector<1x784xf32>
    %36 = vector.broadcast %35 : vector<1x784xf32> to vector<8x784xf32>
    %37 = arith.addf %34, %36 : vector<8x784xf32>
    %38 = arith.negf %37 : vector<8x784xf32>
    %39 = math.exp %38 : vector<8x784xf32>
    %cst_27 = arith.constant 1.000000e+00 : f32
    %40 = vector.broadcast %cst_27 : f32 to vector<8x784xf32>
    %41 = arith.addf %40, %39 : vector<8x784xf32>
    %42 = arith.divf %40, %41 : vector<8x784xf32>
    %c0_28 = arith.constant 0 : index
    %c0_29 = arith.constant 0 : index
    %43 = vector.load %arg11[%c0_28, %c0_29] : memref<8x784xf32, #tpu.memory_space<vmem>>, vector<8x784xf32>
    tpu.vector_store %arg11[%c0_28, %c0_29], %42 {strides = array<i32>} : memref<8x784xf32, #tpu.memory_space<vmem>>, vector<8x784xf32>,
    return
  }
  func.func @transform_0(%arg0: i32) -> (i32, i32) {
    %c0_i32 = arith.constant 0 : i32
    %c0_i32_0 = arith.constant 0 : i32
    return %arg0, %c0_i32 : i32, i32
  }
  func.func @transform_1(%arg0: i32) -> (i32, i32) {
    %c0_i32 = arith.constant 0 : i32
    %c0_i32_0 = arith.constant 0 : i32
    return %arg0, %c0_i32 : i32, i32
  }
  func.func @transform_2(%arg0: i32) -> (i32, i32) {
    %c0_i32 = arith.constant 0 : i32
    %c0_i32_0 = arith.constant 0 : i32
    %c0_i32_1 = arith.constant 0 : i32
    return %c0_i32, %c0_i32_0 : i32, i32
  }
  func.func @transform_3(%arg0: i32) -> (i32, i32) {
    %c0_i32 = arith.constant 0 : i32
    %c0_i32_0 = arith.constant 0 : i32
    %c0_i32_1 = arith.constant 0 : i32
    return %c0_i32, %c0_i32_0 : i32, i32
  }
  func.func @transform_4(%arg0: i32) -> (i32, i32) {
    %c0_i32 = arith.constant 0 : i32
    %c0_i32_0 = arith.constant 0 : i32
    %c0_i32_1 = arith.constant 0 : i32
    return %c0_i32, %c0_i32_0 : i32, i32
  }
  func.func @transform_5(%arg0: i32) -> (i32, i32) {
    %c0_i32 = arith.constant 0 : i32
    %c0_i32_0 = arith.constant 0 : i32
    %c0_i32_1 = arith.constant 0 : i32
    return %c0_i32, %c0_i32_0 : i32, i32
  }
  func.func @transform_6(%arg0: i32) -> (i32, i32) {
    %c0_i32 = arith.constant 0 : i32
    %c0_i32_0 = arith.constant 0 : i32
    %c0_i32_1 = arith.constant 0 : i32
    return %c0_i32, %c0_i32_0 : i32, i32
  }
  func.func @transform_7(%arg0: i32) -> (i32, i32) {
    %c0_i32 = arith.constant 0 : i32
    %c0_i32_0 = arith.constant 0 : i32
    %c0_i32_1 = arith.constant 0 : i32
    return %c0_i32, %c0_i32_0 : i32, i32
  }
  func.func @transform_8(%arg0: i32) -> (i32, i32) {
    %c0_i32 = arith.constant 0 : i32
    %c0_i32_0 = arith.constant 0 : i32
    %c0_i32_1 = arith.constant 0 : i32
    return %c0_i32, %c0_i32_0 : i32, i32
  }
  func.func @transform_9(%arg0: i32) -> (i32, i32) {
    %c0_i32 = arith.constant 0 : i32
    %c0_i32_0 = arith.constant 0 : i32
    %c0_i32_1 = arith.constant 0 : i32
    return %c0_i32, %c0_i32_0 : i32, i32
  }
  func.func @transform_10(%arg0: i32) -> (i32, i32) {
    %c0_i32 = arith.constant 0 : i32
    %c0_i32_0 = arith.constant 0 : i32
    return %arg0, %c0_i32 : i32, i32
  }
  func.func @transform_11(%arg0: i32) -> (i32, i32) {
    %c0_i32 = arith.constant 0 : i32
    %c0_i32_0 = arith.constant 0 : i32
    return %arg0, %c0_i32 : i32, i32
  }
}

</mosaic_0001>

<llo_original>
// kernel: linear_vae_forward.1
$region0: #{linear_vae_forward.1}
  #allocation0 [shape = 'u32[]', space=smem, size = 0x4, offset = 0x4, fixed_abs, tag = 'smem constant byte address 0x4 - core index']
  #allocation1 [shape = 'u32[72,128]{1,0:T(1,128)}', space=vmem, size = 0x9000, scoped, tag = 'internal scratch']
  %s0 = inlined_call_operand.vmem [shape: f32[8,784], index: 0, kind: input, shape index: {}]
  %s1 = inlined_call_operand.vmem [shape: f32[8,16], index: 1, kind: input, shape index: {}]
  %s2 = inlined_call_operand.vmem [shape: bf16[784,512], index: 2, kind: input, shape index: {}]
  %s3 = inlined_call_operand.vmem [shape: f32[1,512], index: 3, kind: input, shape index: {}]
  %s4 = inlined_call_operand.vmem [shape: bf16[512,128], index: 4, kind: input, shape index: {}]
  %s5 = inlined_call_operand.vmem [shape: f32[1,128], index: 5, kind: input, shape index: {}]
  %s6 = inlined_call_operand.vmem [shape: bf16[16,512], index: 6, kind: input, shape index: {}]
  %s7 = inlined_call_operand.vmem [shape: f32[1,512], index: 7, kind: input, shape index: {}]
  %s8 = inlined_call_operand.vmem [shape: bf16[512,784], index: 8, kind: input, shape index: {}]
  %s9 = inlined_call_operand.vmem [shape: f32[1,784], index: 9, kind: input, shape index: {}]
  %s10 = inlined_call_operand.hbm [shape: f32[8,784], index: 10, kind: output, shape index: {0}]
  %s11 = inlined_call_operand.vmem [shape: f32[8,128], index: 11, kind: output, shape index: {1}]
  %12 = xla_tuple %s10, %s11
  %s13 = sld [smem:[#allocation0]]
  $region58: #{linear_vae_forward.1} parent=0
    _
  %s15 = ssub.s32 1, %s13
  %s16 = scalar_select 0, %s15, %s13
  $region1: #{linear_vae_forward.1} parent=0
    #allocation2 [shape = 'u8[28672]{0}', space=vmem, size = 0x7000, scoped, tag = 'output window, operand 0, single buffered']
    #allocation3 [shape = 's32[1]{0}', space=sflag, size = 0x4, scoped, tag = 'scoped memory for linear_vae_forward.1']
    %17 = vsyncpa [#allocation3], 0
    // Predicated region
    $region2: #{linear_vae_forward.1} parent=1 // pred_check
      _
    $region3: #{linear_vae_forward.1} parent=1 // pred_check_branch
      %19 = sbr.rel (0) target = $region5
    $region4: #{linear_vae_forward.1} parent=1 // pred_region
      _
    $region5: #{linear_vae_forward.1} parent=1 // pred_fallthru
      _
    // Predicated region
    $region6: #{linear_vae_forward.1} parent=1 // pred_check
      _
    $region7: #{linear_vae_forward.1} parent=1 // pred_check_branch
      %21 = sbr.rel (0) target = $region9
    $region8: #{linear_vae_forward.1} parent=1 // pred_region
      _
    $region9: #{linear_vae_forward.1} parent=1 // pred_fallthru
      _
    // Predicated region
    $region10: #{linear_vae_forward.1} parent=1 // pred_check
      _
    $region11: #{linear_vae_forward.1} parent=1 // pred_check_branch
      %23 = sbr.rel (0) target = $region13
    $region12: #{linear_vae_forward.1} parent=1 // pred_region
      _
    $region13: #{linear_vae_forward.1} parent=1 // pred_fallthru
      _
    // Predicated region
    $region14: #{linear_vae_forward.1} parent=1 // pred_check
      _
    $region15: #{linear_vae_forward.1} parent=1 // pred_check_branch
      %25 = sbr.rel (0) target = $region17
    $region16: #{linear_vae_forward.1} parent=1 // pred_region
      _
    $region17: #{linear_vae_forward.1} parent=1 // pred_fallthru
      _
    // Predicated region
    $region18: #{linear_vae_forward.1} parent=1 // pred_check
      _
    $region19: #{linear_vae_forward.1} parent=1 // pred_check_branch
      %27 = sbr.rel (0) target = $region21
    $region20: #{linear_vae_forward.1} parent=1 // pred_region
      _
    $region21: #{linear_vae_forward.1} parent=1 // pred_fallthru
      _
    // Predicated region
    $region22: #{linear_vae_forward.1} parent=1 // pred_check
      _
    $region23: #{linear_vae_forward.1} parent=1 // pred_check_branch
      %29 = sbr.rel (0) target = $region25
    $region24: #{linear_vae_forward.1} parent=1 // pred_region
      _
    $region25: #{linear_vae_forward.1} parent=1 // pred_fallthru
      _
    // Predicated region
    $region26: #{linear_vae_forward.1} parent=1 // pred_check
      _
    $region27: #{linear_vae_forward.1} parent=1 // pred_check_branch
      %31 = sbr.rel (0) target = $region29
    $region28: #{linear_vae_forward.1} parent=1 // pred_region
      _
    $region29: #{linear_vae_forward.1} parent=1 // pred_fallthru
      _
    // Predicated region
    $region30: #{linear_vae_forward.1} parent=1 // pred_check
      _
    $region31: #{linear_vae_forward.1} parent=1 // pred_check_branch
      %33 = sbr.rel (0) target = $region33
    $region32: #{linear_vae_forward.1} parent=1 // pred_region
      _
    $region33: #{linear_vae_forward.1} parent=1 // pred_fallthru
      _
    // Predicated region
    $region34: #{linear_vae_forward.1} parent=1 // pred_check
      _
    $region35: #{linear_vae_forward.1} parent=1 // pred_check_branch
      %35 = sbr.rel (0) target = $region37
    $region36: #{linear_vae_forward.1} parent=1 // pred_region
      _
    $region37: #{linear_vae_forward.1} parent=1 // pred_fallthru
      _
    // Predicated region
    $region38: #{linear_vae_forward.1} parent=1 // pred_check
      _
    $region39: #{linear_vae_forward.1} parent=1 // pred_check_branch
      %37 = sbr.rel (0) target = $region41
    $region40: #{linear_vae_forward.1} parent=1 // pred_region
      _
    $region41: #{linear_vae_forward.1} parent=1 // pred_fallthru
      _
    %v39 = vld [vmem:[%s0] sm:$0xff]
    %v40 = vld [vmem:[%s0 + $0x8] sm:$0xff]
    %v41 = vld [vmem:[%s0 + $0x10] sm:$0xff]
    %v42 = vld [vmem:[%s0 + $0x18] sm:$0xff]
    %v43 = vld [vmem:[%s0 + $0x20] sm:$0xff]
    %v44 = vld [vmem:[%s0 + $0x28] sm:$0xff]
    %v45 = vld [vmem:[%s0 + $0x30] sm:$0xff]
    %v46 = vpack.c.bf16 %v39, %v39
    %v47 = vpack.c.bf16 %v40, %v40
    %v48 = vpack.c.bf16 %v41, %v41
    %v49 = vpack.c.bf16 %v42, %v42
    %v50 = vpack.c.bf16 %v43, %v43
    %v51 = vpack.c.bf16 %v44, %v44
    %v52 = vpack.c.bf16 %v45, %v45
    %v53 = vld [vmem:[%s2] sm:$0xff]
    %v54 = vld [vmem:[%s2 + $0x8] sm:$0xff]
    %v55 = vld [vmem:[%s2 + $0x10] sm:$0xff]
    %v56 = vld [vmem:[%s2 + $0x18] sm:$0xff]
    %v57 = vld [vmem:[%s2 + $0x20] sm:$0xff]
    %v58 = vld [vmem:[%s2 + $0x28] sm:$0xff]
    %v59 = vld [vmem:[%s2 + $0x30] sm:$0xff]
    %v60 = vld [vmem:[%s2 + $0x38] sm:$0xff]
    %v61 = vld [vmem:[%s2 + $0x40] sm:$0xff]
    %v62 = vld [vmem:[%s2 + $0x48] sm:$0xff]
    %v63 = vld [vmem:[%s2 + $0x50] sm:$0xff]
    %v64 = vld [vmem:[%s2 + $0x58] sm:$0xff]
    %v65 = vld [vmem:[%s2 + $0x60] sm:$0xff]
    %v66 = vld [vmem:[%s2 + $0x68] sm:$0xff]
    %v67 = vld [vmem:[%s2 + $0x70] sm:$0xff]
    %v68 = vld [vmem:[%s2 + $0x78] sm:$0xff]
    %v69 = vld [vmem:[%s2 + $0x80] sm:$0xff]
    %v70 = vld [vmem:[%s2 + $0x88] sm:$0xff]
    %v71 = vld [vmem:[%s2 + $0x90] sm:$0xff]
    %v72 = vld [vmem:[%s2 + $0x98] sm:$0xff]
    %v73 = vld [vmem:[%s2 + $0xa0] sm:$0xff]
    %v74 = vld [vmem:[%s2 + $0xa8] sm:$0xff]
    %v75 = vld [vmem:[%s2 + $0xb0] sm:$0xff]
    %v76 = vld [vmem:[%s2 + $0xb8] sm:$0xff]
    %v77 = vld [vmem:[%s2 + $0xc0] sm:$0xff]
    %v78 = vld [vmem:[%s2 + $0xc8] sm:$0xff]
    %v79 = vld [vmem:[%s2 + $0xd0] sm:$0xff]
    %v80 = vld [vmem:[%s2 + $0xd8] sm:$0xff]
    %v81 = vld [vmem:[%s2 + $0xe0] sm:$0xff]
    %v82 = vld [vmem:[%s2 + $0xe8] sm:$0xff]
    %v83 = vld [vmem:[%s2 + $0xf0] sm:$0xff]
    %v84 = vld [vmem:[%s2 + $0xf8] sm:$0xff]
    %v85 = vld [vmem:[%s2 + $0x100] sm:$0xff]
    %v86 = vld [vmem:[%s2 + $0x108] sm:$0xff]
    %v87 = vld [vmem:[%s2 + $0x110] sm:$0xff]
    %v88 = vld [vmem:[%s2 + $0x118] sm:$0xff]
    %v89 = vld [vmem:[%s2 + $0x120] sm:$0xff]
    %v90 = vld [vmem:[%s2 + $0x128] sm:$0xff]
    %v91 = vld [vmem:[%s2 + $0x130] sm:$0xff]
    %v92 = vld [vmem:[%s2 + $0x138] sm:$0xff]
    %v93 = vld [vmem:[%s2 + $0x140] sm:$0xff]
    %v94 = vld [vmem:[%s2 + $0x148] sm:$0xff]
    %v95 = vld [vmem:[%s2 + $0x150] sm:$0xff]
    %v96 = vld [vmem:[%s2 + $0x158] sm:$0xff]
    %v97 = vld [vmem:[%s2 + $0x160] sm:$0xff]
    %v98 = vld [vmem:[%s2 + $0x168] sm:$0xff]
    %v99 = vld [vmem:[%s2 + $0x170] sm:$0xff]
    %v100 = vld [vmem:[%s2 + $0x178] sm:$0xff]
    %v101 = vld [vmem:[%s2 + $0x180] sm:$0xff]
    %v102 = vld [vmem:[%s2 + $0x188] sm:$0xff]
    %v103 = vld [vmem:[%s2 + $0x190] sm:$0xff]
    %v104 = vld [vmem:[%s2 + $0x198] sm:$0xff]
    %v105 = vld [vmem:[%s2 + $0x1a0] sm:$0xff]
    %v106 = vld [vmem:[%s2 + $0x1a8] sm:$0xff]
    %v107 = vld [vmem:[%s2 + $0x1b0] sm:$0xff]
    %v108 = vld [vmem:[%s2 + $0x1b8] sm:$0xff]
    %v109 = vld [vmem:[%s2 + $0x1c0] sm:$0xff]
    %v110 = vld [vmem:[%s2 + $0x1c8] sm:$0xff]
    %v111 = vld [vmem:[%s2 + $0x1d0] sm:$0xff]
    %v112 = vld [vmem:[%s2 + $0x1d8] sm:$0xff]
    %v113 = vld [vmem:[%s2 + $0x1e0] sm:$0xff]
    %v114 = vld [vmem:[%s2 + $0x1e8] sm:$0xff]
    %v115 = vld [vmem:[%s2 + $0x1f0] sm:$0xff]
    %v116 = vld [vmem:[%s2 + $0x1f8] sm:$0xff]
    %v117 = vld [vmem:[%s2 + $0x200] sm:$0xff]
    %v118 = vld [vmem:[%s2 + $0x208] sm:$0xff]
    %v119 = vld [vmem:[%s2 + $0x210] sm:$0xff]
    %v120 = vld [vmem:[%s2 + $0x218] sm:$0xff]
    %v121 = vld [vmem:[%s2 + $0x220] sm:$0xff]
    %v122 = vld [vmem:[%s2 + $0x228] sm:$0xff]
    %v123 = vld [vmem:[%s2 + $0x230] sm:$0xff]
    %v124 = vld [vmem:[%s2 + $0x238] sm:$0xff]
    %v125 = vld [vmem:[%s2 + $0x240] sm:$0xff]
    %v126 = vld [vmem:[%s2 + $0x248] sm:$0xff]
    %v127 = vld [vmem:[%s2 + $0x250] sm:$0xff]
    %v128 = vld [vmem:[%s2 + $0x258] sm:$0xff]
    %v129 = vld [vmem:[%s2 + $0x260] sm:$0xff]
    %v130 = vld [vmem:[%s2 + $0x268] sm:$0xff]
    %v131 = vld [vmem:[%s2 + $0x270] sm:$0xff]
    %v132 = vld [vmem:[%s2 + $0x278] sm:$0xff]
    %v133 = vld [vmem:[%s2 + $0x280] sm:$0xff]
    %v134 = vld [vmem:[%s2 + $0x288] sm:$0xff]
    %v135 = vld [vmem:[%s2 + $0x290] sm:$0xff]
    %v136 = vld [vmem:[%s2 + $0x298] sm:$0xff]
    %v137 = vld [vmem:[%s2 + $0x2a0] sm:$0xff]
    %v138 = vld [vmem:[%s2 + $0x2a8] sm:$0xff]
    %v139 = vld [vmem:[%s2 + $0x2b0] sm:$0xff]
    %v140 = vld [vmem:[%s2 + $0x2b8] sm:$0xff]
    %v141 = vld [vmem:[%s2 + $0x2c0] sm:$0xff]
    %v142 = vld [vmem:[%s2 + $0x2c8] sm:$0xff]
    %v143 = vld [vmem:[%s2 + $0x2d0] sm:$0xff]
    %v144 = vld [vmem:[%s2 + $0x2d8] sm:$0xff]
    %v145 = vld [vmem:[%s2 + $0x2e0] sm:$0xff]
    %v146 = vld [vmem:[%s2 + $0x2e8] sm:$0xff]
    %v147 = vld [vmem:[%s2 + $0x2f0] sm:$0xff]
    %v148 = vld [vmem:[%s2 + $0x2f8] sm:$0xff]
    %v149 = vld [vmem:[%s2 + $0x300] sm:$0xff]
    %v150 = vld [vmem:[%s2 + $0x308] sm:$0xff]
    %v151 = vld [vmem:[%s2 + $0x310] sm:$0xff]
    %v152 = vld [vmem:[%s2 + $0x318] sm:$0xff]
    %v153 = vld [vmem:[%s2 + $0x320] sm:$0xff]
    %v154 = vld [vmem:[%s2 + $0x328] sm:$0xff]
    %v155 = vld [vmem:[%s2 + $0x330] sm:$0xff]
    %v156 = vld [vmem:[%s2 + $0x338] sm:$0xff]
    %v157 = vld [vmem:[%s2 + $0x340] sm:$0xff]
    %v158 = vld [vmem:[%s2 + $0x348] sm:$0xff]
    %v159 = vld [vmem:[%s2 + $0x350] sm:$0xff]
    %v160 = vld [vmem:[%s2 + $0x358] sm:$0xff]
    %v161 = vld [vmem:[%s2 + $0x360] sm:$0xff]
    %v162 = vld [vmem:[%s2 + $0x368] sm:$0xff]
    %v163 = vld [vmem:[%s2 + $0x370] sm:$0xff]
    %v164 = vld [vmem:[%s2 + $0x378] sm:$0xff]
    %v165 = vld [vmem:[%s2 + $0x380] sm:$0xff]
    %v166 = vld [vmem:[%s2 + $0x388] sm:$0xff]
    %v167 = vld [vmem:[%s2 + $0x390] sm:$0xff]
    %v168 = vld [vmem:[%s2 + $0x398] sm:$0xff]
    %v169 = vld [vmem:[%s2 + $0x3a0] sm:$0xff]
    %v170 = vld [vmem:[%s2 + $0x3a8] sm:$0xff]
    %v171 = vld [vmem:[%s2 + $0x3b0] sm:$0xff]
    %v172 = vld [vmem:[%s2 + $0x3b8] sm:$0xff]
    %v173 = vld [vmem:[%s2 + $0x3c0] sm:$0xff]
    %v174 = vld [vmem:[%s2 + $0x3c8] sm:$0xff]
    %v175 = vld [vmem:[%s2 + $0x3d0] sm:$0xff]
    %v176 = vld [vmem:[%s2 + $0x3d8] sm:$0xff]
    %v177 = vld [vmem:[%s2 + $0x3e0] sm:$0xff]
    %v178 = vld [vmem:[%s2 + $0x3e8] sm:$0xff]
    %v179 = vld [vmem:[%s2 + $0x3f0] sm:$0xff]
    %v180 = vld [vmem:[%s2 + $0x3f8] sm:$0xff]
    %v181 = vld [vmem:[%s2 + $0x400] sm:$0xff]
    %v182 = vld [vmem:[%s2 + $0x408] sm:$0xff]
    %v183 = vld [vmem:[%s2 + $0x410] sm:$0xff]
    %v184 = vld [vmem:[%s2 + $0x418] sm:$0xff]
    %v185 = vld [vmem:[%s2 + $0x420] sm:$0xff]
    %v186 = vld [vmem:[%s2 + $0x428] sm:$0xff]
    %v187 = vld [vmem:[%s2 + $0x430] sm:$0xff]
    %v188 = vld [vmem:[%s2 + $0x438] sm:$0xff]
    %v189 = vld [vmem:[%s2 + $0x440] sm:$0xff]
    %v190 = vld [vmem:[%s2 + $0x448] sm:$0xff]
    %v191 = vld [vmem:[%s2 + $0x450] sm:$0xff]
    %v192 = vld [vmem:[%s2 + $0x458] sm:$0xff]
    %v193 = vld [vmem:[%s2 + $0x460] sm:$0xff]
    %v194 = vld [vmem:[%s2 + $0x468] sm:$0xff]
    %v195 = vld [vmem:[%s2 + $0x470] sm:$0xff]
    %v196 = vld [vmem:[%s2 + $0x478] sm:$0xff]
    %v197 = vld [vmem:[%s2 + $0x480] sm:$0xff]
    %v198 = vld [vmem:[%s2 + $0x488] sm:$0xff]
    %v199 = vld [vmem:[%s2 + $0x490] sm:$0xff]
    %v200 = vld [vmem:[%s2 + $0x498] sm:$0xff]
    %v201 = vld [vmem:[%s2 + $0x4a0] sm:$0xff]
    %v202 = vld [vmem:[%s2 + $0x4a8] sm:$0xff]
    %v203 = vld [vmem:[%s2 + $0x4b0] sm:$0xff]
    %v204 = vld [vmem:[%s2 + $0x4b8] sm:$0xff]
    %v205 = vld [vmem:[%s2 + $0x4c0] sm:$0xff]
    %v206 = vld [vmem:[%s2 + $0x4c8] sm:$0xff]
    %v207 = vld [vmem:[%s2 + $0x4d0] sm:$0xff]
    %v208 = vld [vmem:[%s2 + $0x4d8] sm:$0xff]
    %v209 = vld [vmem:[%s2 + $0x4e0] sm:$0xff]
    %v210 = vld [vmem:[%s2 + $0x4e8] sm:$0xff]
    %v211 = vld [vmem:[%s2 + $0x4f0] sm:$0xff]
    %v212 = vld [vmem:[%s2 + $0x4f8] sm:$0xff]
    %v213 = vld [vmem:[%s2 + $0x500] sm:$0xff]
    %v214 = vld [vmem:[%s2 + $0x508] sm:$0xff]
    %v215 = vld [vmem:[%s2 + $0x510] sm:$0xff]
    %v216 = vld [vmem:[%s2 + $0x518] sm:$0xff]
    %v217 = vld [vmem:[%s2 + $0x520] sm:$0xff]
    %v218 = vld [vmem:[%s2 + $0x528] sm:$0xff]
    %v219 = vld [vmem:[%s2 + $0x530] sm:$0xff]
    %v220 = vld [vmem:[%s2 + $0x538] sm:$0xff]
    %v221 = vld [vmem:[%s2 + $0x540] sm:$0xff]
    %v222 = vld [vmem:[%s2 + $0x548] sm:$0xff]
    %v223 = vld [vmem:[%s2 + $0x550] sm:$0xff]
    %v224 = vld [vmem:[%s2 + $0x558] sm:$0xff]
    %v225 = vld [vmem:[%s2 + $0x560] sm:$0xff]
    %v226 = vld [vmem:[%s2 + $0x568] sm:$0xff]
    %v227 = vld [vmem:[%s2 + $0x570] sm:$0xff]
    %v228 = vld [vmem:[%s2 + $0x578] sm:$0xff]
    %v229 = vld [vmem:[%s2 + $0x580] sm:$0xff]
    %v230 = vld [vmem:[%s2 + $0x588] sm:$0xff]
    %v231 = vld [vmem:[%s2 + $0x590] sm:$0xff]
    %v232 = vld [vmem:[%s2 + $0x598] sm:$0xff]
    %v233 = vld [vmem:[%s2 + $0x5a0] sm:$0xff]
    %v234 = vld [vmem:[%s2 + $0x5a8] sm:$0xff]
    %v235 = vld [vmem:[%s2 + $0x5b0] sm:$0xff]
    %v236 = vld [vmem:[%s2 + $0x5b8] sm:$0xff]
    %v237 = vld [vmem:[%s2 + $0x5c0] sm:$0xff]
    %v238 = vld [vmem:[%s2 + $0x5c8] sm:$0xff]
    %v239 = vld [vmem:[%s2 + $0x5d0] sm:$0xff]
    %v240 = vld [vmem:[%s2 + $0x5d8] sm:$0xff]
    %v241 = vld [vmem:[%s2 + $0x5e0] sm:$0xff]
    %v242 = vld [vmem:[%s2 + $0x5e8] sm:$0xff]
    %v243 = vld [vmem:[%s2 + $0x5f0] sm:$0xff]
    %v244 = vld [vmem:[%s2 + $0x5f8] sm:$0xff]
    %v245 = vld [vmem:[%s2 + $0x600] sm:$0xff]
    %v246 = vld [vmem:[%s2 + $0x608] sm:$0xff]
    %v247 = vld [vmem:[%s2 + $0x610] sm:$0xff]
    %v248 = vld [vmem:[%s2 + $0x618] sm:$0xff]
    %v249 = vld [vmem:[%s3] sm:$0xf]
    %v251 = vperm.slane %v249, 0
    %v252 = vperm.slane %v249, 1
    %v253 = vperm.slane %v249, 2
    %v254 = vperm.slane %v249, 3
    %v455 = vunpack.c.l.b16 %v53
    %v456 = vunpack.c.h.b16 %v53
    %v457 = vunpack.c.l.b16 %v54
    %v458 = vunpack.c.h.b16 %v54
    %v459 = vunpack.c.l.b16 %v55
    %v460 = vunpack.c.h.b16 %v55
    %v461 = vunpack.c.l.b16 %v56
    %v462 = vunpack.c.h.b16 %v56
    %v463 = vunpack.c.l.b16 %v57
    %v464 = vunpack.c.h.b16 %v57
    %v465 = vunpack.c.l.b16 %v58
    %v466 = vunpack.c.h.b16 %v58
    %v467 = vunpack.c.l.b16 %v59
    %v468 = vunpack.c.h.b16 %v59
    %v469 = vunpack.c.l.b16 %v60
    %v470 = vunpack.c.h.b16 %v60
    %v471 = vunpack.c.l.b16 %v61
    %v472 = vunpack.c.h.b16 %v61
    %v473 = vunpack.c.l.b16 %v62
    %v474 = vunpack.c.h.b16 %v62
    %v475 = vunpack.c.l.b16 %v63
    %v476 = vunpack.c.h.b16 %v63
    %v477 = vunpack.c.l.b16 %v64
    %v478 = vunpack.c.h.b16 %v64
    %v479 = vunpack.c.l.b16 %v65
    %v480 = vunpack.c.h.b16 %v65
    %v481 = vunpack.c.l.b16 %v66
    %v482 = vunpack.c.h.b16 %v66
    %v483 = vunpack.c.l.b16 %v67
    %v484 = vunpack.c.h.b16 %v67
    %v485 = vunpack.c.l.b16 %v68
    %v486 = vunpack.c.h.b16 %v68
    %v487 = vunpack.c.l.b16 %v69
    %v488 = vunpack.c.h.b16 %v69
    %v489 = vunpack.c.l.b16 %v70
    %v490 = vunpack.c.h.b16 %v70
    %v491 = vunpack.c.l.b16 %v71
    %v492 = vunpack.c.h.b16 %v71
    %v493 = vunpack.c.l.b16 %v72
    %v494 = vunpack.c.h.b16 %v72
    %v495 = vunpack.c.l.b16 %v73
    %v496 = vunpack.c.h.b16 %v73
    %v497 = vunpack.c.l.b16 %v74
    %v498 = vunpack.c.h.b16 %v74
    %v499 = vunpack.c.l.b16 %v75
    %v500 = vunpack.c.h.b16 %v75
    %v501 = vunpack.c.l.b16 %v76
    %v502 = vunpack.c.h.b16 %v76
    %v503 = vunpack.c.l.b16 %v77
    %v504 = vunpack.c.h.b16 %v77
    %v505 = vunpack.c.l.b16 %v78
    %v506 = vunpack.c.h.b16 %v78
    %v507 = vunpack.c.l.b16 %v79
    %v508 = vunpack.c.h.b16 %v79
    %v509 = vunpack.c.l.b16 %v80
    %v510 = vunpack.c.h.b16 %v80
    %v511 = vunpack.c.l.b16 %v81
    %v512 = vunpack.c.h.b16 %v81
    %v513 = vunpack.c.l.b16 %v82
    %v514 = vunpack.c.h.b16 %v82
    %v515 = vunpack.c.l.b16 %v83
    %v516 = vunpack.c.h.b16 %v83
    %v517 = vunpack.c.l.b16 %v84
    %v518 = vunpack.c.h.b16 %v84
    %v519 = vunpack.c.l.b16 %v85
    %v520 = vunpack.c.h.b16 %v85
    %v521 = vunpack.c.l.b16 %v86
    %v522 = vunpack.c.h.b16 %v86
    %v523 = vunpack.c.l.b16 %v87
    %v524 = vunpack.c.h.b16 %v87
    %v525 = vunpack.c.l.b16 %v88
    %v526 = vunpack.c.h.b16 %v88
    %v527 = vunpack.c.l.b16 %v89
    %v528 = vunpack.c.h.b16 %v89
    %v529 = vunpack.c.l.b16 %v90
    %v530 = vunpack.c.h.b16 %v90
    %v531 = vunpack.c.l.b16 %v91
    %v532 = vunpack.c.h.b16 %v91
    %v533 = vunpack.c.l.b16 %v92
    %v534 = vunpack.c.h.b16 %v92
    %v535 = vunpack.c.l.b16 %v93
    %v536 = vunpack.c.h.b16 %v93
    %v537 = vunpack.c.l.b16 %v94
    %v538 = vunpack.c.h.b16 %v94
    %v539 = vunpack.c.l.b16 %v95
    %v540 = vunpack.c.h.b16 %v95
    %v541 = vunpack.c.l.b16 %v96
    %v542 = vunpack.c.h.b16 %v96
    %v543 = vunpack.c.l.b16 %v97
    %v544 = vunpack.c.h.b16 %v97
    %v545 = vunpack.c.l.b16 %v98
    %v546 = vunpack.c.h.b16 %v98
    %v547 = vunpack.c.l.b16 %v99
    %v548 = vunpack.c.h.b16 %v99
    %v549 = vunpack.c.l.b16 %v100
    %v550 = vunpack.c.h.b16 %v100
    %v551 = vunpack.c.l.b16 %v101
    %v552 = vunpack.c.h.b16 %v101
    %v553 = vunpack.c.l.b16 %v102
    %v554 = vunpack.c.h.b16 %v102
    %v555 = vunpack.c.l.b16 %v103
    %v556 = vunpack.c.h.b16 %v103
    %v557 = vunpack.c.l.b16 %v104
    %v558 = vunpack.c.h.b16 %v104
    %v559 = vunpack.c.l.b16 %v105
    %v560 = vunpack.c.h.b16 %v105
    %v561 = vunpack.c.l.b16 %v106
    %v562 = vunpack.c.h.b16 %v106
    %v563 = vunpack.c.l.b16 %v107
    %v564 = vunpack.c.h.b16 %v107
    %v565 = vunpack.c.l.b16 %v108
    %v566 = vunpack.c.h.b16 %v108
    %v567 = vunpack.c.l.b16 %v109
    %v568 = vunpack.c.h.b16 %v109
    %v569 = vunpack.c.l.b16 %v110
    %v570 = vunpack.c.h.b16 %v110
    %v571 = vunpack.c.l.b16 %v111
    %v572 = vunpack.c.h.b16 %v111
    %v573 = vunpack.c.l.b16 %v112
    %v574 = vunpack.c.h.b16 %v112
    %v575 = vunpack.c.l.b16 %v113
    %v576 = vunpack.c.h.b16 %v113
    %v577 = vunpack.c.l.b16 %v114
    %v578 = vunpack.c.h.b16 %v114
    %v579 = vunpack.c.l.b16 %v115
    %v580 = vunpack.c.h.b16 %v115
    %v581 = vunpack.c.l.b16 %v116
    %v582 = vunpack.c.h.b16 %v116
    %v583 = vunpack.c.l.b16 %v117
    %v584 = vunpack.c.h.b16 %v117
    %v585 = vunpack.c.l.b16 %v118
    %v586 = vunpack.c.h.b16 %v118
    %v587 = vunpack.c.l.b16 %v119
    %v588 = vunpack.c.h.b16 %v119
    %v589 = vunpack.c.l.b16 %v120
    %v590 = vunpack.c.h.b16 %v120
    %v591 = vunpack.c.l.b16 %v121
    %v592 = vunpack.c.h.b16 %v121
    %v593 = vunpack.c.l.b16 %v122
    %v594 = vunpack.c.h.b16 %v122
    %v595 = vunpack.c.l.b16 %v123
    %v596 = vunpack.c.h.b16 %v123
    %v597 = vunpack.c.l.b16 %v124
    %v598 = vunpack.c.h.b16 %v124
    %v599 = vunpack.c.l.b16 %v125
    %v600 = vunpack.c.h.b16 %v125
    %v601 = vunpack.c.l.b16 %v126
    %v602 = vunpack.c.h.b16 %v126
    %v603 = vunpack.c.l.b16 %v127
    %v604 = vunpack.c.h.b16 %v127
    %v605 = vunpack.c.l.b16 %v128
    %v606 = vunpack.c.h.b16 %v128
    %v607 = vunpack.c.l.b16 %v129
    %v608 = vunpack.c.h.b16 %v129
    %v609 = vunpack.c.l.b16 %v130
    %v610 = vunpack.c.h.b16 %v130
    %v611 = vunpack.c.l.b16 %v131
    %v612 = vunpack.c.h.b16 %v131
    %v613 = vunpack.c.l.b16 %v132
    %v614 = vunpack.c.h.b16 %v132
    %v615 = vunpack.c.l.b16 %v133
    %v616 = vunpack.c.h.b16 %v133
    %v617 = vunpack.c.l.b16 %v134
    %v618 = vunpack.c.h.b16 %v134
    %v619 = vunpack.c.l.b16 %v135
    %v620 = vunpack.c.h.b16 %v135
    %v621 = vunpack.c.l.b16 %v136
    %v622 = vunpack.c.h.b16 %v136
    %v623 = vunpack.c.l.b16 %v137
    %v624 = vunpack.c.h.b16 %v137
    %v625 = vunpack.c.l.b16 %v138
    %v626 = vunpack.c.h.b16 %v138
    %v627 = vunpack.c.l.b16 %v139
    %v628 = vunpack.c.h.b16 %v139
    %v629 = vunpack.c.l.b16 %v140
    %v630 = vunpack.c.h.b16 %v140
    %v631 = vunpack.c.l.b16 %v141
    %v632 = vunpack.c.h.b16 %v141
    %v633 = vunpack.c.l.b16 %v142
    %v634 = vunpack.c.h.b16 %v142
    %v635 = vunpack.c.l.b16 %v143
    %v636 = vunpack.c.h.b16 %v143
    %v637 = vunpack.c.l.b16 %v144
    %v638 = vunpack.c.h.b16 %v144
    %v639 = vunpack.c.l.b16 %v145
    %v640 = vunpack.c.h.b16 %v145
    %v641 = vunpack.c.l.b16 %v146
    %v642 = vunpack.c.h.b16 %v146
    %v643 = vunpack.c.l.b16 %v147
    %v644 = vunpack.c.h.b16 %v147
    %v645 = vunpack.c.l.b16 %v148
    %v646 = vunpack.c.h.b16 %v148
    %v647 = vunpack.c.l.b16 %v149
    %v648 = vunpack.c.h.b16 %v149
    %v649 = vunpack.c.l.b16 %v150
    %v650 = vunpack.c.h.b16 %v150
    %v651 = vunpack.c.l.b16 %v151
    %v652 = vunpack.c.h.b16 %v151
    %v653 = vunpack.c.l.b16 %v152
    %v654 = vunpack.c.h.b16 %v152
    %v655 = vunpack.c.l.b16 %v153
    %v656 = vunpack.c.h.b16 %v153
    %v657 = vunpack.c.l.b16 %v154
    %v658 = vunpack.c.h.b16 %v154
    %v659 = vunpack.c.l.b16 %v155
    %v660 = vunpack.c.h.b16 %v155
    %v661 = vunpack.c.l.b16 %v156
    %v662 = vunpack.c.h.b16 %v156
    %v663 = vunpack.c.l.b16 %v157
    %v664 = vunpack.c.h.b16 %v157
    %v665 = vunpack.c.l.b16 %v158
    %v666 = vunpack.c.h.b16 %v158
    %v667 = vunpack.c.l.b16 %v159
    %v668 = vunpack.c.h.b16 %v159
    %v669 = vunpack.c.l.b16 %v160
    %v670 = vunpack.c.h.b16 %v160
    %v671 = vunpack.c.l.b16 %v161
    %v672 = vunpack.c.h.b16 %v161
    %v673 = vunpack.c.l.b16 %v162
    %v674 = vunpack.c.h.b16 %v162
    %v675 = vunpack.c.l.b16 %v163
    %v676 = vunpack.c.h.b16 %v163
    %v677 = vunpack.c.l.b16 %v164
    %v678 = vunpack.c.h.b16 %v164
    %v679 = vunpack.c.l.b16 %v165
    %v680 = vunpack.c.h.b16 %v165
    %v681 = vunpack.c.l.b16 %v166
    %v682 = vunpack.c.h.b16 %v166
    %v683 = vunpack.c.l.b16 %v167
    %v684 = vunpack.c.h.b16 %v167
    %v685 = vunpack.c.l.b16 %v168
    %v686 = vunpack.c.h.b16 %v168
    %v687 = vunpack.c.l.b16 %v169
    %v688 = vunpack.c.h.b16 %v169
    %v689 = vunpack.c.l.b16 %v170
    %v690 = vunpack.c.h.b16 %v170
    %v691 = vunpack.c.l.b16 %v171
    %v692 = vunpack.c.h.b16 %v171
    %v693 = vunpack.c.l.b16 %v172
    %v694 = vunpack.c.h.b16 %v172
    %v695 = vunpack.c.l.b16 %v173
    %v696 = vunpack.c.h.b16 %v173
    %v697 = vunpack.c.l.b16 %v174
    %v698 = vunpack.c.h.b16 %v174
    %v699 = vunpack.c.l.b16 %v175
    %v700 = vunpack.c.h.b16 %v175
    %v701 = vunpack.c.l.b16 %v176
    %v702 = vunpack.c.h.b16 %v176
    %v703 = vunpack.c.l.b16 %v177
    %v704 = vunpack.c.h.b16 %v177
    %v705 = vunpack.c.l.b16 %v178
    %v706 = vunpack.c.h.b16 %v178
    %v707 = vunpack.c.l.b16 %v179
    %v708 = vunpack.c.h.b16 %v179
    %v709 = vunpack.c.l.b16 %v180
    %v710 = vunpack.c.h.b16 %v180
    %v711 = vunpack.c.l.b16 %v181
    %v712 = vunpack.c.h.b16 %v181
    %v713 = vunpack.c.l.b16 %v182
    %v714 = vunpack.c.h.b16 %v182
    %v715 = vunpack.c.l.b16 %v183
    %v716 = vunpack.c.h.b16 %v183
    %v717 = vunpack.c.l.b16 %v184
    %v718 = vunpack.c.h.b16 %v184
    %v719 = vunpack.c.l.b16 %v185
    %v720 = vunpack.c.h.b16 %v185
    %v721 = vunpack.c.l.b16 %v186
    %v722 = vunpack.c.h.b16 %v186
    %v723 = vunpack.c.l.b16 %v187
    %v724 = vunpack.c.h.b16 %v187
    %v725 = vunpack.c.l.b16 %v188
    %v726 = vunpack.c.h.b16 %v188
    %v727 = vunpack.c.l.b16 %v189
    %v728 = vunpack.c.h.b16 %v189
    %v729 = vunpack.c.l.b16 %v190
    %v730 = vunpack.c.h.b16 %v190
    %v731 = vunpack.c.l.b16 %v191
    %v732 = vunpack.c.h.b16 %v191
    %v733 = vunpack.c.l.b16 %v192
    %v734 = vunpack.c.h.b16 %v192
    %v735 = vunpack.c.l.b16 %v193
    %v736 = vunpack.c.h.b16 %v193
    %v737 = vunpack.c.l.b16 %v194
    %v738 = vunpack.c.h.b16 %v194
    %v739 = vunpack.c.l.b16 %v195
    %v740 = vunpack.c.h.b16 %v195
    %v741 = vunpack.c.l.b16 %v196
    %v742 = vunpack.c.h.b16 %v196
    %v743 = vunpack.c.l.b16 %v197
    %v744 = vunpack.c.h.b16 %v197
    %v745 = vunpack.c.l.b16 %v198
    %v746 = vunpack.c.h.b16 %v198
    %v747 = vunpack.c.l.b16 %v199
    %v748 = vunpack.c.h.b16 %v199
    %v749 = vunpack.c.l.b16 %v200
    %v750 = vunpack.c.h.b16 %v200
    %v751 = vunpack.c.l.b16 %v201
    %v752 = vunpack.c.h.b16 %v201
    %v753 = vunpack.c.l.b16 %v202
    %v754 = vunpack.c.h.b16 %v202
    %v755 = vunpack.c.l.b16 %v203
    %v756 = vunpack.c.h.b16 %v203
    %v757 = vunpack.c.l.b16 %v204
    %v758 = vunpack.c.h.b16 %v204
    %v759 = vunpack.c.l.b16 %v205
    %v760 = vunpack.c.h.b16 %v205
    %v761 = vunpack.c.l.b16 %v206
    %v762 = vunpack.c.h.b16 %v206
    %v763 = vunpack.c.l.b16 %v207
    %v764 = vunpack.c.h.b16 %v207
    %v765 = vunpack.c.l.b16 %v208
    %v766 = vunpack.c.h.b16 %v208
    %v767 = vunpack.c.l.b16 %v209
    %v768 = vunpack.c.h.b16 %v209
    %v769 = vunpack.c.l.b16 %v210
    %v770 = vunpack.c.h.b16 %v210
    %v771 = vunpack.c.l.b16 %v211
    %v772 = vunpack.c.h.b16 %v211
    %v773 = vunpack.c.l.b16 %v212
    %v774 = vunpack.c.h.b16 %v212
    %v775 = vunpack.c.l.b16 %v213
    %v776 = vunpack.c.h.b16 %v213
    %v777 = vunpack.c.l.b16 %v214
    %v778 = vunpack.c.h.b16 %v214
    %v779 = vunpack.c.l.b16 %v215
    %v780 = vunpack.c.h.b16 %v215
    %v781 = vunpack.c.l.b16 %v216
    %v782 = vunpack.c.h.b16 %v216
    %v783 = vunpack.c.l.b16 %v217
    %v784 = vunpack.c.h.b16 %v217
    %v785 = vunpack.c.l.b16 %v218
    %v786 = vunpack.c.h.b16 %v218
    %v787 = vunpack.c.l.b16 %v219
    %v788 = vunpack.c.h.b16 %v219
    %v789 = vunpack.c.l.b16 %v220
    %v790 = vunpack.c.h.b16 %v220
    %v791 = vunpack.c.l.b16 %v221
    %v792 = vunpack.c.h.b16 %v221
    %v793 = vunpack.c.l.b16 %v222
    %v794 = vunpack.c.h.b16 %v222
    %v795 = vunpack.c.l.b16 %v223
    %v796 = vunpack.c.h.b16 %v223
    %v797 = vunpack.c.l.b16 %v224
    %v798 = vunpack.c.h.b16 %v224
    %v799 = vunpack.c.l.b16 %v225
    %v800 = vunpack.c.h.b16 %v225
    %v801 = vunpack.c.l.b16 %v226
    %v802 = vunpack.c.h.b16 %v226
    %v803 = vunpack.c.l.b16 %v227
    %v804 = vunpack.c.h.b16 %v227
    %v805 = vunpack.c.l.b16 %v228
    %v806 = vunpack.c.h.b16 %v228
    %v807 = vunpack.c.l.b16 %v229
    %v808 = vunpack.c.h.b16 %v229
    %v809 = vunpack.c.l.b16 %v230
    %v810 = vunpack.c.h.b16 %v230
    %v811 = vunpack.c.l.b16 %v231
    %v812 = vunpack.c.h.b16 %v231
    %v813 = vunpack.c.l.b16 %v232
    %v814 = vunpack.c.h.b16 %v232
    %v815 = vunpack.c.l.b16 %v233
    %v816 = vunpack.c.h.b16 %v233
    %v817 = vunpack.c.l.b16 %v234
    %v818 = vunpack.c.h.b16 %v234
    %v819 = vunpack.c.l.b16 %v235
    %v820 = vunpack.c.h.b16 %v235
    %v821 = vunpack.c.l.b16 %v236
    %v822 = vunpack.c.h.b16 %v236
    %v823 = vunpack.c.l.b16 %v237
    %v824 = vunpack.c.h.b16 %v237
    %v825 = vunpack.c.l.b16 %v238
    %v826 = vunpack.c.h.b16 %v238
    %v827 = vunpack.c.l.b16 %v239
    %v828 = vunpack.c.h.b16 %v239
    %v829 = vunpack.c.l.b16 %v240
    %v830 = vunpack.c.h.b16 %v240
    %v831 = vunpack.c.l.b16 %v241
    %v832 = vunpack.c.h.b16 %v241
    %v833 = vunpack.c.l.b16 %v242
    %v834 = vunpack.c.h.b16 %v242
    %v835 = vunpack.c.l.b16 %v243
    %v836 = vunpack.c.h.b16 %v243
    %v837 = vunpack.c.l.b16 %v244
    %v838 = vunpack.c.h.b16 %v244
    %v839 = vunpack.c.l.b16 %v245
    %v840 = vunpack.c.h.b16 %v245
    %v841 = vunpack.c.l.b16 %v246
    %v842 = vunpack.c.h.b16 %v246
    %v843 = vunpack.c.l.b16 %v247
    %v844 = vunpack.c.h.b16 %v247
    %v845 = vunpack.c.l.b16 %v248
    %v846 = vunpack.c.h.b16 %v248
    %v847 = vpack.c.b16 %v459, %v455
    %v848 = vpack.c.b16 %v460, %v456
    %v849 = vpack.c.b16 %v461, %v457
    %v850 = vpack.c.b16 %v462, %v458
    %v851 = vpack.c.b16 %v467, %v463
    %v852 = vpack.c.b16 %v468, %v464
    %v853 = vpack.c.b16 %v469, %v465
    %v854 = vpack.c.b16 %v470, %v466
    %v855 = vpack.c.b16 %v475, %v471
    %v856 = vpack.c.b16 %v476, %v472
    %v857 = vpack.c.b16 %v477, %v473
    %v858 = vpack.c.b16 %v478, %v474
    %v859 = vpack.c.b16 %v483, %v479
    %v860 = vpack.c.b16 %v484, %v480
    %v861 = vpack.c.b16 %v485, %v481
    %v862 = vpack.c.b16 %v486, %v482
    %v863 = vpack.c.b16 %v491, %v487
    %v864 = vpack.c.b16 %v492, %v488
    %v865 = vpack.c.b16 %v493, %v489
    %v866 = vpack.c.b16 %v494, %v490
    %v867 = vpack.c.b16 %v499, %v495
    %v868 = vpack.c.b16 %v500, %v496
    %v869 = vpack.c.b16 %v501, %v497
    %v870 = vpack.c.b16 %v502, %v498
    %v871 = vpack.c.b16 %v507, %v503
    %v872 = vpack.c.b16 %v508, %v504
    %v873 = vpack.c.b16 %v509, %v505
    %v874 = vpack.c.b16 %v510, %v506
    %v875 = vpack.c.b16 %v515, %v511
    %v876 = vpack.c.b16 %v516, %v512
    %v877 = vpack.c.b16 %v517, %v513
    %v878 = vpack.c.b16 %v518, %v514
    %v879 = vpack.c.b16 %v523, %v519
    %v880 = vpack.c.b16 %v524, %v520
    %v881 = vpack.c.b16 %v525, %v521
    %v882 = vpack.c.b16 %v526, %v522
    %v883 = vpack.c.b16 %v531, %v527
    %v884 = vpack.c.b16 %v532, %v528
    %v885 = vpack.c.b16 %v533, %v529
    %v886 = vpack.c.b16 %v534, %v530
    %v887 = vpack.c.b16 %v539, %v535
    %v888 = vpack.c.b16 %v540, %v536
    %v889 = vpack.c.b16 %v541, %v537
    %v890 = vpack.c.b16 %v542, %v538
    %v891 = vpack.c.b16 %v547, %v543
    %v892 = vpack.c.b16 %v548, %v544
    %v893 = vpack.c.b16 %v549, %v545
    %v894 = vpack.c.b16 %v550, %v546
    %v895 = vpack.c.b16 %v555, %v551
    %v896 = vpack.c.b16 %v556, %v552
    %v897 = vpack.c.b16 %v557, %v553
    %v898 = vpack.c.b16 %v558, %v554
    %v899 = vpack.c.b16 %v563, %v559
    %v900 = vpack.c.b16 %v564, %v560
    %v901 = vpack.c.b16 %v565, %v561
    %v902 = vpack.c.b16 %v566, %v562
    %v903 = vpack.c.b16 %v571, %v567
    %v904 = vpack.c.b16 %v572, %v568
    %v905 = vpack.c.b16 %v573, %v569
    %v906 = vpack.c.b16 %v574, %v570
    %v907 = vpack.c.b16 %v579, %v575
    %v908 = vpack.c.b16 %v580, %v576
    %v909 = vpack.c.b16 %v581, %v577
    %v910 = vpack.c.b16 %v582, %v578
    %v911 = vpack.c.b16 %v587, %v583
    %v912 = vpack.c.b16 %v588, %v584
    %v913 = vpack.c.b16 %v589, %v585
    %v914 = vpack.c.b16 %v590, %v586
    %v915 = vpack.c.b16 %v595, %v591
    %v916 = vpack.c.b16 %v596, %v592
    %v917 = vpack.c.b16 %v597, %v593
    %v918 = vpack.c.b16 %v598, %v594
    %v919 = vpack.c.b16 %v603, %v599
    %v920 = vpack.c.b16 %v604, %v600
    %v921 = vpack.c.b16 %v605, %v601
    %v922 = vpack.c.b16 %v606, %v602
    %v923 = vpack.c.b16 %v611, %v607
    %v924 = vpack.c.b16 %v612, %v608
    %v925 = vpack.c.b16 %v613, %v609
    %v926 = vpack.c.b16 %v614, %v610
    %v927 = vpack.c.b16 %v619, %v615
    %v928 = vpack.c.b16 %v620, %v616
    %v929 = vpack.c.b16 %v621, %v617
    %v930 = vpack.c.b16 %v622, %v618
    %v931 = vpack.c.b16 %v627, %v623
    %v932 = vpack.c.b16 %v628, %v624
    %v933 = vpack.c.b16 %v629, %v625
    %v934 = vpack.c.b16 %v630, %v626
    %v935 = vpack.c.b16 %v635, %v631
    %v936 = vpack.c.b16 %v636, %v632
    %v937 = vpack.c.b16 %v637, %v633
    %v938 = vpack.c.b16 %v638, %v634
    %v939 = vpack.c.b16 %v643, %v639
    %v940 = vpack.c.b16 %v644, %v640
    %v941 = vpack.c.b16 %v645, %v641
    %v942 = vpack.c.b16 %v646, %v642
    %v943 = vpack.c.b16 %v651, %v647
    %v944 = vpack.c.b16 %v652, %v648
    %v945 = vpack.c.b16 %v653, %v649
    %v946 = vpack.c.b16 %v654, %v650
    %v947 = vpack.c.b16 %v659, %v655
    %v948 = vpack.c.b16 %v660, %v656
    %v949 = vpack.c.b16 %v661, %v657
    %v950 = vpack.c.b16 %v662, %v658
    %v951 = vpack.c.b16 %v667, %v663
    %v952 = vpack.c.b16 %v668, %v664
    %v953 = vpack.c.b16 %v669, %v665
    %v954 = vpack.c.b16 %v670, %v666
    %v955 = vpack.c.b16 %v675, %v671
    %v956 = vpack.c.b16 %v676, %v672
    %v957 = vpack.c.b16 %v677, %v673
    %v958 = vpack.c.b16 %v678, %v674
    %v959 = vpack.c.b16 %v683, %v679
    %v960 = vpack.c.b16 %v684, %v680
    %v961 = vpack.c.b16 %v685, %v681
    %v962 = vpack.c.b16 %v686, %v682
    %v963 = vpack.c.b16 %v691, %v687
    %v964 = vpack.c.b16 %v692, %v688
    %v965 = vpack.c.b16 %v693, %v689
    %v966 = vpack.c.b16 %v694, %v690
    %v967 = vpack.c.b16 %v699, %v695
    %v968 = vpack.c.b16 %v700, %v696
    %v969 = vpack.c.b16 %v701, %v697
    %v970 = vpack.c.b16 %v702, %v698
    %v971 = vpack.c.b16 %v707, %v703
    %v972 = vpack.c.b16 %v708, %v704
    %v973 = vpack.c.b16 %v709, %v705
    %v974 = vpack.c.b16 %v710, %v706
    %v975 = vpack.c.b16 %v715, %v711
    %v976 = vpack.c.b16 %v716, %v712
    %v977 = vpack.c.b16 %v717, %v713
    %v978 = vpack.c.b16 %v718, %v714
    %v979 = vpack.c.b16 %v723, %v719
    %v980 = vpack.c.b16 %v724, %v720
    %v981 = vpack.c.b16 %v725, %v721
    %v982 = vpack.c.b16 %v726, %v722
    %v983 = vpack.c.b16 %v731, %v727
    %v984 = vpack.c.b16 %v732, %v728
    %v985 = vpack.c.b16 %v733, %v729
    %v986 = vpack.c.b16 %v734, %v730
    %v987 = vpack.c.b16 %v739, %v735
    %v988 = vpack.c.b16 %v740, %v736
    %v989 = vpack.c.b16 %v741, %v737
    %v990 = vpack.c.b16 %v742, %v738
    %v991 = vpack.c.b16 %v747, %v743
    %v992 = vpack.c.b16 %v748, %v744
    %v993 = vpack.c.b16 %v749, %v745
    %v994 = vpack.c.b16 %v750, %v746
    %v995 = vpack.c.b16 %v755, %v751
    %v996 = vpack.c.b16 %v756, %v752
    %v997 = vpack.c.b16 %v757, %v753
    %v998 = vpack.c.b16 %v758, %v754
    %v999 = vpack.c.b16 %v763, %v759
    %v1000 = vpack.c.b16 %v764, %v760
    %v1001 = vpack.c.b16 %v765, %v761
    %v1002 = vpack.c.b16 %v766, %v762
    %v1003 = vpack.c.b16 %v771, %v767
    %v1004 = vpack.c.b16 %v772, %v768
    %v1005 = vpack.c.b16 %v773, %v769
    %v1006 = vpack.c.b16 %v774, %v770
    %v1007 = vpack.c.b16 %v779, %v775
    %v1008 = vpack.c.b16 %v780, %v776
    %v1009 = vpack.c.b16 %v781, %v777
    %v1010 = vpack.c.b16 %v782, %v778
    %v1011 = vpack.c.b16 %v787, %v783
    %v1012 = vpack.c.b16 %v788, %v784
    %v1013 = vpack.c.b16 %v789, %v785
    %v1014 = vpack.c.b16 %v790, %v786
    %v1015 = vpack.c.b16 %v795, %v791
    %v1016 = vpack.c.b16 %v796, %v792
    %v1017 = vpack.c.b16 %v797, %v793
    %v1018 = vpack.c.b16 %v798, %v794
    %v1019 = vpack.c.b16 %v803, %v799
    %v1020 = vpack.c.b16 %v804, %v800
    %v1021 = vpack.c.b16 %v805, %v801
    %v1022 = vpack.c.b16 %v806, %v802
    %v1023 = vpack.c.b16 %v811, %v807
    %v1024 = vpack.c.b16 %v812, %v808
    %v1025 = vpack.c.b16 %v813, %v809
    %v1026 = vpack.c.b16 %v814, %v810
    %v1027 = vpack.c.b16 %v819, %v815
    %v1028 = vpack.c.b16 %v820, %v816
    %v1029 = vpack.c.b16 %v821, %v817
    %v1030 = vpack.c.b16 %v822, %v818
    %v1031 = vpack.c.b16 %v827, %v823
    %v1032 = vpack.c.b16 %v828, %v824
    %v1033 = vpack.c.b16 %v829, %v825
    %v1034 = vpack.c.b16 %v830, %v826
    %v1035 = vpack.c.b16 %v835, %v831
    %v1036 = vpack.c.b16 %v836, %v832
    %v1037 = vpack.c.b16 %v837, %v833
    %v1038 = vpack.c.b16 %v838, %v834
    %v1039 = vpack.c.b16 %v843, %v839
    %v1040 = vpack.c.b16 %v844, %v840
    %v1041 = vpack.c.b16 %v845, %v841
    %v1042 = vpack.c.b16 %v846, %v842
    %vm1239 = vcmask 130048
    %v1241 = vsel %vm1239, %v52, 0
    %1243 = vmatpush.bf16.msra.mxu0 %v875
    %1244 = vmatpush.bf16.msra.mxu0 %v871
    %1245 = vmatpush.bf16.msra.mxu0 %v867
    %1246 = vmatpush.bf16.msra.mxu0 %v863
    %1247 = vmatpush.bf16.msra.mxu0 %v859
    %1248 = vmatpush.bf16.msra.mxu0 %v855
    %1249 = vmatpush.bf16.msra.mxu0 %v851
    %1250 = vmatpush.bf16.msra.mxu0 %v847
    %1251 = vmatmul.bf16.gmra.mxu0 %v46
    %v1252 = vpop.f32.mrf.mxu0
    %v1253 = vadd.f32 %v251, %v1252
    %v1254 = vpop.f32.mrf.mxu0
    %1255 = vdwg.mxu0
    %1256 = vmatpush.bf16.msra.mxu0 %v907
    %1257 = vmatpush.bf16.msra.mxu0 %v903
    %1258 = vmatpush.bf16.msra.mxu0 %v899
    %1259 = vmatpush.bf16.msra.mxu0 %v895
    %1260 = vmatpush.bf16.msra.mxu0 %v891
    %1261 = vmatpush.bf16.msra.mxu0 %v887
    %1262 = vmatpush.bf16.msra.mxu0 %v883
    %1263 = vmatpush.bf16.msra.mxu0 %v879
    %1264 = vmatmul.bf16.gmra.mxu0 %v47
    %v1265 = vpop.f32.mrf.mxu0
    %v1266 = vadd.f32 %v1253, %v1265
    %v1267 = vpop.f32.mrf.mxu0
    %1268 = vdwg.mxu0
    %1269 = vmatpush.bf16.msra.mxu0 %v939
    %1270 = vmatpush.bf16.msra.mxu0 %v935
    %1271 = vmatpush.bf16.msra.mxu0 %v931
    %1272 = vmatpush.bf16.msra.mxu0 %v927
    %1273 = vmatpush.bf16.msra.mxu0 %v923
    %1274 = vmatpush.bf16.msra.mxu0 %v919
    %1275 = vmatpush.bf16.msra.mxu0 %v915
    %1276 = vmatpush.bf16.msra.mxu0 %v911
    %1277 = vmatmul.bf16.gmra.mxu0 %v48
    %v1278 = vpop.f32.mrf.mxu0
    %v1279 = vadd.f32 %v1266, %v1278
    %v1280 = vpop.f32.mrf.mxu0
    %1281 = vdwg.mxu0
    %1282 = vmatpush.bf16.msra.mxu0 %v971
    %1283 = vmatpush.bf16.msra.mxu0 %v967
    %1284 = vmatpush.bf16.msra.mxu0 %v963
    %1285 = vmatpush.bf16.msra.mxu0 %v959
    %1286 = vmatpush.bf16.msra.mxu0 %v955
    %1287 = vmatpush.bf16.msra.mxu0 %v951
    %1288 = vmatpush.bf16.msra.mxu0 %v947
    %1289 = vmatpush.bf16.msra.mxu0 %v943
    %1290 = vmatmul.bf16.gmra.mxu0 %v49
    %v1291 = vpop.f32.mrf.mxu0
    %v1292 = vadd.f32 %v1279, %v1291
    %v1293 = vpop.f32.mrf.mxu0
    %1294 = vdwg.mxu0
    %1295 = vmatpush.bf16.msra.mxu0 %v1003
    %1296 = vmatpush.bf16.msra.mxu0 %v999
    %1297 = vmatpush.bf16.msra.mxu0 %v995
    %1298 = vmatpush.bf16.msra.mxu0 %v991
    %1299 = vmatpush.bf16.msra.mxu0 %v987
    %1300 = vmatpush.bf16.msra.mxu0 %v983
    %1301 = vmatpush.bf16.msra.mxu0 %v979
    %1302 = vmatpush.bf16.msra.mxu0 %v975
    %1303 = vmatmul.bf16.gmra.mxu0 %v50
    %v1304 = vpop.f32.mrf.mxu0
    %v1305 = vadd.f32 %v1292, %v1304
    %v1306 = vpop.f32.mrf.mxu0
    %1307 = vdwg.mxu0
    %1308 = vmatpush.bf16.msra.mxu0 %v1035
    %1309 = vmatpush.bf16.msra.mxu0 %v1031
    %1310 = vmatpush.bf16.msra.mxu0 %v1027
    %1311 = vmatpush.bf16.msra.mxu0 %v1023
    %1312 = vmatpush.bf16.msra.mxu0 %v1019
    %1313 = vmatpush.bf16.msra.mxu0 %v1015
    %1314 = vmatpush.bf16.msra.mxu0 %v1011
    %1315 = vmatpush.bf16.msra.mxu0 %v1007
    %1316 = vmatmul.bf16.gmra.mxu0 %v51
    %v1317 = vpop.f32.mrf.mxu0
    %v1318 = vadd.f32 %v1305, %v1317
    %v1319 = vpop.f32.mrf.mxu0
    %1320 = vdwg.mxu0
    %1321 = vmatpush.bf16.msra.mxu0 0
    %1322 = vmatpush.bf16.msra.mxu0 0
    %1323 = vmatpush.bf16.msra.mxu0 0
    %1324 = vmatpush.bf16.msra.mxu0 0
    %1325 = vmatpush.bf16.msra.mxu0 0
    %1326 = vmatpush.bf16.msra.mxu0 0
    %1327 = vmatpush.bf16.msra.mxu0 0
    %1328 = vmatpush.bf16.msra.mxu0 %v1039
    %1329 = vmatmul.bf16.gmra.mxu0 %v1241
    %v1330 = vpop.f32.mrf.mxu0
    %v1331 = vadd.f32 %v1318, %v1330
    %v1332 = vpop.f32.mrf.mxu0
    %1333 = vdwg.mxu0
    %1334 = vmatpush.bf16.msra.mxu0 %v876
    %1335 = vmatpush.bf16.msra.mxu0 %v872
    %1336 = vmatpush.bf16.msra.mxu0 %v868
    %1337 = vmatpush.bf16.msra.mxu0 %v864
    %1338 = vmatpush.bf16.msra.mxu0 %v860
    %1339 = vmatpush.bf16.msra.mxu0 %v856
    %1340 = vmatpush.bf16.msra.mxu0 %v852
    %1341 = vmatpush.bf16.msra.mxu0 %v848
    %1342 = vmatmul.bf16.gmra.mxu0 %v46
    %v1343 = vpop.f32.mrf.mxu0
    %v1344 = vadd.f32 %v252, %v1343
    %v1345 = vpop.f32.mrf.mxu0
    %1346 = vdwg.mxu0
    %1347 = vmatpush.bf16.msra.mxu0 %v908
    %1348 = vmatpush.bf16.msra.mxu0 %v904
    %1349 = vmatpush.bf16.msra.mxu0 %v900
    %1350 = vmatpush.bf16.msra.mxu0 %v896
    %1351 = vmatpush.bf16.msra.mxu0 %v892
    %1352 = vmatpush.bf16.msra.mxu0 %v888
    %1353 = vmatpush.bf16.msra.mxu0 %v884
    %1354 = vmatpush.bf16.msra.mxu0 %v880
    %1355 = vmatmul.bf16.gmra.mxu0 %v47
    %v1356 = vpop.f32.mrf.mxu0
    %v1357 = vadd.f32 %v1344, %v1356
    %v1358 = vpop.f32.mrf.mxu0
    %1359 = vdwg.mxu0
    %1360 = vmatpush.bf16.msra.mxu0 %v940
    %1361 = vmatpush.bf16.msra.mxu0 %v936
    %1362 = vmatpush.bf16.msra.mxu0 %v932
    %1363 = vmatpush.bf16.msra.mxu0 %v928
    %1364 = vmatpush.bf16.msra.mxu0 %v924
    %1365 = vmatpush.bf16.msra.mxu0 %v920
    %1366 = vmatpush.bf16.msra.mxu0 %v916
    %1367 = vmatpush.bf16.msra.mxu0 %v912
    %1368 = vmatmul.bf16.gmra.mxu0 %v48
    %v1369 = vpop.f32.mrf.mxu0
    %v1370 = vadd.f32 %v1357, %v1369
    %v1371 = vpop.f32.mrf.mxu0
    %1372 = vdwg.mxu0
    %1373 = vmatpush.bf16.msra.mxu0 %v972
    %1374 = vmatpush.bf16.msra.mxu0 %v968
    %1375 = vmatpush.bf16.msra.mxu0 %v964
    %1376 = vmatpush.bf16.msra.mxu0 %v960
    %1377 = vmatpush.bf16.msra.mxu0 %v956
    %1378 = vmatpush.bf16.msra.mxu0 %v952
    %1379 = vmatpush.bf16.msra.mxu0 %v948
    %1380 = vmatpush.bf16.msra.mxu0 %v944
    %1381 = vmatmul.bf16.gmra.mxu0 %v49
    %v1382 = vpop.f32.mrf.mxu0
    %v1383 = vadd.f32 %v1370, %v1382
    %v1384 = vpop.f32.mrf.mxu0
    %1385 = vdwg.mxu0
    %1386 = vmatpush.bf16.msra.mxu0 %v1004
    %1387 = vmatpush.bf16.msra.mxu0 %v1000
    %1388 = vmatpush.bf16.msra.mxu0 %v996
    %1389 = vmatpush.bf16.msra.mxu0 %v992
    %1390 = vmatpush.bf16.msra.mxu0 %v988
    %1391 = vmatpush.bf16.msra.mxu0 %v984
    %1392 = vmatpush.bf16.msra.mxu0 %v980
    %1393 = vmatpush.bf16.msra.mxu0 %v976
    %1394 = vmatmul.bf16.gmra.mxu0 %v50
    %v1395 = vpop.f32.mrf.mxu0
    %v1396 = vadd.f32 %v1383, %v1395
    %v1397 = vpop.f32.mrf.mxu0
    %1398 = vdwg.mxu0
    %1399 = vmatpush.bf16.msra.mxu0 %v1036
    %1400 = vmatpush.bf16.msra.mxu0 %v1032
    %1401 = vmatpush.bf16.msra.mxu0 %v1028
    %1402 = vmatpush.bf16.msra.mxu0 %v1024
    %1403 = vmatpush.bf16.msra.mxu0 %v1020
    %1404 = vmatpush.bf16.msra.mxu0 %v1016
    %1405 = vmatpush.bf16.msra.mxu0 %v1012
    %1406 = vmatpush.bf16.msra.mxu0 %v1008
    %1407 = vmatmul.bf16.gmra.mxu0 %v51
    %v1408 = vpop.f32.mrf.mxu0
    %v1409 = vadd.f32 %v1396, %v1408
    %v1410 = vpop.f32.mrf.mxu0
    %1411 = vdwg.mxu0
    %1412 = vmatpush.bf16.msra.mxu0 0
    %1413 = vmatpush.bf16.msra.mxu0 0
    %1414 = vmatpush.bf16.msra.mxu0 0
    %1415 = vmatpush.bf16.msra.mxu0 0
    %1416 = vmatpush.bf16.msra.mxu0 0
    %1417 = vmatpush.bf16.msra.mxu0 0
    %1418 = vmatpush.bf16.msra.mxu0 0
    %1419 = vmatpush.bf16.msra.mxu0 %v1040
    %1420 = vmatmul.bf16.gmra.mxu0 %v1241
    %v1421 = vpop.f32.mrf.mxu0
    %v1422 = vadd.f32 %v1409, %v1421
    %v1423 = vpop.f32.mrf.mxu0
    %1424 = vdwg.mxu0
    %1425 = vmatpush.bf16.msra.mxu0 %v877
    %1426 = vmatpush.bf16.msra.mxu0 %v873
    %1427 = vmatpush.bf16.msra.mxu0 %v869
    %1428 = vmatpush.bf16.msra.mxu0 %v865
    %1429 = vmatpush.bf16.msra.mxu0 %v861
    %1430 = vmatpush.bf16.msra.mxu0 %v857
    %1431 = vmatpush.bf16.msra.mxu0 %v853
    %1432 = vmatpush.bf16.msra.mxu0 %v849
    %1433 = vmatmul.bf16.gmra.mxu0 %v46
    %v1434 = vpop.f32.mrf.mxu0
    %v1435 = vadd.f32 %v253, %v1434
    %v1436 = vpop.f32.mrf.mxu0
    %1437 = vdwg.mxu0
    %1438 = vmatpush.bf16.msra.mxu0 %v909
    %1439 = vmatpush.bf16.msra.mxu0 %v905
    %1440 = vmatpush.bf16.msra.mxu0 %v901
    %1441 = vmatpush.bf16.msra.mxu0 %v897
    %1442 = vmatpush.bf16.msra.mxu0 %v893
    %1443 = vmatpush.bf16.msra.mxu0 %v889
    %1444 = vmatpush.bf16.msra.mxu0 %v885
    %1445 = vmatpush.bf16.msra.mxu0 %v881
    %1446 = vmatmul.bf16.gmra.mxu0 %v47
    %v1447 = vpop.f32.mrf.mxu0
    %v1448 = vadd.f32 %v1435, %v1447
    %v1449 = vpop.f32.mrf.mxu0
    %1450 = vdwg.mxu0
    %1451 = vmatpush.bf16.msra.mxu0 %v941
    %1452 = vmatpush.bf16.msra.mxu0 %v937
    %1453 = vmatpush.bf16.msra.mxu0 %v933
    %1454 = vmatpush.bf16.msra.mxu0 %v929
    %1455 = vmatpush.bf16.msra.mxu0 %v925
    %1456 = vmatpush.bf16.msra.mxu0 %v921
    %1457 = vmatpush.bf16.msra.mxu0 %v917
    %1458 = vmatpush.bf16.msra.mxu0 %v913
    %1459 = vmatmul.bf16.gmra.mxu0 %v48
    %v1460 = vpop.f32.mrf.mxu0
    %v1461 = vadd.f32 %v1448, %v1460
    %v1462 = vpop.f32.mrf.mxu0
    %1463 = vdwg.mxu0
    %1464 = vmatpush.bf16.msra.mxu0 %v973
    %1465 = vmatpush.bf16.msra.mxu0 %v969
    %1466 = vmatpush.bf16.msra.mxu0 %v965
    %1467 = vmatpush.bf16.msra.mxu0 %v961
    %1468 = vmatpush.bf16.msra.mxu0 %v957
    %1469 = vmatpush.bf16.msra.mxu0 %v953
    %1470 = vmatpush.bf16.msra.mxu0 %v949
    %1471 = vmatpush.bf16.msra.mxu0 %v945
    %1472 = vmatmul.bf16.gmra.mxu0 %v49
    %v1473 = vpop.f32.mrf.mxu0
    %v1474 = vadd.f32 %v1461, %v1473
    %v1475 = vpop.f32.mrf.mxu0
    %1476 = vdwg.mxu0
    %1477 = vmatpush.bf16.msra.mxu0 %v1005
    %1478 = vmatpush.bf16.msra.mxu0 %v1001
    %1479 = vmatpush.bf16.msra.mxu0 %v997
    %1480 = vmatpush.bf16.msra.mxu0 %v993
    %1481 = vmatpush.bf16.msra.mxu0 %v989
    %1482 = vmatpush.bf16.msra.mxu0 %v985
    %1483 = vmatpush.bf16.msra.mxu0 %v981
    %1484 = vmatpush.bf16.msra.mxu0 %v977
    %1485 = vmatmul.bf16.gmra.mxu0 %v50
    %v1486 = vpop.f32.mrf.mxu0
    %v1487 = vadd.f32 %v1474, %v1486
    %v1488 = vpop.f32.mrf.mxu0
    %1489 = vdwg.mxu0
    %1490 = vmatpush.bf16.msra.mxu0 %v1037
    %1491 = vmatpush.bf16.msra.mxu0 %v1033
    %1492 = vmatpush.bf16.msra.mxu0 %v1029
    %1493 = vmatpush.bf16.msra.mxu0 %v1025
    %1494 = vmatpush.bf16.msra.mxu0 %v1021
    %1495 = vmatpush.bf16.msra.mxu0 %v1017
    %1496 = vmatpush.bf16.msra.mxu0 %v1013
    %1497 = vmatpush.bf16.msra.mxu0 %v1009
    %1498 = vmatmul.bf16.gmra.mxu0 %v51
    %v1499 = vpop.f32.mrf.mxu0
    %v1500 = vadd.f32 %v1487, %v1499
    %v1501 = vpop.f32.mrf.mxu0
    %1502 = vdwg.mxu0
    %1503 = vmatpush.bf16.msra.mxu0 0
    %1504 = vmatpush.bf16.msra.mxu0 0
    %1505 = vmatpush.bf16.msra.mxu0 0
    %1506 = vmatpush.bf16.msra.mxu0 0
    %1507 = vmatpush.bf16.msra.mxu0 0
    %1508 = vmatpush.bf16.msra.mxu0 0
    %1509 = vmatpush.bf16.msra.mxu0 0
    %1510 = vmatpush.bf16.msra.mxu0 %v1041
    %1511 = vmatmul.bf16.gmra.mxu0 %v1241
    %v1512 = vpop.f32.mrf.mxu0
    %v1513 = vadd.f32 %v1500, %v1512
    %v1514 = vpop.f32.mrf.mxu0
    %1515 = vdwg.mxu0
    %1516 = vmatpush.bf16.msra.mxu0 %v878
    %1517 = vmatpush.bf16.msra.mxu0 %v874
    %1518 = vmatpush.bf16.msra.mxu0 %v870
    %1519 = vmatpush.bf16.msra.mxu0 %v866
    %1520 = vmatpush.bf16.msra.mxu0 %v862
    %1521 = vmatpush.bf16.msra.mxu0 %v858
    %1522 = vmatpush.bf16.msra.mxu0 %v854
    %1523 = vmatpush.bf16.msra.mxu0 %v850
    %1524 = vmatmul.bf16.gmra.mxu0 %v46
    %v1525 = vpop.f32.mrf.mxu0
    %v1526 = vadd.f32 %v254, %v1525
    %v1527 = vpop.f32.mrf.mxu0
    %1528 = vdwg.mxu0
    %1529 = vmatpush.bf16.msra.mxu0 %v910
    %1530 = vmatpush.bf16.msra.mxu0 %v906
    %1531 = vmatpush.bf16.msra.mxu0 %v902
    %1532 = vmatpush.bf16.msra.mxu0 %v898
    %1533 = vmatpush.bf16.msra.mxu0 %v894
    %1534 = vmatpush.bf16.msra.mxu0 %v890
    %1535 = vmatpush.bf16.msra.mxu0 %v886
    %1536 = vmatpush.bf16.msra.mxu0 %v882
    %1537 = vmatmul.bf16.gmra.mxu0 %v47
    %v1538 = vpop.f32.mrf.mxu0
    %v1539 = vadd.f32 %v1526, %v1538
    %v1540 = vpop.f32.mrf.mxu0
    %1541 = vdwg.mxu0
    %1542 = vmatpush.bf16.msra.mxu0 %v942
    %1543 = vmatpush.bf16.msra.mxu0 %v938
    %1544 = vmatpush.bf16.msra.mxu0 %v934
    %1545 = vmatpush.bf16.msra.mxu0 %v930
    %1546 = vmatpush.bf16.msra.mxu0 %v926
    %1547 = vmatpush.bf16.msra.mxu0 %v922
    %1548 = vmatpush.bf16.msra.mxu0 %v918
    %1549 = vmatpush.bf16.msra.mxu0 %v914
    %1550 = vmatmul.bf16.gmra.mxu0 %v48
    %v1551 = vpop.f32.mrf.mxu0
    %v1552 = vadd.f32 %v1539, %v1551
    %v1553 = vpop.f32.mrf.mxu0
    %1554 = vdwg.mxu0
    %1555 = vmatpush.bf16.msra.mxu0 %v974
    %1556 = vmatpush.bf16.msra.mxu0 %v970
    %1557 = vmatpush.bf16.msra.mxu0 %v966
    %1558 = vmatpush.bf16.msra.mxu0 %v962
    %1559 = vmatpush.bf16.msra.mxu0 %v958
    %1560 = vmatpush.bf16.msra.mxu0 %v954
    %1561 = vmatpush.bf16.msra.mxu0 %v950
    %1562 = vmatpush.bf16.msra.mxu0 %v946
    %1563 = vmatmul.bf16.gmra.mxu0 %v49
    %v1564 = vpop.f32.mrf.mxu0
    %v1565 = vadd.f32 %v1552, %v1564
    %v1566 = vpop.f32.mrf.mxu0
    %1567 = vdwg.mxu0
    %1568 = vmatpush.bf16.msra.mxu0 %v1006
    %1569 = vmatpush.bf16.msra.mxu0 %v1002
    %1570 = vmatpush.bf16.msra.mxu0 %v998
    %1571 = vmatpush.bf16.msra.mxu0 %v994
    %1572 = vmatpush.bf16.msra.mxu0 %v990
    %1573 = vmatpush.bf16.msra.mxu0 %v986
    %1574 = vmatpush.bf16.msra.mxu0 %v982
    %1575 = vmatpush.bf16.msra.mxu0 %v978
    %1576 = vmatmul.bf16.gmra.mxu0 %v50
    %v1577 = vpop.f32.mrf.mxu0
    %v1578 = vadd.f32 %v1565, %v1577
    %v1579 = vpop.f32.mrf.mxu0
    %1580 = vdwg.mxu0
    %1581 = vmatpush.bf16.msra.mxu0 %v1038
    %1582 = vmatpush.bf16.msra.mxu0 %v1034
    %1583 = vmatpush.bf16.msra.mxu0 %v1030
    %1584 = vmatpush.bf16.msra.mxu0 %v1026
    %1585 = vmatpush.bf16.msra.mxu0 %v1022
    %1586 = vmatpush.bf16.msra.mxu0 %v1018
    %1587 = vmatpush.bf16.msra.mxu0 %v1014
    %1588 = vmatpush.bf16.msra.mxu0 %v1010
    %1589 = vmatmul.bf16.gmra.mxu0 %v51
    %v1590 = vpop.f32.mrf.mxu0
    %v1591 = vadd.f32 %v1578, %v1590
    %v1592 = vpop.f32.mrf.mxu0
    %1593 = vdwg.mxu0
    %1594 = vmatpush.bf16.msra.mxu0 0
    %1595 = vmatpush.bf16.msra.mxu0 0
    %1596 = vmatpush.bf16.msra.mxu0 0
    %1597 = vmatpush.bf16.msra.mxu0 0
    %1598 = vmatpush.bf16.msra.mxu0 0
    %1599 = vmatpush.bf16.msra.mxu0 0
    %1600 = vmatpush.bf16.msra.mxu0 0
    %1601 = vmatpush.bf16.msra.mxu0 %v1042
    %1602 = vmatmul.bf16.gmra.mxu0 %v1241
    %v1603 = vpop.f32.mrf.mxu0
    %v1604 = vadd.f32 %v1591, %v1603
    %v1605 = vpop.f32.mrf.mxu0
    %1606 = vdwg.mxu0
    %v1607 = vmax.f32 %v1331, 0.0
    %v1608 = vmax.f32 %v1422, 0.0
    %v1609 = vmax.f32 %v1513, 0.0
    %v1610 = vmax.f32 %v1604, 0.0
    %v1611 = vpack.c.bf16 %v1607, %v1607
    %v1612 = vpack.c.bf16 %v1608, %v1608
    %v1613 = vpack.c.bf16 %v1609, %v1609
    %v1614 = vpack.c.bf16 %v1610, %v1610
    %v1615 = vld [vmem:[%s4] sm:$0xf]
    %v1616 = vld [vmem:[%s4 + $0x4] sm:$0xf]
    %v1617 = vld [vmem:[%s4 + $0x8] sm:$0xf]
    %v1618 = vld [vmem:[%s4 + $0xc] sm:$0xf]
    %v1619 = vld [vmem:[%s4 + $0x10] sm:$0xf]
    %v1620 = vld [vmem:[%s4 + $0x14] sm:$0xf]
    %v1621 = vld [vmem:[%s4 + $0x18] sm:$0xf]
    %v1622 = vld [vmem:[%s4 + $0x1c] sm:$0xf]
    %v1623 = vld [vmem:[%s4 + $0x20] sm:$0xf]
    %v1624 = vld [vmem:[%s4 + $0x24] sm:$0xf]
    %v1625 = vld [vmem:[%s4 + $0x28] sm:$0xf]
    %v1626 = vld [vmem:[%s4 + $0x2c] sm:$0xf]
    %v1627 = vld [vmem:[%s4 + $0x30] sm:$0xf]
    %v1628 = vld [vmem:[%s4 + $0x34] sm:$0xf]
    %v1629 = vld [vmem:[%s4 + $0x38] sm:$0xf]
    %v1630 = vld [vmem:[%s4 + $0x3c] sm:$0xf]
    %v1631 = vld [vmem:[%s4 + $0x40] sm:$0xf]
    %v1632 = vld [vmem:[%s4 + $0x44] sm:$0xf]
    %v1633 = vld [vmem:[%s4 + $0x48] sm:$0xf]
    %v1634 = vld [vmem:[%s4 + $0x4c] sm:$0xf]
    %v1635 = vld [vmem:[%s4 + $0x50] sm:$0xf]
    %v1636 = vld [vmem:[%s4 + $0x54] sm:$0xf]
    %v1637 = vld [vmem:[%s4 + $0x58] sm:$0xf]
    %v1638 = vld [vmem:[%s4 + $0x5c] sm:$0xf]
    %v1639 = vld [vmem:[%s4 + $0x60] sm:$0xf]
    %v1640 = vld [vmem:[%s4 + $0x64] sm:$0xf]
    %v1641 = vld [vmem:[%s4 + $0x68] sm:$0xf]
    %v1642 = vld [vmem:[%s4 + $0x6c] sm:$0xf]
    %v1643 = vld [vmem:[%s4 + $0x70] sm:$0xf]
    %v1644 = vld [vmem:[%s4 + $0x74] sm:$0xf]
    %v1645 = vld [vmem:[%s4 + $0x78] sm:$0xf]
    %v1646 = vld [vmem:[%s4 + $0x7c] sm:$0xf]
    %v1647 = vld [vmem:[%s4 + $0x80] sm:$0xf]
    %v1648 = vld [vmem:[%s4 + $0x84] sm:$0xf]
    %v1649 = vld [vmem:[%s4 + $0x88] sm:$0xf]
    %v1650 = vld [vmem:[%s4 + $0x8c] sm:$0xf]
    %v1651 = vld [vmem:[%s4 + $0x90] sm:$0xf]
    %v1652 = vld [vmem:[%s4 + $0x94] sm:$0xf]
    %v1653 = vld [vmem:[%s4 + $0x98] sm:$0xf]
    %v1654 = vld [vmem:[%s4 + $0x9c] sm:$0xf]
    %v1655 = vld [vmem:[%s4 + $0xa0] sm:$0xf]
    %v1656 = vld [vmem:[%s4 + $0xa4] sm:$0xf]
    %v1657 = vld [vmem:[%s4 + $0xa8] sm:$0xf]
    %v1658 = vld [vmem:[%s4 + $0xac] sm:$0xf]
    %v1659 = vld [vmem:[%s4 + $0xb0] sm:$0xf]
    %v1660 = vld [vmem:[%s4 + $0xb4] sm:$0xf]
    %v1661 = vld [vmem:[%s4 + $0xb8] sm:$0xf]
    %v1662 = vld [vmem:[%s4 + $0xbc] sm:$0xf]
    %v1663 = vld [vmem:[%s4 + $0xc0] sm:$0xf]
    %v1664 = vld [vmem:[%s4 + $0xc4] sm:$0xf]
    %v1665 = vld [vmem:[%s4 + $0xc8] sm:$0xf]
    %v1666 = vld [vmem:[%s4 + $0xcc] sm:$0xf]
    %v1667 = vld [vmem:[%s4 + $0xd0] sm:$0xf]
    %v1668 = vld [vmem:[%s4 + $0xd4] sm:$0xf]
    %v1669 = vld [vmem:[%s4 + $0xd8] sm:$0xf]
    %v1670 = vld [vmem:[%s4 + $0xdc] sm:$0xf]
    %v1671 = vld [vmem:[%s4 + $0xe0] sm:$0xf]
    %v1672 = vld [vmem:[%s4 + $0xe4] sm:$0xf]
    %v1673 = vld [vmem:[%s4 + $0xe8] sm:$0xf]
    %v1674 = vld [vmem:[%s4 + $0xec] sm:$0xf]
    %v1675 = vld [vmem:[%s4 + $0xf0] sm:$0xf]
    %v1676 = vld [vmem:[%s4 + $0xf4] sm:$0xf]
    %v1677 = vld [vmem:[%s4 + $0xf8] sm:$0xf]
    %v1678 = vld [vmem:[%s4 + $0xfc] sm:$0xf]
    %v1679 = vld [vmem:[%s5] sm:$0x1]
    %v1681 = vperm.slane %v1679, 0
    %v1747 = vunpack.c.l.b16 %v1615
    %v1748 = vunpack.c.l.b16 %v1616
    %v1749 = vunpack.c.l.b16 %v1617
    %v1750 = vunpack.c.l.b16 %v1618
    %v1751 = vunpack.c.l.b16 %v1619
    %v1752 = vunpack.c.l.b16 %v1620
    %v1753 = vunpack.c.l.b16 %v1621
    %v1754 = vunpack.c.l.b16 %v1622
    %v1755 = vunpack.c.l.b16 %v1623
    %v1756 = vunpack.c.l.b16 %v1624
    %v1757 = vunpack.c.l.b16 %v1625
    %v1758 = vunpack.c.l.b16 %v1626
    %v1759 = vunpack.c.l.b16 %v1627
    %v1760 = vunpack.c.l.b16 %v1628
    %v1761 = vunpack.c.l.b16 %v1629
    %v1762 = vunpack.c.l.b16 %v1630
    %v1763 = vunpack.c.l.b16 %v1631
    %v1764 = vunpack.c.l.b16 %v1632
    %v1765 = vunpack.c.l.b16 %v1633
    %v1766 = vunpack.c.l.b16 %v1634
    %v1767 = vunpack.c.l.b16 %v1635
    %v1768 = vunpack.c.l.b16 %v1636
    %v1769 = vunpack.c.l.b16 %v1637
    %v1770 = vunpack.c.l.b16 %v1638
    %v1771 = vunpack.c.l.b16 %v1639
    %v1772 = vunpack.c.l.b16 %v1640
    %v1773 = vunpack.c.l.b16 %v1641
    %v1774 = vunpack.c.l.b16 %v1642
    %v1775 = vunpack.c.l.b16 %v1643
    %v1776 = vunpack.c.l.b16 %v1644
    %v1777 = vunpack.c.l.b16 %v1645
    %v1778 = vunpack.c.l.b16 %v1646
    %v1779 = vunpack.c.l.b16 %v1647
    %v1780 = vunpack.c.l.b16 %v1648
    %v1781 = vunpack.c.l.b16 %v1649
    %v1782 = vunpack.c.l.b16 %v1650
    %v1783 = vunpack.c.l.b16 %v1651
    %v1784 = vunpack.c.l.b16 %v1652
    %v1785 = vunpack.c.l.b16 %v1653
    %v1786 = vunpack.c.l.b16 %v1654
    %v1787 = vunpack.c.l.b16 %v1655
    %v1788 = vunpack.c.l.b16 %v1656
    %v1789 = vunpack.c.l.b16 %v1657
    %v1790 = vunpack.c.l.b16 %v1658
    %v1791 = vunpack.c.l.b16 %v1659
    %v1792 = vunpack.c.l.b16 %v1660
    %v1793 = vunpack.c.l.b16 %v1661
    %v1794 = vunpack.c.l.b16 %v1662
    %v1795 = vunpack.c.l.b16 %v1663
    %v1796 = vunpack.c.l.b16 %v1664
    %v1797 = vunpack.c.l.b16 %v1665
    %v1798 = vunpack.c.l.b16 %v1666
    %v1799 = vunpack.c.l.b16 %v1667
    %v1800 = vunpack.c.l.b16 %v1668
    %v1801 = vunpack.c.l.b16 %v1669
    %v1802 = vunpack.c.l.b16 %v1670
    %v1803 = vunpack.c.l.b16 %v1671
    %v1804 = vunpack.c.l.b16 %v1672
    %v1805 = vunpack.c.l.b16 %v1673
    %v1806 = vunpack.c.l.b16 %v1674
    %v1807 = vunpack.c.l.b16 %v1675
    %v1808 = vunpack.c.l.b16 %v1676
    %v1809 = vunpack.c.l.b16 %v1677
    %v1810 = vunpack.c.l.b16 %v1678
    %v1811 = vpack.c.b16 %v1748, %v1747
    %v1812 = vpack.c.b16 %v1750, %v1749
    %v1813 = vpack.c.b16 %v1752, %v1751
    %v1814 = vpack.c.b16 %v1754, %v1753
    %v1815 = vpack.c.b16 %v1756, %v1755
    %v1816 = vpack.c.b16 %v1758, %v1757
    %v1817 = vpack.c.b16 %v1760, %v1759
    %v1818 = vpack.c.b16 %v1762, %v1761
    %v1819 = vpack.c.b16 %v1764, %v1763
    %v1820 = vpack.c.b16 %v1766, %v1765
    %v1821 = vpack.c.b16 %v1768, %v1767
    %v1822 = vpack.c.b16 %v1770, %v1769
    %v1823 = vpack.c.b16 %v1772, %v1771
    %v1824 = vpack.c.b16 %v1774, %v1773
    %v1825 = vpack.c.b16 %v1776, %v1775
    %v1826 = vpack.c.b16 %v1778, %v1777
    %v1827 = vpack.c.b16 %v1780, %v1779
    %v1828 = vpack.c.b16 %v1782, %v1781
    %v1829 = vpack.c.b16 %v1784, %v1783
    %v1830 = vpack.c.b16 %v1786, %v1785
    %v1831 = vpack.c.b16 %v1788, %v1787
    %v1832 = vpack.c.b16 %v1790, %v1789
    %v1833 = vpack.c.b16 %v1792, %v1791
    %v1834 = vpack.c.b16 %v1794, %v1793
    %v1835 = vpack.c.b16 %v1796, %v1795
    %v1836 = vpack.c.b16 %v1798, %v1797
    %v1837 = vpack.c.b16 %v1800, %v1799
    %v1838 = vpack.c.b16 %v1802, %v1801
    %v1839 = vpack.c.b16 %v1804, %v1803
    %v1840 = vpack.c.b16 %v1806, %v1805
    %v1841 = vpack.c.b16 %v1808, %v1807
    %v1842 = vpack.c.b16 %v1810, %v1809
    %1875 = vmatpush.bf16.msra.mxu0 %v1818
    %1876 = vmatpush.bf16.msra.mxu0 %v1817
    %1877 = vmatpush.bf16.msra.mxu0 %v1816
    %1878 = vmatpush.bf16.msra.mxu0 %v1815
    %1879 = vmatpush.bf16.msra.mxu0 %v1814
    %1880 = vmatpush.bf16.msra.mxu0 %v1813
    %1881 = vmatpush.bf16.msra.mxu0 %v1812
    %1882 = vmatpush.bf16.msra.mxu0 %v1811
    %1883 = vmatmul.bf16.gmra.mxu0 %v1611
    %v1884 = vpop.f32.mrf.mxu0
    %v1885 = vadd.f32 %v1681, %v1884
    %v1886 = vpop.f32.mrf.mxu0
    %1887 = vdwg.mxu0
    %1888 = vmatpush.bf16.msra.mxu0 %v1826
    %1889 = vmatpush.bf16.msra.mxu0 %v1825
    %1890 = vmatpush.bf16.msra.mxu0 %v1824
    %1891 = vmatpush.bf16.msra.mxu0 %v1823
    %1892 = vmatpush.bf16.msra.mxu0 %v1822
    %1893 = vmatpush.bf16.msra.mxu0 %v1821
    %1894 = vmatpush.bf16.msra.mxu0 %v1820
    %1895 = vmatpush.bf16.msra.mxu0 %v1819
    %1896 = vmatmul.bf16.gmra.mxu0 %v1612
    %v1897 = vpop.f32.mrf.mxu0
    %v1898 = vadd.f32 %v1885, %v1897
    %v1899 = vpop.f32.mrf.mxu0
    %1900 = vdwg.mxu0
    %1901 = vmatpush.bf16.msra.mxu0 %v1834
    %1902 = vmatpush.bf16.msra.mxu0 %v1833
    %1903 = vmatpush.bf16.msra.mxu0 %v1832
    %1904 = vmatpush.bf16.msra.mxu0 %v1831
    %1905 = vmatpush.bf16.msra.mxu0 %v1830
    %1906 = vmatpush.bf16.msra.mxu0 %v1829
    %1907 = vmatpush.bf16.msra.mxu0 %v1828
    %1908 = vmatpush.bf16.msra.mxu0 %v1827
    %1909 = vmatmul.bf16.gmra.mxu0 %v1613
    %v1910 = vpop.f32.mrf.mxu0
    %v1911 = vadd.f32 %v1898, %v1910
    %v1912 = vpop.f32.mrf.mxu0
    %1913 = vdwg.mxu0
    %1914 = vmatpush.bf16.msra.mxu0 %v1842
    %1915 = vmatpush.bf16.msra.mxu0 %v1841
    %1916 = vmatpush.bf16.msra.mxu0 %v1840
    %1917 = vmatpush.bf16.msra.mxu0 %v1839
    %1918 = vmatpush.bf16.msra.mxu0 %v1838
    %1919 = vmatpush.bf16.msra.mxu0 %v1837
    %1920 = vmatpush.bf16.msra.mxu0 %v1836
    %1921 = vmatpush.bf16.msra.mxu0 %v1835
    %1922 = vmatmul.bf16.gmra.mxu0 %v1614
    %v1923 = vpop.f32.mrf.mxu0
    %v1924 = vadd.f32 %v1911, %v1923
    %v1925 = vpop.f32.mrf.mxu0
    %1926 = vdwg.mxu0
    %1927 = vst [vmem:[%s11] sm:$0xff] %v1924
    %v1928 = vld [vmem:[%s1] sm:$0xff]
    %v1929 = vmul.f32 %v1924, 0.5
    %v1930 = vmul.f32 %v1929, 1.442695
    %v1931 = vpow.pop %v1930
    %1933 = vrot.lane.b32.xlu0 %v1931, 112
    %v1934 = vpop.permute.xlu0 %1933
    %v1936 = vmul.f32 %v1928, %v1934
    %v1937 = vadd.f32 %v1924, %v1936
    %v1938 = vpack.c.bf16 %v1937, %v1937
    %v1939 = vld [vmem:[%s6] sm:$0xff]
    %v1940 = vld [vmem:[%s6 + $0x8] sm:$0xff]
    %v1941 = vld [vmem:[%s6 + $0x10] sm:$0xff]
    %v1942 = vld [vmem:[%s6 + $0x18] sm:$0xff]
    %v1943 = vld [vmem:[%s7] sm:$0xf]
    %v1945 = vperm.slane %v1943, 0
    %v1946 = vperm.slane %v1943, 1
    %v1947 = vperm.slane %v1943, 2
    %v1948 = vperm.slane %v1943, 3
    %v1957 = vunpack.c.l.b16 %v1939
    %v1958 = vunpack.c.h.b16 %v1939
    %v1959 = vunpack.c.l.b16 %v1940
    %v1960 = vunpack.c.h.b16 %v1940
    %v1961 = vunpack.c.l.b16 %v1941
    %v1962 = vunpack.c.h.b16 %v1941
    %v1963 = vunpack.c.l.b16 %v1942
    %v1964 = vunpack.c.h.b16 %v1942
    %v1965 = vpack.c.b16 %v1961, %v1957
    %v1966 = vpack.c.b16 %v1962, %v1958
    %v1967 = vpack.c.b16 %v1963, %v1959
    %v1968 = vpack.c.b16 %v1964, %v1960
    %v1974 = vsel %vm1239, %v1938, 0
    %1976 = vmatpush.bf16.msra.mxu0 0
    %1977 = vmatpush.bf16.msra.mxu0 0
    %1978 = vmatpush.bf16.msra.mxu0 0
    %1979 = vmatpush.bf16.msra.mxu0 0
    %1980 = vmatpush.bf16.msra.mxu0 0
    %1981 = vmatpush.bf16.msra.mxu0 0
    %1982 = vmatpush.bf16.msra.mxu0 0
    %1983 = vmatpush.bf16.msra.mxu0 %v1965
    %1984 = vmatmul.bf16.gmra.mxu0 %v1974
    %v1985 = vpop.f32.mrf.mxu0
    %v1986 = vadd.f32 %v1945, %v1985
    %v1987 = vpop.f32.mrf.mxu0
    %1988 = vdwg.mxu0
    %1989 = vmatpush.bf16.msra.mxu0 0
    %1990 = vmatpush.bf16.msra.mxu0 0
    %1991 = vmatpush.bf16.msra.mxu0 0
    %1992 = vmatpush.bf16.msra.mxu0 0
    %1993 = vmatpush.bf16.msra.mxu0 0
    %1994 = vmatpush.bf16.msra.mxu0 0
    %1995 = vmatpush.bf16.msra.mxu0 0
    %1996 = vmatpush.bf16.msra.mxu0 %v1966
    %1997 = vmatmul.bf16.gmra.mxu0 %v1974
    %v1998 = vpop.f32.mrf.mxu0
    %v1999 = vadd.f32 %v1946, %v1998
    %v2000 = vpop.f32.mrf.mxu0
    %2001 = vdwg.mxu0
    %2002 = vmatpush.bf16.msra.mxu0 0
    %2003 = vmatpush.bf16.msra.mxu0 0
    %2004 = vmatpush.bf16.msra.mxu0 0
    %2005 = vmatpush.bf16.msra.mxu0 0
    %2006 = vmatpush.bf16.msra.mxu0 0
    %2007 = vmatpush.bf16.msra.mxu0 0
    %2008 = vmatpush.bf16.msra.mxu0 0
    %2009 = vmatpush.bf16.msra.mxu0 %v1967
    %2010 = vmatmul.bf16.gmra.mxu0 %v1974
    %v2011 = vpop.f32.mrf.mxu0
    %v2012 = vadd.f32 %v1947, %v2011
    %v2013 = vpop.f32.mrf.mxu0
    %2014 = vdwg.mxu0
    %2015 = vmatpush.bf16.msra.mxu0 0
    %2016 = vmatpush.bf16.msra.mxu0 0
    %2017 = vmatpush.bf16.msra.mxu0 0
    %2018 = vmatpush.bf16.msra.mxu0 0
    %2019 = vmatpush.bf16.msra.mxu0 0
    %2020 = vmatpush.bf16.msra.mxu0 0
    %2021 = vmatpush.bf16.msra.mxu0 0
    %2022 = vmatpush.bf16.msra.mxu0 %v1968
    %2023 = vmatmul.bf16.gmra.mxu0 %v1974
    %v2024 = vpop.f32.mrf.mxu0
    %v2025 = vadd.f32 %v1948, %v2024
    %v2026 = vpop.f32.mrf.mxu0
    %2027 = vdwg.mxu0
    %v2028 = vmax.f32 %v1986, 0.0
    %v2029 = vmax.f32 %v1999, 0.0
    %v2030 = vmax.f32 %v2012, 0.0
    %v2031 = vmax.f32 %v2025, 0.0
    %v2032 = vpack.c.bf16 %v2028, %v2028
    %v2033 = vpack.c.bf16 %v2029, %v2029
    %v2034 = vpack.c.bf16 %v2030, %v2030
    %v2035 = vpack.c.bf16 %v2031, %v2031
    %v2036 = vld [vmem:[%s8] sm:$0xff]
    %v2037 = vld [vmem:[%s8 + $0x8] sm:$0xff]
    %v2038 = vld [vmem:[%s8 + $0x10] sm:$0xff]
    %v2039 = vld [vmem:[%s8 + $0x18] sm:$0xf]
    %v2040 = vld [vmem:[%s8 + $0x1c] sm:$0xff]
    %v2041 = vld [vmem:[%s8 + $0x24] sm:$0xff]
    %v2042 = vld [vmem:[%s8 + $0x2c] sm:$0xff]
    %v2043 = vld [vmem:[%s8 + $0x34] sm:$0xf]
    %v2044 = vld [vmem:[%s8 + $0x38] sm:$0xff]
    %v2045 = vld [vmem:[%s8 + $0x40] sm:$0xff]
    %v2046 = vld [vmem:[%s8 + $0x48] sm:$0xff]
    %v2047 = vld [vmem:[%s8 + $0x50] sm:$0xf]
    %v2048 = vld [vmem:[%s8 + $0x54] sm:$0xff]
    %v2049 = vld [vmem:[%s8 + $0x5c] sm:$0xff]
    %v2050 = vld [vmem:[%s8 + $0x64] sm:$0xff]
    %v2051 = vld [vmem:[%s8 + $0x6c] sm:$0xf]
    %v2052 = vld [vmem:[%s8 + $0x70] sm:$0xff]
    %v2053 = vld [vmem:[%s8 + $0x78] sm:$0xff]
    %v2054 = vld [vmem:[%s8 + $0x80] sm:$0xff]
    %v2055 = vld [vmem:[%s8 + $0x88] sm:$0xf]
    %v2056 = vld [vmem:[%s8 + $0x8c] sm:$0xff]
    %v2057 = vld [vmem:[%s8 + $0x94] sm:$0xff]
    %v2058 = vld [vmem:[%s8 + $0x9c] sm:$0xff]
    %v2059 = vld [vmem:[%s8 + $0xa4] sm:$0xf]
    %v2060 = vld [vmem:[%s8 + $0xa8] sm:$0xff]
    %v2061 = vld [vmem:[%s8 + $0xb0] sm:$0xff]
    %v2062 = vld [vmem:[%s8 + $0xb8] sm:$0xff]
    %v2063 = vld [vmem:[%s8 + $0xc0] sm:$0xf]
    %v2064 = vld [vmem:[%s8 + $0xc4] sm:$0xff]
    %v2065 = vld [vmem:[%s8 + $0xcc] sm:$0xff]
    %v2066 = vld [vmem:[%s8 + $0xd4] sm:$0xff]
    %v2067 = vld [vmem:[%s8 + $0xdc] sm:$0xf]
    %v2068 = vld [vmem:[%s8 + $0xe0] sm:$0xff]
    %v2069 = vld [vmem:[%s8 + $0xe8] sm:$0xff]
    %v2070 = vld [vmem:[%s8 + $0xf0] sm:$0xff]
    %v2071 = vld [vmem:[%s8 + $0xf8] sm:$0xf]
    %v2072 = vld [vmem:[%s8 + $0xfc] sm:$0xff]
    %v2073 = vld [vmem:[%s8 + $0x104] sm:$0xff]
    %v2074 = vld [vmem:[%s8 + $0x10c] sm:$0xff]
    %v2075 = vld [vmem:[%s8 + $0x114] sm:$0xf]
    %v2076 = vld [vmem:[%s8 + $0x118] sm:$0xff]
    %v2077 = vld [vmem:[%s8 + $0x120] sm:$0xff]
    %v2078 = vld [vmem:[%s8 + $0x128] sm:$0xff]
    %v2079 = vld [vmem:[%s8 + $0x130] sm:$0xf]
    %v2080 = vld [vmem:[%s8 + $0x134] sm:$0xff]
    %v2081 = vld [vmem:[%s8 + $0x13c] sm:$0xff]
    %v2082 = vld [vmem:[%s8 + $0x144] sm:$0xff]
    %v2083 = vld [vmem:[%s8 + $0x14c] sm:$0xf]
    %v2084 = vld [vmem:[%s8 + $0x150] sm:$0xff]
    %v2085 = vld [vmem:[%s8 + $0x158] sm:$0xff]
    %v2086 = vld [vmem:[%s8 + $0x160] sm:$0xff]
    %v2087 = vld [vmem:[%s8 + $0x168] sm:$0xf]
    %v2088 = vld [vmem:[%s8 + $0x16c] sm:$0xff]
    %v2089 = vld [vmem:[%s8 + $0x174] sm:$0xff]
    %v2090 = vld [vmem:[%s8 + $0x17c] sm:$0xff]
    %v2091 = vld [vmem:[%s8 + $0x184] sm:$0xf]
    %v2092 = vld [vmem:[%s8 + $0x188] sm:$0xff]
    %v2093 = vld [vmem:[%s8 + $0x190] sm:$0xff]
    %v2094 = vld [vmem:[%s8 + $0x198] sm:$0xff]
    %v2095 = vld [vmem:[%s8 + $0x1a0] sm:$0xf]
    %v2096 = vld [vmem:[%s8 + $0x1a4] sm:$0xff]
    %v2097 = vld [vmem:[%s8 + $0x1ac] sm:$0xff]
    %v2098 = vld [vmem:[%s8 + $0x1b4] sm:$0xff]
    %v2099 = vld [vmem:[%s8 + $0x1bc] sm:$0xf]
    %v2100 = vld [vmem:[%s8 + $0x1c0] sm:$0xff]
    %v2101 = vld [vmem:[%s8 + $0x1c8] sm:$0xff]
    %v2102 = vld [vmem:[%s8 + $0x1d0] sm:$0xff]
    %v2103 = vld [vmem:[%s8 + $0x1d8] sm:$0xf]
    %v2104 = vld [vmem:[%s8 + $0x1dc] sm:$0xff]
    %v2105 = vld [vmem:[%s8 + $0x1e4] sm:$0xff]
    %v2106 = vld [vmem:[%s8 + $0x1ec] sm:$0xff]
    %v2107 = vld [vmem:[%s8 + $0x1f4] sm:$0xf]
    %v2108 = vld [vmem:[%s8 + $0x1f8] sm:$0xff]
    %v2109 = vld [vmem:[%s8 + $0x200] sm:$0xff]
    %v2110 = vld [vmem:[%s8 + $0x208] sm:$0xff]
    %v2111 = vld [vmem:[%s8 + $0x210] sm:$0xf]
    %v2112 = vld [vmem:[%s8 + $0x214] sm:$0xff]
    %v2113 = vld [vmem:[%s8 + $0x21c] sm:$0xff]
    %v2114 = vld [vmem:[%s8 + $0x224] sm:$0xff]
    %v2115 = vld [vmem:[%s8 + $0x22c] sm:$0xf]
    %v2116 = vld [vmem:[%s8 + $0x230] sm:$0xff]
    %v2117 = vld [vmem:[%s8 + $0x238] sm:$0xff]
    %v2118 = vld [vmem:[%s8 + $0x240] sm:$0xff]
    %v2119 = vld [vmem:[%s8 + $0x248] sm:$0xf]
    %v2120 = vld [vmem:[%s8 + $0x24c] sm:$0xff]
    %v2121 = vld [vmem:[%s8 + $0x254] sm:$0xff]
    %v2122 = vld [vmem:[%s8 + $0x25c] sm:$0xff]
    %v2123 = vld [vmem:[%s8 + $0x264] sm:$0xf]
    %v2124 = vld [vmem:[%s8 + $0x268] sm:$0xff]
    %v2125 = vld [vmem:[%s8 + $0x270] sm:$0xff]
    %v2126 = vld [vmem:[%s8 + $0x278] sm:$0xff]
    %v2127 = vld [vmem:[%s8 + $0x280] sm:$0xf]
    %v2128 = vld [vmem:[%s8 + $0x284] sm:$0xff]
    %v2129 = vld [vmem:[%s8 + $0x28c] sm:$0xff]
    %v2130 = vld [vmem:[%s8 + $0x294] sm:$0xff]
    %v2131 = vld [vmem:[%s8 + $0x29c] sm:$0xf]
    %v2132 = vld [vmem:[%s8 + $0x2a0] sm:$0xff]
    %v2133 = vld [vmem:[%s8 + $0x2a8] sm:$0xff]
    %v2134 = vld [vmem:[%s8 + $0x2b0] sm:$0xff]
    %v2135 = vld [vmem:[%s8 + $0x2b8] sm:$0xf]
    %v2136 = vld [vmem:[%s8 + $0x2bc] sm:$0xff]
    %v2137 = vld [vmem:[%s8 + $0x2c4] sm:$0xff]
    %v2138 = vld [vmem:[%s8 + $0x2cc] sm:$0xff]
    %v2139 = vld [vmem:[%s8 + $0x2d4] sm:$0xf]
    %v2140 = vld [vmem:[%s8 + $0x2d8] sm:$0xff]
    %v2141 = vld [vmem:[%s8 + $0x2e0] sm:$0xff]
    %v2142 = vld [vmem:[%s8 + $0x2e8] sm:$0xff]
    %v2143 = vld [vmem:[%s8 + $0x2f0] sm:$0xf]
    %v2144 = vld [vmem:[%s8 + $0x2f4] sm:$0xff]
    %v2145 = vld [vmem:[%s8 + $0x2fc] sm:$0xff]
    %v2146 = vld [vmem:[%s8 + $0x304] sm:$0xff]
    %v2147 = vld [vmem:[%s8 + $0x30c] sm:$0xf]
    %v2148 = vld [vmem:[%s8 + $0x310] sm:$0xff]
    %v2149 = vld [vmem:[%s8 + $0x318] sm:$0xff]
    %v2150 = vld [vmem:[%s8 + $0x320] sm:$0xff]
    %v2151 = vld [vmem:[%s8 + $0x328] sm:$0xf]
    %v2152 = vld [vmem:[%s8 + $0x32c] sm:$0xff]
    %v2153 = vld [vmem:[%s8 + $0x334] sm:$0xff]
    %v2154 = vld [vmem:[%s8 + $0x33c] sm:$0xff]
    %v2155 = vld [vmem:[%s8 + $0x344] sm:$0xf]
    %v2156 = vld [vmem:[%s8 + $0x348] sm:$0xff]
    %v2157 = vld [vmem:[%s8 + $0x350] sm:$0xff]
    %v2158 = vld [vmem:[%s8 + $0x358] sm:$0xff]
    %v2159 = vld [vmem:[%s8 + $0x360] sm:$0xf]
    %v2160 = vld [vmem:[%s8 + $0x364] sm:$0xff]
    %v2161 = vld [vmem:[%s8 + $0x36c] sm:$0xff]
    %v2162 = vld [vmem:[%s8 + $0x374] sm:$0xff]
    %v2163 = vld [vmem:[%s8 + $0x37c] sm:$0xf]
    %v2164 = vld [vmem:[%s8 + $0x380] sm:$0xff]
    %v2165 = vld [vmem:[%s8 + $0x388] sm:$0xff]
    %v2166 = vld [vmem:[%s8 + $0x390] sm:$0xff]
    %v2167 = vld [vmem:[%s8 + $0x398] sm:$0xf]
    %v2168 = vld [vmem:[%s8 + $0x39c] sm:$0xff]
    %v2169 = vld [vmem:[%s8 + $0x3a4] sm:$0xff]
    %v2170 = vld [vmem:[%s8 + $0x3ac] sm:$0xff]
    %v2171 = vld [vmem:[%s8 + $0x3b4] sm:$0xf]
    %v2172 = vld [vmem:[%s8 + $0x3b8] sm:$0xff]
    %v2173 = vld [vmem:[%s8 + $0x3c0] sm:$0xff]
    %v2174 = vld [vmem:[%s8 + $0x3c8] sm:$0xff]
    %v2175 = vld [vmem:[%s8 + $0x3d0] sm:$0xf]
    %v2176 = vld [vmem:[%s8 + $0x3d4] sm:$0xff]
    %v2177 = vld [vmem:[%s8 + $0x3dc] sm:$0xff]
    %v2178 = vld [vmem:[%s8 + $0x3e4] sm:$0xff]
    %v2179 = vld [vmem:[%s8 + $0x3ec] sm:$0xf]
    %v2180 = vld [vmem:[%s8 + $0x3f0] sm:$0xff]
    %v2181 = vld [vmem:[%s8 + $0x3f8] sm:$0xff]
    %v2182 = vld [vmem:[%s8 + $0x400] sm:$0xff]
    %v2183 = vld [vmem:[%s8 + $0x408] sm:$0xf]
    %v2184 = vld [vmem:[%s8 + $0x40c] sm:$0xff]
    %v2185 = vld [vmem:[%s8 + $0x414] sm:$0xff]
    %v2186 = vld [vmem:[%s8 + $0x41c] sm:$0xff]
    %v2187 = vld [vmem:[%s8 + $0x424] sm:$0xf]
    %v2188 = vld [vmem:[%s8 + $0x428] sm:$0xff]
    %v2189 = vld [vmem:[%s8 + $0x430] sm:$0xff]
    %v2190 = vld [vmem:[%s8 + $0x438] sm:$0xff]
    %v2191 = vld [vmem:[%s8 + $0x440] sm:$0xf]
    %v2192 = vld [vmem:[%s8 + $0x444] sm:$0xff]
    %v2193 = vld [vmem:[%s8 + $0x44c] sm:$0xff]
    %v2194 = vld [vmem:[%s8 + $0x454] sm:$0xff]
    %v2195 = vld [vmem:[%s8 + $0x45c] sm:$0xf]
    %v2196 = vld [vmem:[%s8 + $0x460] sm:$0xff]
    %v2197 = vld [vmem:[%s8 + $0x468] sm:$0xff]
    %v2198 = vld [vmem:[%s8 + $0x470] sm:$0xff]
    %v2199 = vld [vmem:[%s8 + $0x478] sm:$0xf]
    %v2200 = vld [vmem:[%s8 + $0x47c] sm:$0xff]
    %v2201 = vld [vmem:[%s8 + $0x484] sm:$0xff]
    %v2202 = vld [vmem:[%s8 + $0x48c] sm:$0xff]
    %v2203 = vld [vmem:[%s8 + $0x494] sm:$0xf]
    %v2204 = vld [vmem:[%s8 + $0x498] sm:$0xff]
    %v2205 = vld [vmem:[%s8 + $0x4a0] sm:$0xff]
    %v2206 = vld [vmem:[%s8 + $0x4a8] sm:$0xff]
    %v2207 = vld [vmem:[%s8 + $0x4b0] sm:$0xf]
    %v2208 = vld [vmem:[%s8 + $0x4b4] sm:$0xff]
    %v2209 = vld [vmem:[%s8 + $0x4bc] sm:$0xff]
    %v2210 = vld [vmem:[%s8 + $0x4c4] sm:$0xff]
    %v2211 = vld [vmem:[%s8 + $0x4cc] sm:$0xf]
    %v2212 = vld [vmem:[%s8 + $0x4d0] sm:$0xff]
    %v2213 = vld [vmem:[%s8 + $0x4d8] sm:$0xff]
    %v2214 = vld [vmem:[%s8 + $0x4e0] sm:$0xff]
    %v2215 = vld [vmem:[%s8 + $0x4e8] sm:$0xf]
    %v2216 = vld [vmem:[%s8 + $0x4ec] sm:$0xff]
    %v2217 = vld [vmem:[%s8 + $0x4f4] sm:$0xff]
    %v2218 = vld [vmem:[%s8 + $0x4fc] sm:$0xff]
    %v2219 = vld [vmem:[%s8 + $0x504] sm:$0xf]
    %v2220 = vld [vmem:[%s8 + $0x508] sm:$0xff]
    %v2221 = vld [vmem:[%s8 + $0x510] sm:$0xff]
    %v2222 = vld [vmem:[%s8 + $0x518] sm:$0xff]
    %v2223 = vld [vmem:[%s8 + $0x520] sm:$0xf]
    %v2224 = vld [vmem:[%s8 + $0x524] sm:$0xff]
    %v2225 = vld [vmem:[%s8 + $0x52c] sm:$0xff]
    %v2226 = vld [vmem:[%s8 + $0x534] sm:$0xff]
    %v2227 = vld [vmem:[%s8 + $0x53c] sm:$0xf]
    %v2228 = vld [vmem:[%s8 + $0x540] sm:$0xff]
    %v2229 = vld [vmem:[%s8 + $0x548] sm:$0xff]
    %v2230 = vld [vmem:[%s8 + $0x550] sm:$0xff]
    %v2231 = vld [vmem:[%s8 + $0x558] sm:$0xf]
    %v2232 = vld [vmem:[%s8 + $0x55c] sm:$0xff]
    %v2233 = vld [vmem:[%s8 + $0x564] sm:$0xff]
    %v2234 = vld [vmem:[%s8 + $0x56c] sm:$0xff]
    %v2235 = vld [vmem:[%s8 + $0x574] sm:$0xf]
    %v2236 = vld [vmem:[%s8 + $0x578] sm:$0xff]
    %v2237 = vld [vmem:[%s8 + $0x580] sm:$0xff]
    %v2238 = vld [vmem:[%s8 + $0x588] sm:$0xff]
    %v2239 = vld [vmem:[%s8 + $0x590] sm:$0xf]
    %v2240 = vld [vmem:[%s8 + $0x594] sm:$0xff]
    %v2241 = vld [vmem:[%s8 + $0x59c] sm:$0xff]
    %v2242 = vld [vmem:[%s8 + $0x5a4] sm:$0xff]
    %v2243 = vld [vmem:[%s8 + $0x5ac] sm:$0xf]
    %v2244 = vld [vmem:[%s8 + $0x5b0] sm:$0xff]
    %v2245 = vld [vmem:[%s8 + $0x5b8] sm:$0xff]
    %v2246 = vld [vmem:[%s8 + $0x5c0] sm:$0xff]
    %v2247 = vld [vmem:[%s8 + $0x5c8] sm:$0xf]
    %v2248 = vld [vmem:[%s8 + $0x5cc] sm:$0xff]
    %v2249 = vld [vmem:[%s8 + $0x5d4] sm:$0xff]
    %v2250 = vld [vmem:[%s8 + $0x5dc] sm:$0xff]
    %v2251 = vld [vmem:[%s8 + $0x5e4] sm:$0xf]
    %v2252 = vld [vmem:[%s8 + $0x5e8] sm:$0xff]
    %v2253 = vld [vmem:[%s8 + $0x5f0] sm:$0xff]
    %v2254 = vld [vmem:[%s8 + $0x5f8] sm:$0xff]
    %v2255 = vld [vmem:[%s8 + $0x600] sm:$0xf]
    %v2256 = vld [vmem:[%s8 + $0x604] sm:$0xff]
    %v2257 = vld [vmem:[%s8 + $0x60c] sm:$0xff]
    %v2258 = vld [vmem:[%s8 + $0x614] sm:$0xff]
    %v2259 = vld [vmem:[%s8 + $0x61c] sm:$0xf]
    %v2260 = vld [vmem:[%s8 + $0x620] sm:$0xff]
    %v2261 = vld [vmem:[%s8 + $0x628] sm:$0xff]
    %v2262 = vld [vmem:[%s8 + $0x630] sm:$0xff]
    %v2263 = vld [vmem:[%s8 + $0x638] sm:$0xf]
    %v2264 = vld [vmem:[%s8 + $0x63c] sm:$0xff]
    %v2265 = vld [vmem:[%s8 + $0x644] sm:$0xff]
    %v2266 = vld [vmem:[%s8 + $0x64c] sm:$0xff]
    %v2267 = vld [vmem:[%s8 + $0x654] sm:$0xf]
    %v2268 = vld [vmem:[%s8 + $0x658] sm:$0xff]
    %v2269 = vld [vmem:[%s8 + $0x660] sm:$0xff]
    %v2270 = vld [vmem:[%s8 + $0x668] sm:$0xff]
    %v2271 = vld [vmem:[%s8 + $0x670] sm:$0xf]
    %v2272 = vld [vmem:[%s8 + $0x674] sm:$0xff]
    %v2273 = vld [vmem:[%s8 + $0x67c] sm:$0xff]
    %v2274 = vld [vmem:[%s8 + $0x684] sm:$0xff]
    %v2275 = vld [vmem:[%s8 + $0x68c] sm:$0xf]
    %v2276 = vld [vmem:[%s8 + $0x690] sm:$0xff]
    %v2277 = vld [vmem:[%s8 + $0x698] sm:$0xff]
    %v2278 = vld [vmem:[%s8 + $0x6a0] sm:$0xff]
    %v2279 = vld [vmem:[%s8 + $0x6a8] sm:$0xf]
    %v2280 = vld [vmem:[%s8 + $0x6ac] sm:$0xff]
    %v2281 = vld [vmem:[%s8 + $0x6b4] sm:$0xff]
    %v2282 = vld [vmem:[%s8 + $0x6bc] sm:$0xff]
    %v2283 = vld [vmem:[%s8 + $0x6c4] sm:$0xf]
    %v2284 = vld [vmem:[%s8 + $0x6c8] sm:$0xff]
    %v2285 = vld [vmem:[%s8 + $0x6d0] sm:$0xff]
    %v2286 = vld [vmem:[%s8 + $0x6d8] sm:$0xff]
    %v2287 = vld [vmem:[%s8 + $0x6e0] sm:$0xf]
    %v2288 = vld [vmem:[%s8 + $0x6e4] sm:$0xff]
    %v2289 = vld [vmem:[%s8 + $0x6ec] sm:$0xff]
    %v2290 = vld [vmem:[%s8 + $0x6f4] sm:$0xff]
    %v2291 = vld [vmem:[%s8 + $0x6fc] sm:$0xf]
    %v2292 = vld [vmem:[%s9] sm:$0x7f]
    %v2294 = vperm.slane %v2292, 0
    %v2295 = vperm.slane %v2292, 1
    %v2296 = vperm.slane %v2292, 2
    %v2297 = vperm.slane %v2292, 3
    %v2298 = vperm.slane %v2292, 4
    %v2299 = vperm.slane %v2292, 5
    %v2300 = vperm.slane %v2292, 6
    %v2564 = vunpack.c.l.b16 %v2036
    %v2565 = vunpack.c.h.b16 %v2036
    %v2566 = vunpack.c.l.b16 %v2037
    %v2567 = vunpack.c.h.b16 %v2037
    %v2568 = vunpack.c.l.b16 %v2038
    %v2569 = vunpack.c.h.b16 %v2038
    %v2570 = vunpack.c.l.b16 %v2039
    %v2571 = vunpack.c.l.b16 %v2040
    %v2572 = vunpack.c.h.b16 %v2040
    %v2573 = vunpack.c.l.b16 %v2041
    %v2574 = vunpack.c.h.b16 %v2041
    %v2575 = vunpack.c.l.b16 %v2042
    %v2576 = vunpack.c.h.b16 %v2042
    %v2577 = vunpack.c.l.b16 %v2043
    %v2578 = vunpack.c.l.b16 %v2044
    %v2579 = vunpack.c.h.b16 %v2044
    %v2580 = vunpack.c.l.b16 %v2045
    %v2581 = vunpack.c.h.b16 %v2045
    %v2582 = vunpack.c.l.b16 %v2046
    %v2583 = vunpack.c.h.b16 %v2046
    %v2584 = vunpack.c.l.b16 %v2047
    %v2585 = vunpack.c.l.b16 %v2048
    %v2586 = vunpack.c.h.b16 %v2048
    %v2587 = vunpack.c.l.b16 %v2049
    %v2588 = vunpack.c.h.b16 %v2049
    %v2589 = vunpack.c.l.b16 %v2050
    %v2590 = vunpack.c.h.b16 %v2050
    %v2591 = vunpack.c.l.b16 %v2051
    %v2592 = vunpack.c.l.b16 %v2052
    %v2593 = vunpack.c.h.b16 %v2052
    %v2594 = vunpack.c.l.b16 %v2053
    %v2595 = vunpack.c.h.b16 %v2053
    %v2596 = vunpack.c.l.b16 %v2054
    %v2597 = vunpack.c.h.b16 %v2054
    %v2598 = vunpack.c.l.b16 %v2055
    %v2599 = vunpack.c.l.b16 %v2056
    %v2600 = vunpack.c.h.b16 %v2056
    %v2601 = vunpack.c.l.b16 %v2057
    %v2602 = vunpack.c.h.b16 %v2057
    %v2603 = vunpack.c.l.b16 %v2058
    %v2604 = vunpack.c.h.b16 %v2058
    %v2605 = vunpack.c.l.b16 %v2059
    %v2606 = vunpack.c.l.b16 %v2060
    %v2607 = vunpack.c.h.b16 %v2060
    %v2608 = vunpack.c.l.b16 %v2061
    %v2609 = vunpack.c.h.b16 %v2061
    %v2610 = vunpack.c.l.b16 %v2062
    %v2611 = vunpack.c.h.b16 %v2062
    %v2612 = vunpack.c.l.b16 %v2063
    %v2613 = vunpack.c.l.b16 %v2064
    %v2614 = vunpack.c.h.b16 %v2064
    %v2615 = vunpack.c.l.b16 %v2065
    %v2616 = vunpack.c.h.b16 %v2065
    %v2617 = vunpack.c.l.b16 %v2066
    %v2618 = vunpack.c.h.b16 %v2066
    %v2619 = vunpack.c.l.b16 %v2067
    %v2620 = vunpack.c.l.b16 %v2068
    %v2621 = vunpack.c.h.b16 %v2068
    %v2622 = vunpack.c.l.b16 %v2069
    %v2623 = vunpack.c.h.b16 %v2069
    %v2624 = vunpack.c.l.b16 %v2070
    %v2625 = vunpack.c.h.b16 %v2070
    %v2626 = vunpack.c.l.b16 %v2071
    %v2627 = vunpack.c.l.b16 %v2072
    %v2628 = vunpack.c.h.b16 %v2072
    %v2629 = vunpack.c.l.b16 %v2073
    %v2630 = vunpack.c.h.b16 %v2073
    %v2631 = vunpack.c.l.b16 %v2074
    %v2632 = vunpack.c.h.b16 %v2074
    %v2633 = vunpack.c.l.b16 %v2075
    %v2634 = vunpack.c.l.b16 %v2076
    %v2635 = vunpack.c.h.b16 %v2076
    %v2636 = vunpack.c.l.b16 %v2077
    %v2637 = vunpack.c.h.b16 %v2077
    %v2638 = vunpack.c.l.b16 %v2078
    %v2639 = vunpack.c.h.b16 %v2078
    %v2640 = vunpack.c.l.b16 %v2079
    %v2641 = vunpack.c.l.b16 %v2080
    %v2642 = vunpack.c.h.b16 %v2080
    %v2643 = vunpack.c.l.b16 %v2081
    %v2644 = vunpack.c.h.b16 %v2081
    %v2645 = vunpack.c.l.b16 %v2082
    %v2646 = vunpack.c.h.b16 %v2082
    %v2647 = vunpack.c.l.b16 %v2083
    %v2648 = vunpack.c.l.b16 %v2084
    %v2649 = vunpack.c.h.b16 %v2084
    %v2650 = vunpack.c.l.b16 %v2085
    %v2651 = vunpack.c.h.b16 %v2085
    %v2652 = vunpack.c.l.b16 %v2086
    %v2653 = vunpack.c.h.b16 %v2086
    %v2654 = vunpack.c.l.b16 %v2087
    %v2655 = vunpack.c.l.b16 %v2088
    %v2656 = vunpack.c.h.b16 %v2088
    %v2657 = vunpack.c.l.b16 %v2089
    %v2658 = vunpack.c.h.b16 %v2089
    %v2659 = vunpack.c.l.b16 %v2090
    %v2660 = vunpack.c.h.b16 %v2090
    %v2661 = vunpack.c.l.b16 %v2091
    %v2662 = vunpack.c.l.b16 %v2092
    %v2663 = vunpack.c.h.b16 %v2092
    %v2664 = vunpack.c.l.b16 %v2093
    %v2665 = vunpack.c.h.b16 %v2093
    %v2666 = vunpack.c.l.b16 %v2094
    %v2667 = vunpack.c.h.b16 %v2094
    %v2668 = vunpack.c.l.b16 %v2095
    %v2669 = vunpack.c.l.b16 %v2096
    %v2670 = vunpack.c.h.b16 %v2096
    %v2671 = vunpack.c.l.b16 %v2097
    %v2672 = vunpack.c.h.b16 %v2097
    %v2673 = vunpack.c.l.b16 %v2098
    %v2674 = vunpack.c.h.b16 %v2098
    %v2675 = vunpack.c.l.b16 %v2099
    %v2676 = vunpack.c.l.b16 %v2100
    %v2677 = vunpack.c.h.b16 %v2100
    %v2678 = vunpack.c.l.b16 %v2101
    %v2679 = vunpack.c.h.b16 %v2101
    %v2680 = vunpack.c.l.b16 %v2102
    %v2681 = vunpack.c.h.b16 %v2102
    %v2682 = vunpack.c.l.b16 %v2103
    %v2683 = vunpack.c.l.b16 %v2104
    %v2684 = vunpack.c.h.b16 %v2104
    %v2685 = vunpack.c.l.b16 %v2105
    %v2686 = vunpack.c.h.b16 %v2105
    %v2687 = vunpack.c.l.b16 %v2106
    %v2688 = vunpack.c.h.b16 %v2106
    %v2689 = vunpack.c.l.b16 %v2107
    %v2690 = vunpack.c.l.b16 %v2108
    %v2691 = vunpack.c.h.b16 %v2108
    %v2692 = vunpack.c.l.b16 %v2109
    %v2693 = vunpack.c.h.b16 %v2109
    %v2694 = vunpack.c.l.b16 %v2110
    %v2695 = vunpack.c.h.b16 %v2110
    %v2696 = vunpack.c.l.b16 %v2111
    %v2697 = vunpack.c.l.b16 %v2112
    %v2698 = vunpack.c.h.b16 %v2112
    %v2699 = vunpack.c.l.b16 %v2113
    %v2700 = vunpack.c.h.b16 %v2113
    %v2701 = vunpack.c.l.b16 %v2114
    %v2702 = vunpack.c.h.b16 %v2114
    %v2703 = vunpack.c.l.b16 %v2115
    %v2704 = vunpack.c.l.b16 %v2116
    %v2705 = vunpack.c.h.b16 %v2116
    %v2706 = vunpack.c.l.b16 %v2117
    %v2707 = vunpack.c.h.b16 %v2117
    %v2708 = vunpack.c.l.b16 %v2118
    %v2709 = vunpack.c.h.b16 %v2118
    %v2710 = vunpack.c.l.b16 %v2119
    %v2711 = vunpack.c.l.b16 %v2120
    %v2712 = vunpack.c.h.b16 %v2120
    %v2713 = vunpack.c.l.b16 %v2121
    %v2714 = vunpack.c.h.b16 %v2121
    %v2715 = vunpack.c.l.b16 %v2122
    %v2716 = vunpack.c.h.b16 %v2122
    %v2717 = vunpack.c.l.b16 %v2123
    %v2718 = vunpack.c.l.b16 %v2124
    %v2719 = vunpack.c.h.b16 %v2124
    %v2720 = vunpack.c.l.b16 %v2125
    %v2721 = vunpack.c.h.b16 %v2125
    %v2722 = vunpack.c.l.b16 %v2126
    %v2723 = vunpack.c.h.b16 %v2126
    %v2724 = vunpack.c.l.b16 %v2127
    %v2725 = vunpack.c.l.b16 %v2128
    %v2726 = vunpack.c.h.b16 %v2128
    %v2727 = vunpack.c.l.b16 %v2129
    %v2728 = vunpack.c.h.b16 %v2129
    %v2729 = vunpack.c.l.b16 %v2130
    %v2730 = vunpack.c.h.b16 %v2130
    %v2731 = vunpack.c.l.b16 %v2131
    %v2732 = vunpack.c.l.b16 %v2132
    %v2733 = vunpack.c.h.b16 %v2132
    %v2734 = vunpack.c.l.b16 %v2133
    %v2735 = vunpack.c.h.b16 %v2133
    %v2736 = vunpack.c.l.b16 %v2134
    %v2737 = vunpack.c.h.b16 %v2134
    %v2738 = vunpack.c.l.b16 %v2135
    %v2739 = vunpack.c.l.b16 %v2136
    %v2740 = vunpack.c.h.b16 %v2136
    %v2741 = vunpack.c.l.b16 %v2137
    %v2742 = vunpack.c.h.b16 %v2137
    %v2743 = vunpack.c.l.b16 %v2138
    %v2744 = vunpack.c.h.b16 %v2138
    %v2745 = vunpack.c.l.b16 %v2139
    %v2746 = vunpack.c.l.b16 %v2140
    %v2747 = vunpack.c.h.b16 %v2140
    %v2748 = vunpack.c.l.b16 %v2141
    %v2749 = vunpack.c.h.b16 %v2141
    %v2750 = vunpack.c.l.b16 %v2142
    %v2751 = vunpack.c.h.b16 %v2142
    %v2752 = vunpack.c.l.b16 %v2143
    %v2753 = vunpack.c.l.b16 %v2144
    %v2754 = vunpack.c.h.b16 %v2144
    %v2755 = vunpack.c.l.b16 %v2145
    %v2756 = vunpack.c.h.b16 %v2145
    %v2757 = vunpack.c.l.b16 %v2146
    %v2758 = vunpack.c.h.b16 %v2146
    %v2759 = vunpack.c.l.b16 %v2147
    %v2760 = vunpack.c.l.b16 %v2148
    %v2761 = vunpack.c.h.b16 %v2148
    %v2762 = vunpack.c.l.b16 %v2149
    %v2763 = vunpack.c.h.b16 %v2149
    %v2764 = vunpack.c.l.b16 %v2150
    %v2765 = vunpack.c.h.b16 %v2150
    %v2766 = vunpack.c.l.b16 %v2151
    %v2767 = vunpack.c.l.b16 %v2152
    %v2768 = vunpack.c.h.b16 %v2152
    %v2769 = vunpack.c.l.b16 %v2153
    %v2770 = vunpack.c.h.b16 %v2153
    %v2771 = vunpack.c.l.b16 %v2154
    %v2772 = vunpack.c.h.b16 %v2154
    %v2773 = vunpack.c.l.b16 %v2155
    %v2774 = vunpack.c.l.b16 %v2156
    %v2775 = vunpack.c.h.b16 %v2156
    %v2776 = vunpack.c.l.b16 %v2157
    %v2777 = vunpack.c.h.b16 %v2157
    %v2778 = vunpack.c.l.b16 %v2158
    %v2779 = vunpack.c.h.b16 %v2158
    %v2780 = vunpack.c.l.b16 %v2159
    %v2781 = vunpack.c.l.b16 %v2160
    %v2782 = vunpack.c.h.b16 %v2160
    %v2783 = vunpack.c.l.b16 %v2161
    %v2784 = vunpack.c.h.b16 %v2161
    %v2785 = vunpack.c.l.b16 %v2162
    %v2786 = vunpack.c.h.b16 %v2162
    %v2787 = vunpack.c.l.b16 %v2163
    %v2788 = vunpack.c.l.b16 %v2164
    %v2789 = vunpack.c.h.b16 %v2164
    %v2790 = vunpack.c.l.b16 %v2165
    %v2791 = vunpack.c.h.b16 %v2165
    %v2792 = vunpack.c.l.b16 %v2166
    %v2793 = vunpack.c.h.b16 %v2166
    %v2794 = vunpack.c.l.b16 %v2167
    %v2795 = vunpack.c.l.b16 %v2168
    %v2796 = vunpack.c.h.b16 %v2168
    %v2797 = vunpack.c.l.b16 %v2169
    %v2798 = vunpack.c.h.b16 %v2169
    %v2799 = vunpack.c.l.b16 %v2170
    %v2800 = vunpack.c.h.b16 %v2170
    %v2801 = vunpack.c.l.b16 %v2171
    %v2802 = vunpack.c.l.b16 %v2172
    %v2803 = vunpack.c.h.b16 %v2172
    %v2804 = vunpack.c.l.b16 %v2173
    %v2805 = vunpack.c.h.b16 %v2173
    %v2806 = vunpack.c.l.b16 %v2174
    %v2807 = vunpack.c.h.b16 %v2174
    %v2808 = vunpack.c.l.b16 %v2175
    %v2809 = vunpack.c.l.b16 %v2176
    %v2810 = vunpack.c.h.b16 %v2176
    %v2811 = vunpack.c.l.b16 %v2177
    %v2812 = vunpack.c.h.b16 %v2177
    %v2813 = vunpack.c.l.b16 %v2178
    %v2814 = vunpack.c.h.b16 %v2178
    %v2815 = vunpack.c.l.b16 %v2179
    %v2816 = vunpack.c.l.b16 %v2180
    %v2817 = vunpack.c.h.b16 %v2180
    %v2818 = vunpack.c.l.b16 %v2181
    %v2819 = vunpack.c.h.b16 %v2181
    %v2820 = vunpack.c.l.b16 %v2182
    %v2821 = vunpack.c.h.b16 %v2182
    %v2822 = vunpack.c.l.b16 %v2183
    %v2823 = vunpack.c.l.b16 %v2184
    %v2824 = vunpack.c.h.b16 %v2184
    %v2825 = vunpack.c.l.b16 %v2185
    %v2826 = vunpack.c.h.b16 %v2185
    %v2827 = vunpack.c.l.b16 %v2186
    %v2828 = vunpack.c.h.b16 %v2186
    %v2829 = vunpack.c.l.b16 %v2187
    %v2830 = vunpack.c.l.b16 %v2188
    %v2831 = vunpack.c.h.b16 %v2188
    %v2832 = vunpack.c.l.b16 %v2189
    %v2833 = vunpack.c.h.b16 %v2189
    %v2834 = vunpack.c.l.b16 %v2190
    %v2835 = vunpack.c.h.b16 %v2190
    %v2836 = vunpack.c.l.b16 %v2191
    %v2837 = vunpack.c.l.b16 %v2192
    %v2838 = vunpack.c.h.b16 %v2192
    %v2839 = vunpack.c.l.b16 %v2193
    %v2840 = vunpack.c.h.b16 %v2193
    %v2841 = vunpack.c.l.b16 %v2194
    %v2842 = vunpack.c.h.b16 %v2194
    %v2843 = vunpack.c.l.b16 %v2195
    %v2844 = vunpack.c.l.b16 %v2196
    %v2845 = vunpack.c.h.b16 %v2196
    %v2846 = vunpack.c.l.b16 %v2197
    %v2847 = vunpack.c.h.b16 %v2197
    %v2848 = vunpack.c.l.b16 %v2198
    %v2849 = vunpack.c.h.b16 %v2198
    %v2850 = vunpack.c.l.b16 %v2199
    %v2851 = vunpack.c.l.b16 %v2200
    %v2852 = vunpack.c.h.b16 %v2200
    %v2853 = vunpack.c.l.b16 %v2201
    %v2854 = vunpack.c.h.b16 %v2201
    %v2855 = vunpack.c.l.b16 %v2202
    %v2856 = vunpack.c.h.b16 %v2202
    %v2857 = vunpack.c.l.b16 %v2203
    %v2858 = vunpack.c.l.b16 %v2204
    %v2859 = vunpack.c.h.b16 %v2204
    %v2860 = vunpack.c.l.b16 %v2205
    %v2861 = vunpack.c.h.b16 %v2205
    %v2862 = vunpack.c.l.b16 %v2206
    %v2863 = vunpack.c.h.b16 %v2206
    %v2864 = vunpack.c.l.b16 %v2207
    %v2865 = vunpack.c.l.b16 %v2208
    %v2866 = vunpack.c.h.b16 %v2208
    %v2867 = vunpack.c.l.b16 %v2209
    %v2868 = vunpack.c.h.b16 %v2209
    %v2869 = vunpack.c.l.b16 %v2210
    %v2870 = vunpack.c.h.b16 %v2210
    %v2871 = vunpack.c.l.b16 %v2211
    %v2872 = vunpack.c.l.b16 %v2212
    %v2873 = vunpack.c.h.b16 %v2212
    %v2874 = vunpack.c.l.b16 %v2213
    %v2875 = vunpack.c.h.b16 %v2213
    %v2876 = vunpack.c.l.b16 %v2214
    %v2877 = vunpack.c.h.b16 %v2214
    %v2878 = vunpack.c.l.b16 %v2215
    %v2879 = vunpack.c.l.b16 %v2216
    %v2880 = vunpack.c.h.b16 %v2216
    %v2881 = vunpack.c.l.b16 %v2217
    %v2882 = vunpack.c.h.b16 %v2217
    %v2883 = vunpack.c.l.b16 %v2218
    %v2884 = vunpack.c.h.b16 %v2218
    %v2885 = vunpack.c.l.b16 %v2219
    %v2886 = vunpack.c.l.b16 %v2220
    %v2887 = vunpack.c.h.b16 %v2220
    %v2888 = vunpack.c.l.b16 %v2221
    %v2889 = vunpack.c.h.b16 %v2221
    %v2890 = vunpack.c.l.b16 %v2222
    %v2891 = vunpack.c.h.b16 %v2222
    %v2892 = vunpack.c.l.b16 %v2223
    %v2893 = vunpack.c.l.b16 %v2224
    %v2894 = vunpack.c.h.b16 %v2224
    %v2895 = vunpack.c.l.b16 %v2225
    %v2896 = vunpack.c.h.b16 %v2225
    %v2897 = vunpack.c.l.b16 %v2226
    %v2898 = vunpack.c.h.b16 %v2226
    %v2899 = vunpack.c.l.b16 %v2227
    %v2900 = vunpack.c.l.b16 %v2228
    %v2901 = vunpack.c.h.b16 %v2228
    %v2902 = vunpack.c.l.b16 %v2229
    %v2903 = vunpack.c.h.b16 %v2229
    %v2904 = vunpack.c.l.b16 %v2230
    %v2905 = vunpack.c.h.b16 %v2230
    %v2906 = vunpack.c.l.b16 %v2231
    %v2907 = vunpack.c.l.b16 %v2232
    %v2908 = vunpack.c.h.b16 %v2232
    %v2909 = vunpack.c.l.b16 %v2233
    %v2910 = vunpack.c.h.b16 %v2233
    %v2911 = vunpack.c.l.b16 %v2234
    %v2912 = vunpack.c.h.b16 %v2234
    %v2913 = vunpack.c.l.b16 %v2235
    %v2914 = vunpack.c.l.b16 %v2236
    %v2915 = vunpack.c.h.b16 %v2236
    %v2916 = vunpack.c.l.b16 %v2237
    %v2917 = vunpack.c.h.b16 %v2237
    %v2918 = vunpack.c.l.b16 %v2238
    %v2919 = vunpack.c.h.b16 %v2238
    %v2920 = vunpack.c.l.b16 %v2239
    %v2921 = vunpack.c.l.b16 %v2240
    %v2922 = vunpack.c.h.b16 %v2240
    %v2923 = vunpack.c.l.b16 %v2241
    %v2924 = vunpack.c.h.b16 %v2241
    %v2925 = vunpack.c.l.b16 %v2242
    %v2926 = vunpack.c.h.b16 %v2242
    %v2927 = vunpack.c.l.b16 %v2243
    %v2928 = vunpack.c.l.b16 %v2244
    %v2929 = vunpack.c.h.b16 %v2244
    %v2930 = vunpack.c.l.b16 %v2245
    %v2931 = vunpack.c.h.b16 %v2245
    %v2932 = vunpack.c.l.b16 %v2246
    %v2933 = vunpack.c.h.b16 %v2246
    %v2934 = vunpack.c.l.b16 %v2247
    %v2935 = vunpack.c.l.b16 %v2248
    %v2936 = vunpack.c.h.b16 %v2248
    %v2937 = vunpack.c.l.b16 %v2249
    %v2938 = vunpack.c.h.b16 %v2249
    %v2939 = vunpack.c.l.b16 %v2250
    %v2940 = vunpack.c.h.b16 %v2250
    %v2941 = vunpack.c.l.b16 %v2251
    %v2942 = vunpack.c.l.b16 %v2252
    %v2943 = vunpack.c.h.b16 %v2252
    %v2944 = vunpack.c.l.b16 %v2253
    %v2945 = vunpack.c.h.b16 %v2253
    %v2946 = vunpack.c.l.b16 %v2254
    %v2947 = vunpack.c.h.b16 %v2254
    %v2948 = vunpack.c.l.b16 %v2255
    %v2949 = vunpack.c.l.b16 %v2256
    %v2950 = vunpack.c.h.b16 %v2256
    %v2951 = vunpack.c.l.b16 %v2257
    %v2952 = vunpack.c.h.b16 %v2257
    %v2953 = vunpack.c.l.b16 %v2258
    %v2954 = vunpack.c.h.b16 %v2258
    %v2955 = vunpack.c.l.b16 %v2259
    %v2956 = vunpack.c.l.b16 %v2260
    %v2957 = vunpack.c.h.b16 %v2260
    %v2958 = vunpack.c.l.b16 %v2261
    %v2959 = vunpack.c.h.b16 %v2261
    %v2960 = vunpack.c.l.b16 %v2262
    %v2961 = vunpack.c.h.b16 %v2262
    %v2962 = vunpack.c.l.b16 %v2263
    %v2963 = vunpack.c.l.b16 %v2264
    %v2964 = vunpack.c.h.b16 %v2264
    %v2965 = vunpack.c.l.b16 %v2265
    %v2966 = vunpack.c.h.b16 %v2265
    %v2967 = vunpack.c.l.b16 %v2266
    %v2968 = vunpack.c.h.b16 %v2266
    %v2969 = vunpack.c.l.b16 %v2267
    %v2970 = vunpack.c.l.b16 %v2268
    %v2971 = vunpack.c.h.b16 %v2268
    %v2972 = vunpack.c.l.b16 %v2269
    %v2973 = vunpack.c.h.b16 %v2269
    %v2974 = vunpack.c.l.b16 %v2270
    %v2975 = vunpack.c.h.b16 %v2270
    %v2976 = vunpack.c.l.b16 %v2271
    %v2977 = vunpack.c.l.b16 %v2272
    %v2978 = vunpack.c.h.b16 %v2272
    %v2979 = vunpack.c.l.b16 %v2273
    %v2980 = vunpack.c.h.b16 %v2273
    %v2981 = vunpack.c.l.b16 %v2274
    %v2982 = vunpack.c.h.b16 %v2274
    %v2983 = vunpack.c.l.b16 %v2275
    %v2984 = vunpack.c.l.b16 %v2276
    %v2985 = vunpack.c.h.b16 %v2276
    %v2986 = vunpack.c.l.b16 %v2277
    %v2987 = vunpack.c.h.b16 %v2277
    %v2988 = vunpack.c.l.b16 %v2278
    %v2989 = vunpack.c.h.b16 %v2278
    %v2990 = vunpack.c.l.b16 %v2279
    %v2991 = vunpack.c.l.b16 %v2280
    %v2992 = vunpack.c.h.b16 %v2280
    %v2993 = vunpack.c.l.b16 %v2281
    %v2994 = vunpack.c.h.b16 %v2281
    %v2995 = vunpack.c.l.b16 %v2282
    %v2996 = vunpack.c.h.b16 %v2282
    %v2997 = vunpack.c.l.b16 %v2283
    %v2998 = vunpack.c.l.b16 %v2284
    %v2999 = vunpack.c.h.b16 %v2284
    %v3000 = vunpack.c.l.b16 %v2285
    %v3001 = vunpack.c.h.b16 %v2285
    %v3002 = vunpack.c.l.b16 %v2286
    %v3003 = vunpack.c.h.b16 %v2286
    %v3004 = vunpack.c.l.b16 %v2287
    %v3005 = vunpack.c.l.b16 %v2288
    %v3006 = vunpack.c.h.b16 %v2288
    %v3007 = vunpack.c.l.b16 %v2289
    %v3008 = vunpack.c.h.b16 %v2289
    %v3009 = vunpack.c.l.b16 %v2290
    %v3010 = vunpack.c.h.b16 %v2290
    %v3011 = vunpack.c.l.b16 %v2291
    %v3012 = vpack.c.b16 %v2571, %v2564
    %v3013 = vpack.c.b16 %v2572, %v2565
    %v3014 = vpack.c.b16 %v2573, %v2566
    %v3015 = vpack.c.b16 %v2574, %v2567
    %v3016 = vpack.c.b16 %v2575, %v2568
    %v3017 = vpack.c.b16 %v2576, %v2569
    %v3018 = vpack.c.b16 %v2577, %v2570
    %v3019 = vpack.c.b16 %v2585, %v2578
    %v3020 = vpack.c.b16 %v2586, %v2579
    %v3021 = vpack.c.b16 %v2587, %v2580
    %v3022 = vpack.c.b16 %v2588, %v2581
    %v3023 = vpack.c.b16 %v2589, %v2582
    %v3024 = vpack.c.b16 %v2590, %v2583
    %v3025 = vpack.c.b16 %v2591, %v2584
    %v3026 = vpack.c.b16 %v2599, %v2592
    %v3027 = vpack.c.b16 %v2600, %v2593
    %v3028 = vpack.c.b16 %v2601, %v2594
    %v3029 = vpack.c.b16 %v2602, %v2595
    %v3030 = vpack.c.b16 %v2603, %v2596
    %v3031 = vpack.c.b16 %v2604, %v2597
    %v3032 = vpack.c.b16 %v2605, %v2598
    %v3033 = vpack.c.b16 %v2613, %v2606
    %v3034 = vpack.c.b16 %v2614, %v2607
    %v3035 = vpack.c.b16 %v2615, %v2608
    %v3036 = vpack.c.b16 %v2616, %v2609
    %v3037 = vpack.c.b16 %v2617, %v2610
    %v3038 = vpack.c.b16 %v2618, %v2611
    %v3039 = vpack.c.b16 %v2619, %v2612
    %v3040 = vpack.c.b16 %v2627, %v2620
    %v3041 = vpack.c.b16 %v2628, %v2621
    %v3042 = vpack.c.b16 %v2629, %v2622
    %v3043 = vpack.c.b16 %v2630, %v2623
    %v3044 = vpack.c.b16 %v2631, %v2624
    %v3045 = vpack.c.b16 %v2632, %v2625
    %v3046 = vpack.c.b16 %v2633, %v2626
    %v3047 = vpack.c.b16 %v2641, %v2634
    %v3048 = vpack.c.b16 %v2642, %v2635
    %v3049 = vpack.c.b16 %v2643, %v2636
    %v3050 = vpack.c.b16 %v2644, %v2637
    %v3051 = vpack.c.b16 %v2645, %v2638
    %v3052 = vpack.c.b16 %v2646, %v2639
    %v3053 = vpack.c.b16 %v2647, %v2640
    %v3054 = vpack.c.b16 %v2655, %v2648
    %v3055 = vpack.c.b16 %v2656, %v2649
    %v3056 = vpack.c.b16 %v2657, %v2650
    %v3057 = vpack.c.b16 %v2658, %v2651
    %v3058 = vpack.c.b16 %v2659, %v2652
    %v3059 = vpack.c.b16 %v2660, %v2653
    %v3060 = vpack.c.b16 %v2661, %v2654
    %v3061 = vpack.c.b16 %v2669, %v2662
    %v3062 = vpack.c.b16 %v2670, %v2663
    %v3063 = vpack.c.b16 %v2671, %v2664
    %v3064 = vpack.c.b16 %v2672, %v2665
    %v3065 = vpack.c.b16 %v2673, %v2666
    %v3066 = vpack.c.b16 %v2674, %v2667
    %v3067 = vpack.c.b16 %v2675, %v2668
    %v3068 = vpack.c.b16 %v2683, %v2676
    %v3069 = vpack.c.b16 %v2684, %v2677
    %v3070 = vpack.c.b16 %v2685, %v2678
    %v3071 = vpack.c.b16 %v2686, %v2679
    %v3072 = vpack.c.b16 %v2687, %v2680
    %v3073 = vpack.c.b16 %v2688, %v2681
    %v3074 = vpack.c.b16 %v2689, %v2682
    %v3075 = vpack.c.b16 %v2697, %v2690
    %v3076 = vpack.c.b16 %v2698, %v2691
    %v3077 = vpack.c.b16 %v2699, %v2692
    %v3078 = vpack.c.b16 %v2700, %v2693
    %v3079 = vpack.c.b16 %v2701, %v2694
    %v3080 = vpack.c.b16 %v2702, %v2695
    %v3081 = vpack.c.b16 %v2703, %v2696
    %v3082 = vpack.c.b16 %v2711, %v2704
    %v3083 = vpack.c.b16 %v2712, %v2705
    %v3084 = vpack.c.b16 %v2713, %v2706
    %v3085 = vpack.c.b16 %v2714, %v2707
    %v3086 = vpack.c.b16 %v2715, %v2708
    %v3087 = vpack.c.b16 %v2716, %v2709
    %v3088 = vpack.c.b16 %v2717, %v2710
    %v3089 = vpack.c.b16 %v2725, %v2718
    %v3090 = vpack.c.b16 %v2726, %v2719
    %v3091 = vpack.c.b16 %v2727, %v2720
    %v3092 = vpack.c.b16 %v2728, %v2721
    %v3093 = vpack.c.b16 %v2729, %v2722
    %v3094 = vpack.c.b16 %v2730, %v2723
    %v3095 = vpack.c.b16 %v2731, %v2724
    %v3096 = vpack.c.b16 %v2739, %v2732
    %v3097 = vpack.c.b16 %v2740, %v2733
    %v3098 = vpack.c.b16 %v2741, %v2734
    %v3099 = vpack.c.b16 %v2742, %v2735
    %v3100 = vpack.c.b16 %v2743, %v2736
    %v3101 = vpack.c.b16 %v2744, %v2737
    %v3102 = vpack.c.b16 %v2745, %v2738
    %v3103 = vpack.c.b16 %v2753, %v2746
    %v3104 = vpack.c.b16 %v2754, %v2747
    %v3105 = vpack.c.b16 %v2755, %v2748
    %v3106 = vpack.c.b16 %v2756, %v2749
    %v3107 = vpack.c.b16 %v2757, %v2750
    %v3108 = vpack.c.b16 %v2758, %v2751
    %v3109 = vpack.c.b16 %v2759, %v2752
    %v3110 = vpack.c.b16 %v2767, %v2760
    %v3111 = vpack.c.b16 %v2768, %v2761
    %v3112 = vpack.c.b16 %v2769, %v2762
    %v3113 = vpack.c.b16 %v2770, %v2763
    %v3114 = vpack.c.b16 %v2771, %v2764
    %v3115 = vpack.c.b16 %v2772, %v2765
    %v3116 = vpack.c.b16 %v2773, %v2766
    %v3117 = vpack.c.b16 %v2781, %v2774
    %v3118 = vpack.c.b16 %v2782, %v2775
    %v3119 = vpack.c.b16 %v2783, %v2776
    %v3120 = vpack.c.b16 %v2784, %v2777
    %v3121 = vpack.c.b16 %v2785, %v2778
    %v3122 = vpack.c.b16 %v2786, %v2779
    %v3123 = vpack.c.b16 %v2787, %v2780
    %v3124 = vpack.c.b16 %v2795, %v2788
    %v3125 = vpack.c.b16 %v2796, %v2789
    %v3126 = vpack.c.b16 %v2797, %v2790
    %v3127 = vpack.c.b16 %v2798, %v2791
    %v3128 = vpack.c.b16 %v2799, %v2792
    %v3129 = vpack.c.b16 %v2800, %v2793
    %v3130 = vpack.c.b16 %v2801, %v2794
    %v3131 = vpack.c.b16 %v2809, %v2802
    %v3132 = vpack.c.b16 %v2810, %v2803
    %v3133 = vpack.c.b16 %v2811, %v2804
    %v3134 = vpack.c.b16 %v2812, %v2805
    %v3135 = vpack.c.b16 %v2813, %v2806
    %v3136 = vpack.c.b16 %v2814, %v2807
    %v3137 = vpack.c.b16 %v2815, %v2808
    %v3138 = vpack.c.b16 %v2823, %v2816
    %v3139 = vpack.c.b16 %v2824, %v2817
    %v3140 = vpack.c.b16 %v2825, %v2818
    %v3141 = vpack.c.b16 %v2826, %v2819
    %v3142 = vpack.c.b16 %v2827, %v2820
    %v3143 = vpack.c.b16 %v2828, %v2821
    %v3144 = vpack.c.b16 %v2829, %v2822
    %v3145 = vpack.c.b16 %v2837, %v2830
    %v3146 = vpack.c.b16 %v2838, %v2831
    %v3147 = vpack.c.b16 %v2839, %v2832
    %v3148 = vpack.c.b16 %v2840, %v2833
    %v3149 = vpack.c.b16 %v2841, %v2834
    %v3150 = vpack.c.b16 %v2842, %v2835
    %v3151 = vpack.c.b16 %v2843, %v2836
    %v3152 = vpack.c.b16 %v2851, %v2844
    %v3153 = vpack.c.b16 %v2852, %v2845
    %v3154 = vpack.c.b16 %v2853, %v2846
    %v3155 = vpack.c.b16 %v2854, %v2847
    %v3156 = vpack.c.b16 %v2855, %v2848
    %v3157 = vpack.c.b16 %v2856, %v2849
    %v3158 = vpack.c.b16 %v2857, %v2850
    %v3159 = vpack.c.b16 %v2865, %v2858
    %v3160 = vpack.c.b16 %v2866, %v2859
    %v3161 = vpack.c.b16 %v2867, %v2860
    %v3162 = vpack.c.b16 %v2868, %v2861
    %v3163 = vpack.c.b16 %v2869, %v2862
    %v3164 = vpack.c.b16 %v2870, %v2863
    %v3165 = vpack.c.b16 %v2871, %v2864
    %v3166 = vpack.c.b16 %v2879, %v2872
    %v3167 = vpack.c.b16 %v2880, %v2873
    %v3168 = vpack.c.b16 %v2881, %v2874
    %v3169 = vpack.c.b16 %v2882, %v2875
    %v3170 = vpack.c.b16 %v2883, %v2876
    %v3171 = vpack.c.b16 %v2884, %v2877
    %v3172 = vpack.c.b16 %v2885, %v2878
    %v3173 = vpack.c.b16 %v2893, %v2886
    %v3174 = vpack.c.b16 %v2894, %v2887
    %v3175 = vpack.c.b16 %v2895, %v2888
    %v3176 = vpack.c.b16 %v2896, %v2889
    %v3177 = vpack.c.b16 %v2897, %v2890
    %v3178 = vpack.c.b16 %v2898, %v2891
    %v3179 = vpack.c.b16 %v2899, %v2892
    %v3180 = vpack.c.b16 %v2907, %v2900
    %v3181 = vpack.c.b16 %v2908, %v2901
    %v3182 = vpack.c.b16 %v2909, %v2902
    %v3183 = vpack.c.b16 %v2910, %v2903
    %v3184 = vpack.c.b16 %v2911, %v2904
    %v3185 = vpack.c.b16 %v2912, %v2905
    %v3186 = vpack.c.b16 %v2913, %v2906
    %v3187 = vpack.c.b16 %v2921, %v2914
    %v3188 = vpack.c.b16 %v2922, %v2915
    %v3189 = vpack.c.b16 %v2923, %v2916
    %v3190 = vpack.c.b16 %v2924, %v2917
    %v3191 = vpack.c.b16 %v2925, %v2918
    %v3192 = vpack.c.b16 %v2926, %v2919
    %v3193 = vpack.c.b16 %v2927, %v2920
    %v3194 = vpack.c.b16 %v2935, %v2928
    %v3195 = vpack.c.b16 %v2936, %v2929
    %v3196 = vpack.c.b16 %v2937, %v2930
    %v3197 = vpack.c.b16 %v2938, %v2931
    %v3198 = vpack.c.b16 %v2939, %v2932
    %v3199 = vpack.c.b16 %v2940, %v2933
    %v3200 = vpack.c.b16 %v2941, %v2934
    %v3201 = vpack.c.b16 %v2949, %v2942
    %v3202 = vpack.c.b16 %v2950, %v2943
    %v3203 = vpack.c.b16 %v2951, %v2944
    %v3204 = vpack.c.b16 %v2952, %v2945
    %v3205 = vpack.c.b16 %v2953, %v2946
    %v3206 = vpack.c.b16 %v2954, %v2947
    %v3207 = vpack.c.b16 %v2955, %v2948
    %v3208 = vpack.c.b16 %v2963, %v2956
    %v3209 = vpack.c.b16 %v2964, %v2957
    %v3210 = vpack.c.b16 %v2965, %v2958
    %v3211 = vpack.c.b16 %v2966, %v2959
    %v3212 = vpack.c.b16 %v2967, %v2960
    %v3213 = vpack.c.b16 %v2968, %v2961
    %v3214 = vpack.c.b16 %v2969, %v2962
    %v3215 = vpack.c.b16 %v2977, %v2970
    %v3216 = vpack.c.b16 %v2978, %v2971
    %v3217 = vpack.c.b16 %v2979, %v2972
    %v3218 = vpack.c.b16 %v2980, %v2973
    %v3219 = vpack.c.b16 %v2981, %v2974
    %v3220 = vpack.c.b16 %v2982, %v2975
    %v3221 = vpack.c.b16 %v2983, %v2976
    %v3222 = vpack.c.b16 %v2991, %v2984
    %v3223 = vpack.c.b16 %v2992, %v2985
    %v3224 = vpack.c.b16 %v2993, %v2986
    %v3225 = vpack.c.b16 %v2994, %v2987
    %v3226 = vpack.c.b16 %v2995, %v2988
    %v3227 = vpack.c.b16 %v2996, %v2989
    %v3228 = vpack.c.b16 %v2997, %v2990
    %v3229 = vpack.c.b16 %v3005, %v2998
    %v3230 = vpack.c.b16 %v3006, %v2999
    %v3231 = vpack.c.b16 %v3007, %v3000
    %v3232 = vpack.c.b16 %v3008, %v3001
    %v3233 = vpack.c.b16 %v3009, %v3002
    %v3234 = vpack.c.b16 %v3010, %v3003
    %v3235 = vpack.c.b16 %v3011, %v3004
    %3460 = vmatpush.bf16.msra.mxu0 %v3061
    %3461 = vmatpush.bf16.msra.mxu0 %v3054
    %3462 = vmatpush.bf16.msra.mxu0 %v3047
    %3463 = vmatpush.bf16.msra.mxu0 %v3040
    %3464 = vmatpush.bf16.msra.mxu0 %v3033
    %3465 = vmatpush.bf16.msra.mxu0 %v3026
    %3466 = vmatpush.bf16.msra.mxu0 %v3019
    %3467 = vmatpush.bf16.msra.mxu0 %v3012
    %3468 = vmatmul.bf16.gmra.mxu0 %v2032
    %v3469 = vpop.f32.mrf.mxu0
    %v3470 = vadd.f32 %v2294, %v3469
    %v3471 = vpop.f32.mrf.mxu0
    %3472 = vdwg.mxu0
    %3473 = vmatpush.bf16.msra.mxu0 %v3117
    %3474 = vmatpush.bf16.msra.mxu0 %v3110
    %3475 = vmatpush.bf16.msra.mxu0 %v3103
    %3476 = vmatpush.bf16.msra.mxu0 %v3096
    %3477 = vmatpush.bf16.msra.mxu0 %v3089
    %3478 = vmatpush.bf16.msra.mxu0 %v3082
    %3479 = vmatpush.bf16.msra.mxu0 %v3075
    %3480 = vmatpush.bf16.msra.mxu0 %v3068
    %3481 = vmatmul.bf16.gmra.mxu0 %v2033
    %v3482 = vpop.f32.mrf.mxu0
    %v3483 = vadd.f32 %v3470, %v3482
    %v3484 = vpop.f32.mrf.mxu0
    %3485 = vdwg.mxu0
    %3486 = vmatpush.bf16.msra.mxu0 %v3173
    %3487 = vmatpush.bf16.msra.mxu0 %v3166
    %3488 = vmatpush.bf16.msra.mxu0 %v3159
    %3489 = vmatpush.bf16.msra.mxu0 %v3152
    %3490 = vmatpush.bf16.msra.mxu0 %v3145
    %3491 = vmatpush.bf16.msra.mxu0 %v3138
    %3492 = vmatpush.bf16.msra.mxu0 %v3131
    %3493 = vmatpush.bf16.msra.mxu0 %v3124
    %3494 = vmatmul.bf16.gmra.mxu0 %v2034
    %v3495 = vpop.f32.mrf.mxu0
    %v3496 = vadd.f32 %v3483, %v3495
    %v3497 = vpop.f32.mrf.mxu0
    %3498 = vdwg.mxu0
    %3499 = vmatpush.bf16.msra.mxu0 %v3229
    %3500 = vmatpush.bf16.msra.mxu0 %v3222
    %3501 = vmatpush.bf16.msra.mxu0 %v3215
    %3502 = vmatpush.bf16.msra.mxu0 %v3208
    %3503 = vmatpush.bf16.msra.mxu0 %v3201
    %3504 = vmatpush.bf16.msra.mxu0 %v3194
    %3505 = vmatpush.bf16.msra.mxu0 %v3187
    %3506 = vmatpush.bf16.msra.mxu0 %v3180
    %3507 = vmatmul.bf16.gmra.mxu0 %v2035
    %v3508 = vpop.f32.mrf.mxu0
    %v3509 = vadd.f32 %v3496, %v3508
    %v3510 = vpop.f32.mrf.mxu0
    %3511 = vdwg.mxu0
    %3512 = vmatpush.bf16.msra.mxu0 %v3062
    %3513 = vmatpush.bf16.msra.mxu0 %v3055
    %3514 = vmatpush.bf16.msra.mxu0 %v3048
    %3515 = vmatpush.bf16.msra.mxu0 %v3041
    %3516 = vmatpush.bf16.msra.mxu0 %v3034
    %3517 = vmatpush.bf16.msra.mxu0 %v3027
    %3518 = vmatpush.bf16.msra.mxu0 %v3020
    %3519 = vmatpush.bf16.msra.mxu0 %v3013
    %3520 = vmatmul.bf16.gmra.mxu0 %v2032
    %v3521 = vpop.f32.mrf.mxu0
    %v3522 = vadd.f32 %v2295, %v3521
    %v3523 = vpop.f32.mrf.mxu0
    %3524 = vdwg.mxu0
    %3525 = vmatpush.bf16.msra.mxu0 %v3118
    %3526 = vmatpush.bf16.msra.mxu0 %v3111
    %3527 = vmatpush.bf16.msra.mxu0 %v3104
    %3528 = vmatpush.bf16.msra.mxu0 %v3097
    %3529 = vmatpush.bf16.msra.mxu0 %v3090
    %3530 = vmatpush.bf16.msra.mxu0 %v3083
    %3531 = vmatpush.bf16.msra.mxu0 %v3076
    %3532 = vmatpush.bf16.msra.mxu0 %v3069
    %3533 = vmatmul.bf16.gmra.mxu0 %v2033
    %v3534 = vpop.f32.mrf.mxu0
    %v3535 = vadd.f32 %v3522, %v3534
    %v3536 = vpop.f32.mrf.mxu0
    %3537 = vdwg.mxu0
    %3538 = vmatpush.bf16.msra.mxu0 %v3174
    %3539 = vmatpush.bf16.msra.mxu0 %v3167
    %3540 = vmatpush.bf16.msra.mxu0 %v3160
    %3541 = vmatpush.bf16.msra.mxu0 %v3153
    %3542 = vmatpush.bf16.msra.mxu0 %v3146
    %3543 = vmatpush.bf16.msra.mxu0 %v3139
    %3544 = vmatpush.bf16.msra.mxu0 %v3132
    %3545 = vmatpush.bf16.msra.mxu0 %v3125
    %3546 = vmatmul.bf16.gmra.mxu0 %v2034
    %v3547 = vpop.f32.mrf.mxu0
    %v3548 = vadd.f32 %v3535, %v3547
    %v3549 = vpop.f32.mrf.mxu0
    %3550 = vdwg.mxu0
    %3551 = vmatpush.bf16.msra.mxu0 %v3230
    %3552 = vmatpush.bf16.msra.mxu0 %v3223
    %3553 = vmatpush.bf16.msra.mxu0 %v3216
    %3554 = vmatpush.bf16.msra.mxu0 %v3209
    %3555 = vmatpush.bf16.msra.mxu0 %v3202
    %3556 = vmatpush.bf16.msra.mxu0 %v3195
    %3557 = vmatpush.bf16.msra.mxu0 %v3188
    %3558 = vmatpush.bf16.msra.mxu0 %v3181
    %3559 = vmatmul.bf16.gmra.mxu0 %v2035
    %v3560 = vpop.f32.mrf.mxu0
    %v3561 = vadd.f32 %v3548, %v3560
    %v3562 = vpop.f32.mrf.mxu0
    %3563 = vdwg.mxu0
    %3564 = vmatpush.bf16.msra.mxu0 %v3063
    %3565 = vmatpush.bf16.msra.mxu0 %v3056
    %3566 = vmatpush.bf16.msra.mxu0 %v3049
    %3567 = vmatpush.bf16.msra.mxu0 %v3042
    %3568 = vmatpush.bf16.msra.mxu0 %v3035
    %3569 = vmatpush.bf16.msra.mxu0 %v3028
    %3570 = vmatpush.bf16.msra.mxu0 %v3021
    %3571 = vmatpush.bf16.msra.mxu0 %v3014
    %3572 = vmatmul.bf16.gmra.mxu0 %v2032
    %v3573 = vpop.f32.mrf.mxu0
    %v3574 = vadd.f32 %v2296, %v3573
    %v3575 = vpop.f32.mrf.mxu0
    %3576 = vdwg.mxu0
    %3577 = vmatpush.bf16.msra.mxu0 %v3119
    %3578 = vmatpush.bf16.msra.mxu0 %v3112
    %3579 = vmatpush.bf16.msra.mxu0 %v3105
    %3580 = vmatpush.bf16.msra.mxu0 %v3098
    %3581 = vmatpush.bf16.msra.mxu0 %v3091
    %3582 = vmatpush.bf16.msra.mxu0 %v3084
    %3583 = vmatpush.bf16.msra.mxu0 %v3077
    %3584 = vmatpush.bf16.msra.mxu0 %v3070
    %3585 = vmatmul.bf16.gmra.mxu0 %v2033
    %v3586 = vpop.f32.mrf.mxu0
    %v3587 = vadd.f32 %v3574, %v3586
    %v3588 = vpop.f32.mrf.mxu0
    %3589 = vdwg.mxu0
    %3590 = vmatpush.bf16.msra.mxu0 %v3175
    %3591 = vmatpush.bf16.msra.mxu0 %v3168
    %3592 = vmatpush.bf16.msra.mxu0 %v3161
    %3593 = vmatpush.bf16.msra.mxu0 %v3154
    %3594 = vmatpush.bf16.msra.mxu0 %v3147
    %3595 = vmatpush.bf16.msra.mxu0 %v3140
    %3596 = vmatpush.bf16.msra.mxu0 %v3133
    %3597 = vmatpush.bf16.msra.mxu0 %v3126
    %3598 = vmatmul.bf16.gmra.mxu0 %v2034
    %v3599 = vpop.f32.mrf.mxu0
    %v3600 = vadd.f32 %v3587, %v3599
    %v3601 = vpop.f32.mrf.mxu0
    %3602 = vdwg.mxu0
    %3603 = vmatpush.bf16.msra.mxu0 %v3231
    %3604 = vmatpush.bf16.msra.mxu0 %v3224
    %3605 = vmatpush.bf16.msra.mxu0 %v3217
    %3606 = vmatpush.bf16.msra.mxu0 %v3210
    %3607 = vmatpush.bf16.msra.mxu0 %v3203
    %3608 = vmatpush.bf16.msra.mxu0 %v3196
    %3609 = vmatpush.bf16.msra.mxu0 %v3189
    %3610 = vmatpush.bf16.msra.mxu0 %v3182
    %3611 = vmatmul.bf16.gmra.mxu0 %v2035
    %v3612 = vpop.f32.mrf.mxu0
    %v3613 = vadd.f32 %v3600, %v3612
    %v3614 = vpop.f32.mrf.mxu0
    %3615 = vdwg.mxu0
    %3616 = vmatpush.bf16.msra.mxu0 %v3064
    %3617 = vmatpush.bf16.msra.mxu0 %v3057
    %3618 = vmatpush.bf16.msra.mxu0 %v3050
    %3619 = vmatpush.bf16.msra.mxu0 %v3043
    %3620 = vmatpush.bf16.msra.mxu0 %v3036
    %3621 = vmatpush.bf16.msra.mxu0 %v3029
    %3622 = vmatpush.bf16.msra.mxu0 %v3022
    %3623 = vmatpush.bf16.msra.mxu0 %v3015
    %3624 = vmatmul.bf16.gmra.mxu0 %v2032
    %v3625 = vpop.f32.mrf.mxu0
    %v3626 = vadd.f32 %v2297, %v3625
    %v3627 = vpop.f32.mrf.mxu0
    %3628 = vdwg.mxu0
    %3629 = vmatpush.bf16.msra.mxu0 %v3120
    %3630 = vmatpush.bf16.msra.mxu0 %v3113
    %3631 = vmatpush.bf16.msra.mxu0 %v3106
    %3632 = vmatpush.bf16.msra.mxu0 %v3099
    %3633 = vmatpush.bf16.msra.mxu0 %v3092
    %3634 = vmatpush.bf16.msra.mxu0 %v3085
    %3635 = vmatpush.bf16.msra.mxu0 %v3078
    %3636 = vmatpush.bf16.msra.mxu0 %v3071
    %3637 = vmatmul.bf16.gmra.mxu0 %v2033
    %v3638 = vpop.f32.mrf.mxu0
    %v3639 = vadd.f32 %v3626, %v3638
    %v3640 = vpop.f32.mrf.mxu0
    %3641 = vdwg.mxu0
    %3642 = vmatpush.bf16.msra.mxu0 %v3176
    %3643 = vmatpush.bf16.msra.mxu0 %v3169
    %3644 = vmatpush.bf16.msra.mxu0 %v3162
    %3645 = vmatpush.bf16.msra.mxu0 %v3155
    %3646 = vmatpush.bf16.msra.mxu0 %v3148
    %3647 = vmatpush.bf16.msra.mxu0 %v3141
    %3648 = vmatpush.bf16.msra.mxu0 %v3134
    %3649 = vmatpush.bf16.msra.mxu0 %v3127
    %3650 = vmatmul.bf16.gmra.mxu0 %v2034
    %v3651 = vpop.f32.mrf.mxu0
    %v3652 = vadd.f32 %v3639, %v3651
    %v3653 = vpop.f32.mrf.mxu0
    %3654 = vdwg.mxu0
    %3655 = vmatpush.bf16.msra.mxu0 %v3232
    %3656 = vmatpush.bf16.msra.mxu0 %v3225
    %3657 = vmatpush.bf16.msra.mxu0 %v3218
    %3658 = vmatpush.bf16.msra.mxu0 %v3211
    %3659 = vmatpush.bf16.msra.mxu0 %v3204
    %3660 = vmatpush.bf16.msra.mxu0 %v3197
    %3661 = vmatpush.bf16.msra.mxu0 %v3190
    %3662 = vmatpush.bf16.msra.mxu0 %v3183
    %3663 = vmatmul.bf16.gmra.mxu0 %v2035
    %v3664 = vpop.f32.mrf.mxu0
    %v3665 = vadd.f32 %v3652, %v3664
    %v3666 = vpop.f32.mrf.mxu0
    %3667 = vdwg.mxu0
    %3668 = vmatpush.bf16.msra.mxu0 %v3065
    %3669 = vmatpush.bf16.msra.mxu0 %v3058
    %3670 = vmatpush.bf16.msra.mxu0 %v3051
    %3671 = vmatpush.bf16.msra.mxu0 %v3044
    %3672 = vmatpush.bf16.msra.mxu0 %v3037
    %3673 = vmatpush.bf16.msra.mxu0 %v3030
    %3674 = vmatpush.bf16.msra.mxu0 %v3023
    %3675 = vmatpush.bf16.msra.mxu0 %v3016
    %3676 = vmatmul.bf16.gmra.mxu0 %v2032
    %v3677 = vpop.f32.mrf.mxu0
    %v3678 = vadd.f32 %v2298, %v3677
    %v3679 = vpop.f32.mrf.mxu0
    %3680 = vdwg.mxu0
    %3681 = vmatpush.bf16.msra.mxu0 %v3121
    %3682 = vmatpush.bf16.msra.mxu0 %v3114
    %3683 = vmatpush.bf16.msra.mxu0 %v3107
    %3684 = vmatpush.bf16.msra.mxu0 %v3100
    %3685 = vmatpush.bf16.msra.mxu0 %v3093
    %3686 = vmatpush.bf16.msra.mxu0 %v3086
    %3687 = vmatpush.bf16.msra.mxu0 %v3079
    %3688 = vmatpush.bf16.msra.mxu0 %v3072
    %3689 = vmatmul.bf16.gmra.mxu0 %v2033
    %v3690 = vpop.f32.mrf.mxu0
    %v3691 = vadd.f32 %v3678, %v3690
    %v3692 = vpop.f32.mrf.mxu0
    %3693 = vdwg.mxu0
    %3694 = vmatpush.bf16.msra.mxu0 %v3177
    %3695 = vmatpush.bf16.msra.mxu0 %v3170
    %3696 = vmatpush.bf16.msra.mxu0 %v3163
    %3697 = vmatpush.bf16.msra.mxu0 %v3156
    %3698 = vmatpush.bf16.msra.mxu0 %v3149
    %3699 = vmatpush.bf16.msra.mxu0 %v3142
    %3700 = vmatpush.bf16.msra.mxu0 %v3135
    %3701 = vmatpush.bf16.msra.mxu0 %v3128
    %3702 = vmatmul.bf16.gmra.mxu0 %v2034
    %v3703 = vpop.f32.mrf.mxu0
    %v3704 = vadd.f32 %v3691, %v3703
    %v3705 = vpop.f32.mrf.mxu0
    %3706 = vdwg.mxu0
    %3707 = vmatpush.bf16.msra.mxu0 %v3233
    %3708 = vmatpush.bf16.msra.mxu0 %v3226
    %3709 = vmatpush.bf16.msra.mxu0 %v3219
    %3710 = vmatpush.bf16.msra.mxu0 %v3212
    %3711 = vmatpush.bf16.msra.mxu0 %v3205
    %3712 = vmatpush.bf16.msra.mxu0 %v3198
    %3713 = vmatpush.bf16.msra.mxu0 %v3191
    %3714 = vmatpush.bf16.msra.mxu0 %v3184
    %3715 = vmatmul.bf16.gmra.mxu0 %v2035
    %v3716 = vpop.f32.mrf.mxu0
    %v3717 = vadd.f32 %v3704, %v3716
    %v3718 = vpop.f32.mrf.mxu0
    %3719 = vdwg.mxu0
    %3720 = vmatpush.bf16.msra.mxu0 %v3066
    %3721 = vmatpush.bf16.msra.mxu0 %v3059
    %3722 = vmatpush.bf16.msra.mxu0 %v3052
    %3723 = vmatpush.bf16.msra.mxu0 %v3045
    %3724 = vmatpush.bf16.msra.mxu0 %v3038
    %3725 = vmatpush.bf16.msra.mxu0 %v3031
    %3726 = vmatpush.bf16.msra.mxu0 %v3024
    %3727 = vmatpush.bf16.msra.mxu0 %v3017
    %3728 = vmatmul.bf16.gmra.mxu0 %v2032
    %v3729 = vpop.f32.mrf.mxu0
    %v3730 = vadd.f32 %v2299, %v3729
    %v3731 = vpop.f32.mrf.mxu0
    %3732 = vdwg.mxu0
    %3733 = vmatpush.bf16.msra.mxu0 %v3122
    %3734 = vmatpush.bf16.msra.mxu0 %v3115
    %3735 = vmatpush.bf16.msra.mxu0 %v3108
    %3736 = vmatpush.bf16.msra.mxu0 %v3101
    %3737 = vmatpush.bf16.msra.mxu0 %v3094
    %3738 = vmatpush.bf16.msra.mxu0 %v3087
    %3739 = vmatpush.bf16.msra.mxu0 %v3080
    %3740 = vmatpush.bf16.msra.mxu0 %v3073
    %3741 = vmatmul.bf16.gmra.mxu0 %v2033
    %v3742 = vpop.f32.mrf.mxu0
    %v3743 = vadd.f32 %v3730, %v3742
    %v3744 = vpop.f32.mrf.mxu0
    %3745 = vdwg.mxu0
    %3746 = vmatpush.bf16.msra.mxu0 %v3178
    %3747 = vmatpush.bf16.msra.mxu0 %v3171
    %3748 = vmatpush.bf16.msra.mxu0 %v3164
    %3749 = vmatpush.bf16.msra.mxu0 %v3157
    %3750 = vmatpush.bf16.msra.mxu0 %v3150
    %3751 = vmatpush.bf16.msra.mxu0 %v3143
    %3752 = vmatpush.bf16.msra.mxu0 %v3136
    %3753 = vmatpush.bf16.msra.mxu0 %v3129
    %3754 = vmatmul.bf16.gmra.mxu0 %v2034
    %v3755 = vpop.f32.mrf.mxu0
    %v3756 = vadd.f32 %v3743, %v3755
    %v3757 = vpop.f32.mrf.mxu0
    %3758 = vdwg.mxu0
    %3759 = vmatpush.bf16.msra.mxu0 %v3234
    %3760 = vmatpush.bf16.msra.mxu0 %v3227
    %3761 = vmatpush.bf16.msra.mxu0 %v3220
    %3762 = vmatpush.bf16.msra.mxu0 %v3213
    %3763 = vmatpush.bf16.msra.mxu0 %v3206
    %3764 = vmatpush.bf16.msra.mxu0 %v3199
    %3765 = vmatpush.bf16.msra.mxu0 %v3192
    %3766 = vmatpush.bf16.msra.mxu0 %v3185
    %3767 = vmatmul.bf16.gmra.mxu0 %v2035
    %v3768 = vpop.f32.mrf.mxu0
    %v3769 = vadd.f32 %v3756, %v3768
    %v3770 = vpop.f32.mrf.mxu0
    %3771 = vdwg.mxu0
    %3772 = vmatpush.bf16.msra.mxu0 %v3067
    %3773 = vmatpush.bf16.msra.mxu0 %v3060
    %3774 = vmatpush.bf16.msra.mxu0 %v3053
    %3775 = vmatpush.bf16.msra.mxu0 %v3046
    %3776 = vmatpush.bf16.msra.mxu0 %v3039
    %3777 = vmatpush.bf16.msra.mxu0 %v3032
    %3778 = vmatpush.bf16.msra.mxu0 %v3025
    %3779 = vmatpush.bf16.msra.mxu0 %v3018
    %3780 = vmatmul.bf16.gmra.mxu0 %v2032
    %v3781 = vpop.f32.mrf.mxu0
    %v3782 = vadd.f32 %v2300, %v3781
    %v3783 = vpop.f32.mrf.mxu0
    %3784 = vdwg.mxu0
    %3785 = vmatpush.bf16.msra.mxu0 %v3123
    %3786 = vmatpush.bf16.msra.mxu0 %v3116
    %3787 = vmatpush.bf16.msra.mxu0 %v3109
    %3788 = vmatpush.bf16.msra.mxu0 %v3102
    %3789 = vmatpush.bf16.msra.mxu0 %v3095
    %3790 = vmatpush.bf16.msra.mxu0 %v3088
    %3791 = vmatpush.bf16.msra.mxu0 %v3081
    %3792 = vmatpush.bf16.msra.mxu0 %v3074
    %3793 = vmatmul.bf16.gmra.mxu0 %v2033
    %v3794 = vpop.f32.mrf.mxu0
    %v3795 = vadd.f32 %v3782, %v3794
    %v3796 = vpop.f32.mrf.mxu0
    %3797 = vdwg.mxu0
    %3798 = vmatpush.bf16.msra.mxu0 %v3179
    %3799 = vmatpush.bf16.msra.mxu0 %v3172
    %3800 = vmatpush.bf16.msra.mxu0 %v3165
    %3801 = vmatpush.bf16.msra.mxu0 %v3158
    %3802 = vmatpush.bf16.msra.mxu0 %v3151
    %3803 = vmatpush.bf16.msra.mxu0 %v3144
    %3804 = vmatpush.bf16.msra.mxu0 %v3137
    %3805 = vmatpush.bf16.msra.mxu0 %v3130
    %3806 = vmatmul.bf16.gmra.mxu0 %v2034
    %v3807 = vpop.f32.mrf.mxu0
    %v3808 = vadd.f32 %v3795, %v3807
    %v3809 = vpop.f32.mrf.mxu0
    %3810 = vdwg.mxu0
    %3811 = vmatpush.bf16.msra.mxu0 %v3235
    %3812 = vmatpush.bf16.msra.mxu0 %v3228
    %3813 = vmatpush.bf16.msra.mxu0 %v3221
    %3814 = vmatpush.bf16.msra.mxu0 %v3214
    %3815 = vmatpush.bf16.msra.mxu0 %v3207
    %3816 = vmatpush.bf16.msra.mxu0 %v3200
    %3817 = vmatpush.bf16.msra.mxu0 %v3193
    %3818 = vmatpush.bf16.msra.mxu0 %v3186
    %3819 = vmatmul.bf16.gmra.mxu0 %v2035
    %v3820 = vpop.f32.mrf.mxu0
    %v3821 = vadd.f32 %v3808, %v3820
    %v3822 = vpop.f32.mrf.mxu0
    %3823 = vdwg.mxu0
    %v3824 = vxor.u32 %v3509, 2147483648
    %v3825 = vxor.u32 %v3561, 2147483648
    %v3826 = vxor.u32 %v3613, 2147483648
    %v3827 = vxor.u32 %v3665, 2147483648
    %v3828 = vxor.u32 %v3717, 2147483648
    %v3829 = vxor.u32 %v3769, 2147483648
    %v3830 = vxor.u32 %v3821, 2147483648
    %v3831 = vmul.f32 %v3824, 1.442695
    %v3832 = vpow.pop %v3831
    %v3833 = vmul.f32 %v3825, 1.442695
    %v3834 = vpow.pop %v3833
    %v3835 = vmul.f32 %v3826, 1.442695
    %v3836 = vpow.pop %v3835
    %v3837 = vmul.f32 %v3827, 1.442695
    %v3838 = vpow.pop %v3837
    %v3839 = vmul.f32 %v3828, 1.442695
    %v3840 = vpow.pop %v3839
    %v3841 = vmul.f32 %v3829, 1.442695
    %v3842 = vpow.pop %v3841
    %v3843 = vmul.f32 %v3830, 1.442695
    %v3844 = vpow.pop %v3843
    %v3845 = vadd.f32 %v3832, 1.0
    %v3846 = vadd.f32 %v3834, 1.0
    %v3847 = vadd.f32 %v3836, 1.0
    %v3848 = vadd.f32 %v3838, 1.0
    %v3849 = vadd.f32 %v3840, 1.0
    %v3850 = vadd.f32 %v3842, 1.0
    %v3851 = vadd.f32 %v3844, 1.0
    %v3852 = vrcp.pop %v3845
    %v3853 = vmul.f32 %v3845, %v3852
    %v3854 = vsub.f32 1.0, %v3853
    %v3855 = vmul.f32 %v3852, %v3854
    %v3856 = vadd.f32 %v3852, %v3855
    %vm3857 = vweird.f32 %v3845
    %vm3858 = vweird.f32 %v3852
    %vm3859 = vmor %vm3857, %vm3858
    %v3860 = vsel %vm3859, %v3852, %v3856
    %v3861 = vand.u32 2147483647, %v3845
    %vm3862 = vcmp.eq.f32.partialorder %v3861, 8.507059e+37
    %v3863 = vand.u32 %v3845, 2147483648
    %v3864 = vor.u32 1.1754944e-38, %v3863
    %v3865 = vsel %vm3862, %v3864, %v3860
    %v3866 = vmul.f32 1.0, %v3865
    %v3867 = vrcp.pop %v3846
    %v3868 = vmul.f32 %v3846, %v3867
    %v3869 = vsub.f32 1.0, %v3868
    %v3870 = vmul.f32 %v3867, %v3869
    %v3871 = vadd.f32 %v3867, %v3870
    %vm3872 = vweird.f32 %v3846
    %vm3873 = vweird.f32 %v3867
    %vm3874 = vmor %vm3872, %vm3873
    %v3875 = vsel %vm3874, %v3867, %v3871
    %v3876 = vand.u32 2147483647, %v3846
    %vm3877 = vcmp.eq.f32.partialorder %v3876, 8.507059e+37
    %v3878 = vand.u32 %v3846, 2147483648
    %v3879 = vor.u32 1.1754944e-38, %v3878
    %v3880 = vsel %vm3877, %v3879, %v3875
    %v3881 = vmul.f32 1.0, %v3880
    %v3882 = vrcp.pop %v3847
    %v3883 = vmul.f32 %v3847, %v3882
    %v3884 = vsub.f32 1.0, %v3883
    %v3885 = vmul.f32 %v3882, %v3884
    %v3886 = vadd.f32 %v3882, %v3885
    %vm3887 = vweird.f32 %v3847
    %vm3888 = vweird.f32 %v3882
    %vm3889 = vmor %vm3887, %vm3888
    %v3890 = vsel %vm3889, %v3882, %v3886
    %v3891 = vand.u32 2147483647, %v3847
    %vm3892 = vcmp.eq.f32.partialorder %v3891, 8.507059e+37
    %v3893 = vand.u32 %v3847, 2147483648
    %v3894 = vor.u32 1.1754944e-38, %v3893
    %v3895 = vsel %vm3892, %v3894, %v3890
    %v3896 = vmul.f32 1.0, %v3895
    %v3897 = vrcp.pop %v3848
    %v3898 = vmul.f32 %v3848, %v3897
    %v3899 = vsub.f32 1.0, %v3898
    %v3900 = vmul.f32 %v3897, %v3899
    %v3901 = vadd.f32 %v3897, %v3900
    %vm3902 = vweird.f32 %v3848
    %vm3903 = vweird.f32 %v3897
    %vm3904 = vmor %vm3902, %vm3903
    %v3905 = vsel %vm3904, %v3897, %v3901
    %v3906 = vand.u32 2147483647, %v3848
    %vm3907 = vcmp.eq.f32.partialorder %v3906, 8.507059e+37
    %v3908 = vand.u32 %v3848, 2147483648
    %v3909 = vor.u32 1.1754944e-38, %v3908
    %v3910 = vsel %vm3907, %v3909, %v3905
    %v3911 = vmul.f32 1.0, %v3910
    %v3912 = vrcp.pop %v3849
    %v3913 = vmul.f32 %v3849, %v3912
    %v3914 = vsub.f32 1.0, %v3913
    %v3915 = vmul.f32 %v3912, %v3914
    %v3916 = vadd.f32 %v3912, %v3915
    %vm3917 = vweird.f32 %v3849
    %vm3918 = vweird.f32 %v3912
    %vm3919 = vmor %vm3917, %vm3918
    %v3920 = vsel %vm3919, %v3912, %v3916
    %v3921 = vand.u32 2147483647, %v3849
    %vm3922 = vcmp.eq.f32.partialorder %v3921, 8.507059e+37
    %v3923 = vand.u32 %v3849, 2147483648
    %v3924 = vor.u32 1.1754944e-38, %v3923
    %v3925 = vsel %vm3922, %v3924, %v3920
    %v3926 = vmul.f32 1.0, %v3925
    %v3927 = vrcp.pop %v3850
    %v3928 = vmul.f32 %v3850, %v3927
    %v3929 = vsub.f32 1.0, %v3928
    %v3930 = vmul.f32 %v3927, %v3929
    %v3931 = vadd.f32 %v3927, %v3930
    %vm3932 = vweird.f32 %v3850
    %vm3933 = vweird.f32 %v3927
    %vm3934 = vmor %vm3932, %vm3933
    %v3935 = vsel %vm3934, %v3927, %v3931
    %v3936 = vand.u32 2147483647, %v3850
    %vm3937 = vcmp.eq.f32.partialorder %v3936, 8.507059e+37
    %v3938 = vand.u32 %v3850, 2147483648
    %v3939 = vor.u32 1.1754944e-38, %v3938
    %v3940 = vsel %vm3937, %v3939, %v3935
    %v3941 = vmul.f32 1.0, %v3940
    %v3942 = vrcp.pop %v3851
    %v3943 = vmul.f32 %v3851, %v3942
    %v3944 = vsub.f32 1.0, %v3943
    %v3945 = vmul.f32 %v3942, %v3944
    %v3946 = vadd.f32 %v3942, %v3945
    %vm3947 = vweird.f32 %v3851
    %vm3948 = vweird.f32 %v3942
    %vm3949 = vmor %vm3947, %vm3948
    %v3950 = vsel %vm3949, %v3942, %v3946
    %v3951 = vand.u32 2147483647, %v3851
    %vm3952 = vcmp.eq.f32.partialorder %v3951, 8.507059e+37
    %v3953 = vand.u32 %v3851, 2147483648
    %v3954 = vor.u32 1.1754944e-38, %v3953
    %v3955 = vsel %vm3952, %v3954, %v3950
    %v3956 = vmul.f32 1.0, %v3955
    %3957 = vst [vmem:[#allocation2] sm:$0xff] %v3866
    %3958 = vst [vmem:[#allocation2 + $0x8] sm:$0xff] %v3881
    %3959 = vst [vmem:[#allocation2 + $0x10] sm:$0xff] %v3896
    %3960 = vst [vmem:[#allocation2 + $0x18] sm:$0xff] %v3911
    %3961 = vst [vmem:[#allocation2 + $0x20] sm:$0xff] %v3926
    %3962 = vst [vmem:[#allocation2 + $0x28] sm:$0xff] %v3941
    %3963 = vst.msk [vmem:[#allocation2 + $0x30] sm:$0xff] %vm1239, %v3956
    // Predicated region
    $region42: #{linear_vae_forward.1} parent=1 // pred_check
      _
    $region43: #{linear_vae_forward.1} parent=1 // pred_check_branch
      %3965 = sbr.rel (0) target = $region45
    $region44: #{linear_vae_forward.1} parent=1 // pred_region
      %3967 = vsyncadd [#allocation3], 0
      %s3969 = sshll.u32 [#allocation2], 4
      %s3970 = int_to_ptr.vmem [resolvable:$true] %s3969
      %s3971 = sshll.u32 %s10, 4
      %s3972 = int_to_ptr.hbm [resolvable:$true] %s3971
      %3974 = dma.vmem_to_hbm [thread:$0]  %s3970, 896, %s3972, [#allocation3]
    $region45: #{linear_vae_forward.1} parent=1 // pred_fallthru
      _
    // Predicated region
    $region46: #{linear_vae_forward.1} parent=1 // pred_check
      _
    $region47: #{linear_vae_forward.1} parent=1 // pred_check_branch
      %3976 = sbr.rel (0) target = $region49
    $region48: #{linear_vae_forward.1} parent=1 // pred_region
      _
    $region49: #{linear_vae_forward.1} parent=1 // pred_fallthru
      _
    // Predicated region
    $region50: #{linear_vae_forward.1} parent=1 // pred_check
      _
    $region51: #{linear_vae_forward.1} parent=1 // pred_check_branch
      %3978 = sbr.rel (0) target = $region53
    $region52: #{linear_vae_forward.1} parent=1 // pred_region
      %3980 = dma.done [#allocation3], 896
    $region53: #{linear_vae_forward.1} parent=1 // pred_fallthru
      _
    // Predicated region
    $region54: #{linear_vae_forward.1} parent=1 // pred_check
      _
    $region55: #{linear_vae_forward.1} parent=1 // pred_check_branch
      %3982 = sbr.rel (0) target = $region57
    $region56: #{linear_vae_forward.1} parent=1 // pred_region
      _
    $region57: #{linear_vae_forward.1} parent=1 // pred_fallthru
      _
    %3983 = vsyncpa [#allocation3], 1

</llo_original>
